<compile_context>
chip_gen: v5e
topology: v5e:2x2
jax: 0.10.0
libtpu: 0.0.40
codegen_flags: <defaults>
</compile_context>

<pallas_src>
import functools
import math

import jax
import jax.numpy as jnp
import numpy as np
from jax.experimental import pallas as pl
from jax.experimental.pallas import tpu as pltpu

LN_EPS = 1e-12  # ConvBertConfig.layer_norm_eps default

# "torch-layout" parameter names (used by init + the pure-JAX reference)
PARAM_NAMES = [
    "wq", "bq", "wk", "bk", "wv", "bv",        # query / key / value projections
    "w_dw", "w_pw", "b_sep",                   # SeparableConv1D (depthwise + pointwise + bias)
    "w_ck", "b_ck",                            # conv_kernel_layer
    "w_co", "b_co",                            # conv_out_layer
    "w_so", "b_so", "ln1_g", "ln1_b",          # ConvBertSelfOutput (dense + LayerNorm)
    "w_int", "b_int",                          # ConvBertIntermediate
    "w_out", "b_out", "ln2_g", "ln2_b",        # ConvBertOutput (dense + LayerNorm)
]

# order in which the (pre-arranged) weights are handed to the kernel
KERNEL_PARAM_ORDER = [
    "w_qkvco", "b_qkvco",                      # fused Q|K|V|conv_out projection (D, 4A)
    "w_dw", "w_pw", "b_sep",
    "w_ck", "b_ck",
    "w_so", "b_so", "ln1_g", "ln1_b",
    "w_int", "b_int", "w_out", "b_out", "ln2_g", "ln2_b",
]


# ----------------------------------------------------------------------------------------
# Pallas kernel: one ConvBertLayer, one batch element per grid step
# ----------------------------------------------------------------------------------------
def _convbert_layer_kernel(x_ref, mask_ref, *refs, H, HS, K, eps):
    n = len(KERNEL_PARAM_ORDER)
    p = {name: r[...] for name, r in zip(KERNEL_PARAM_ORDER, refs[:n])}
    o_ref = refs[n]
    xp_ref = refs[n + 1]     # (S+K-1, D)  zero-padded x        (depthwise-conv taps)
    cop_ref = refs[n + 2]    # (S+K-1, A)  zero-padded conv_out (unfold taps)

    x = x_ref[0]             # (S, D) f32
    mask = mask_ref[0]       # (1, S) additive attention bias
    S, D = x.shape
    A = H * HS
    pad = (K - 1) // 2       # == K // 2 for odd K (HF paddings only line up for odd K)
    bf16, f32 = jnp.bfloat16, jnp.float32

    def mm(a, b):            # 2-D matmul on the MXU, bf16 in / f32 accumulate
        return jnp.dot(a.astype(bf16), b.astype(bf16), preferred_element_type=f32)

    def softmax(z):          # approx reciprocal -> EUP slot (~1e-3 rel, under test tol)
        z = z - jnp.max(z, axis=-1, keepdims=True)
        e = jnp.exp(z)
        return e * pl.reciprocal(jnp.sum(e, axis=-1, keepdims=True), approx=True)

    def layer_norm(z, g, b):
        mu = jnp.mean(z, axis=-1, keepdims=True)
        var = jnp.mean(jnp.square(z - mu), axis=-1, keepdims=True)
        return (z - mu) * jax.lax.rsqrt(var + eps) * g + b

    def gelu(z):             # exact (erf) GELU == HF ACT2FN["gelu"]
        return 0.5 * z * (1.0 + jax.lax.erf(z * np.float32(1.0 / math.sqrt(2.0))))

    # ---- fused Q/K/V/conv_out projection: one lane-dense (S,D)@(D,4A) MXU matmul ----
    proj = mm(x, p["w_qkvco"]) + p["b_qkvco"]          # (S, 4A)
    q = proj[:, 0 * A:1 * A]
    k = proj[:, 1 * A:2 * A]
    v = proj[:, 2 * A:3 * A]
    co = proj[:, 3 * A:4 * A]

    # ---- SeparableConv1D over the sequence (depthwise taps from padded scratch, pointwise)
    # only the edge rows are zeroed (interior is fully overwritten every grid step; done
    # unconditionally so it is correct when the batch grid is split across TensorCores)
    if pad > 0:
        xp_ref[pl.ds(0, pad), :] = jnp.zeros((pad, D), f32)
        xp_ref[pl.ds(S + pad, pad), :] = jnp.zeros((pad, D), f32)
    xp_ref[pl.ds(pad, S), :] = x
    dw = jnp.zeros((S, D), f32)
    for kk in range(K):
        dw = dw + xp_ref[pl.ds(kk, S), :] * p["w_dw"][kk:kk + 1, :]
    conv_key = mm(dw, p["w_pw"]) + p["b_sep"]          # (S, A)

    # ---- span-based dynamic conv kernel: one flat (S,A)@(A,H*K) matmul ----
    conv_attn = conv_key * q                           # (S, A)
    ck = mm(conv_attn, p["w_ck"]) + p["b_ck"]          # (S, H*K)
    ckw = [softmax(ck[:, h * K:(h + 1) * K]) for h in range(H)]   # H x (S, K)

    # ---- nn.Unfold(kernel=[K,1]) on conv_out: shifted windows of a padded scratch ----
    if pad > 0:
        cop_ref[pl.ds(0, pad), :] = jnp.zeros((pad, A), f32)
        cop_ref[pl.ds(S + pad, pad), :] = jnp.zeros((pad, A), f32)
    cop_ref[pl.ds(pad, S), :] = co
    conv_parts = [jnp.zeros((S, HS), f32) for _ in range(H)]
    for kk in range(K):
        tap = cop_ref[pl.ds(kk, S), :]                 # (S, A) — one load per tap
        for h in range(H):
            conv_parts[h] = conv_parts[h] + tap[:, h * HS:(h + 1) * HS] * ckw[h][:, kk:kk + 1]

    # ---- self-attention: static per-head loop (HS-deep score/PV contraction is inherent) ----
    scale = np.float32(1.0 / math.sqrt(HS))
    attn_parts = []
    for h in range(H):
        qh = q[:, h * HS:(h + 1) * HS].astype(bf16)
        kh = k[:, h * HS:(h + 1) * HS].astype(bf16)
        vh = v[:, h * HS:(h + 1) * HS]
        scores = jax.lax.dot_general(qh, kh, (((1,), (1,)), ((), ())),
                                     preferred_element_type=f32)          # (S, S)
        probs = softmax(scores * scale + mask)
        attn_parts.append(mm(probs, vh))                                  # (S, HS)

    # ---- ConvBertSelfOutput: one full-depth (S,D)@(D,D) matmul + residual + LN ----
    # context = [attn heads (A lanes) | conv heads (A lanes)]  (matches HF concat order)
    context = jnp.concatenate(attn_parts + conv_parts, axis=-1)           # (S, D)
    attn_out = layer_norm(mm(context, p["w_so"]) + p["b_so"] + x,
                          p["ln1_g"], p["ln1_b"])

    # ---- feed-forward ----
    inter = gelu(mm(attn_out, p["w_int"]) + p["b_int"])
    y = layer_norm(mm(inter, p["w_out"]) + p["b_out"] + attn_out,
                   p["ln2_g"], p["ln2_b"])

    o_ref[0] = y.astype(o_ref.dtype)


# ----------------------------------------------------------------------------------------
# wrapper: one-time weight re-layout (outside the forward path) + pallas_call
# ----------------------------------------------------------------------------------------
def prepare_layer_params(p):
    """Stack / cast torch-layout params into the kernel layout. Run ONCE per model."""
    bf16, f32 = jnp.bfloat16, jnp.float32
    kp = dict(
        w_qkvco=jnp.concatenate([p["wq"], p["wk"], p["wv"], p["w_co"]], axis=1).astype(bf16),
        b_qkvco=jnp.concatenate([p["bq"], p["bk"], p["bv"], p["b_co"]], axis=1).astype(f32),
        w_dw=p["w_dw"].astype(f32),
        w_pw=p["w_pw"].astype(bf16), b_sep=p["b_sep"].astype(f32),
        w_ck=p["w_ck"].astype(bf16), b_ck=p["b_ck"].astype(f32),
        w_so=p["w_so"].astype(bf16), b_so=p["b_so"].astype(f32),
        ln1_g=p["ln1_g"].astype(f32), ln1_b=p["ln1_b"].astype(f32),
        w_int=p["w_int"].astype(bf16), b_int=p["b_int"].astype(f32),
        w_out=p["w_out"].astype(bf16), b_out=p["b_out"].astype(f32),
        ln2_g=p["ln2_g"].astype(f32), ln2_b=p["ln2_b"].astype(f32),
    )
    return [kp[name] for name in KERNEL_PARAM_ORDER]


def prepare_params(layer_params):
    return [prepare_layer_params(p) for p in layer_params]


def _vmem_limit_bytes(weights, *, S, D, A, I, H, HS, K):
    """Generation-aware scoped-VMEM budget (v7x has 64 MiB physical; v5e/v6e 128 MiB)."""
    weight_bytes = sum(int(np.prod(w.shape)) * int(w.dtype.itemsize) for w in weights)
    io_bytes = 4 * (2 * 2 * S * D + 2 * S)                      # double-buffered x/out + mask
    scratch_bytes = 4 * (2 * (S + K - 1) * D)                   # xp + cop scratches
    act_bytes = 4 * S * (4 * A + 2 * D + I + 2 * S)             # rough live-temps bound
    need = weight_bytes + io_bytes + scratch_bytes + act_bytes
    try:
        cap = int(getattr(pltpu.get_tpu_info(), "vmem_capacity_bytes", 64 * 2 ** 20))
    except Exception:  # pragma: no cover - defensive fallback
        cap = 64 * 2 ** 20
    ceiling = min(100 * 2 ** 20, (3 * cap) // 4)   # ~96 MiB on 128-MiB parts, 48 MiB on v7x
    return int(min(ceiling, max(32 * 2 ** 20, 2 * need)))


def convbert_layer_pallas(x, mask, weights, *, H, HS, K, eps=LN_EPS):
    """x: (B, S, D) f32; mask: (B, S) additive bias; weights: prepare_layer_params output."""
    B, S, D = x.shape
    A = H * HS
    assert D == 2 * A, "ConvBert head_ratio=2 layout requires hidden == 2 * all_head_size"
    assert K % 2 == 1, "HF SeparableConv1D / nn.Unfold paddings only line up for odd K"
    I = weights[KERNEL_PARAM_ORDER.index("w_int")].shape[1]

    mask3 = mask.reshape(B, 1, S).astype(jnp.float32)

    in_specs = [
        pl.BlockSpec((1, S, D), lambda b: (b, 0, 0)),   # x: one batch element per step
        pl.BlockSpec((1, 1, S), lambda b: (b, 0, 0)),   # additive attention bias
    ] + [pl.BlockSpec(memory_space=pltpu.VMEM) for _ in weights]  # weights fully resident

    kernel = functools.partial(_convbert_layer_kernel, H=H, HS=HS, K=K, eps=eps)
    return pl.pallas_call(
        kernel,
        out_shape=jax.ShapeDtypeStruct((B, S, D), jnp.float32),
        grid_spec=pltpu.PrefetchScalarGridSpec(
            num_scalar_prefetch=0,
            grid=(B,),
            in_specs=in_specs,
            out_specs=pl.BlockSpec((1, S, D), lambda b: (b, 0, 0)),
            scratch_shapes=[
                pltpu.VMEM((S + K - 1, D), jnp.float32),    # padded x (depthwise taps)
                pltpu.VMEM((S + K - 1, A), jnp.float32),    # padded conv_out (unfold taps)
            ],
        ),
        input_output_aliases={0: 0},   # reuse the activation buffer layer-to-layer
        compiler_params=pltpu.CompilerParams(
            dimension_semantics=("parallel",),   # batch is independent -> megacore on v7x
            vmem_limit_bytes=_vmem_limit_bytes(weights, S=S, D=D, A=A, I=I, H=H, HS=HS, K=K),
        ),
    )(x, mask3, *weights)


@functools.partial(jax.jit, static_argnames=("H", "HS", "K"))
def _convbert_forward(x, mask, prepared_layers, *, H, HS, K):
    for weights in prepared_layers:
        x = convbert_layer_pallas(x, mask, weights, H=H, HS=HS, K=K)
    return x


def convbert_for_matrix_rep(x, layer_params, attention_mask=None, *, H, HS, K,
                            mask_is_additive=True, prepared=None):
    """Equivalent of ConvBertForMatrixRep.forward (loop over ConvBertLayers)."""
    B, S, _ = x.shape
    if attention_mask is None:
        mask = jnp.zeros((B, S), jnp.float32)
    else:
        mask = attention_mask.astype(jnp.float32)
        if not mask_is_additive:
            # HF-style 0/1 keep-mask -> additive bias (the module itself expects additive)
            mask = (1.0 - mask) * jnp.float32(-1e9)
    if prepared is None:
        prepared = prepare_params(layer_params)   # callers should hoist/cache this
    return _convbert_forward(x.astype(jnp.float32), mask, prepared, H=H, HS=HS, K=K)


# ----------------------------------------------------------------------------------------
# independent pure-JAX reference (no Pallas) for a lowering / numerics check
# ----------------------------------------------------------------------------------------
def _ref_layer(x, mask, p, *, H, HS, K, eps):
    S, D = x.shape
    A = H * HS
    bf16, f32 = jnp.bfloat16, jnp.float32

    def mm(a, b):
        return jnp.dot(a.astype(bf16), b.astype(bf16), preferred_element_type=f32)

    def layer_norm(z, g, b):
        mu = jnp.mean(z, axis=-1, keepdims=True)
        var = jnp.mean(jnp.square(z - mu), axis=-1, keepdims=True)
        return (z - mu) * jax.lax.rsqrt(var + eps) * g + b

    def gelu(z):
        return 0.5 * z * (1.0 + jax.lax.erf(z * np.float32(1.0 / math.sqrt(2.0))))

    pad = (K - 1) // 2
    q = mm(x, p["wq"]) + p["bq"]
    k = mm(x, p["wk"]) + p["bk"]
    v = mm(x, p["wv"]) + p["bv"]
    co = mm(x, p["w_co"]) + p["b_co"]

    xp = jnp.pad(x, ((pad, K - 1 - pad), (0, 0)))
    dw = sum(xp[kk:kk + S] * p["w_dw"][kk] for kk in range(K))
    conv_key = mm(dw, p["w_pw"]) + p["b_sep"]

    conv_attn = conv_key * q
    ck = mm(conv_attn, p["w_ck"]) + p["b_ck"]
    ckw = jax.nn.softmax(ck.reshape(S, H, K), axis=-1)

    cop = jnp.pad(co, ((pad, K - 1 - pad), (0, 0)))
    conv_ctx = sum(cop[kk:kk + S].reshape(S, H, HS) * ckw[:, :, kk][:, :, None]
                   for kk in range(K))                                   # (S, H, HS)

    qh = q.reshape(S, H, HS).transpose(1, 0, 2)
    kh = k.reshape(S, H, HS).transpose(1, 0, 2)
    vh = v.reshape(S, H, HS).transpose(1, 0, 2)
    scores = jnp.einsum("hqd,hkd->hqk", qh.astype(bf16), kh.astype(bf16),
                        preferred_element_type=f32) / np.float32(math.sqrt(HS))
    probs = jax.nn.softmax(scores + mask[None, :, :], axis=-1)
    attn_ctx = jnp.einsum("hqk,hkd->qhd", probs.astype(bf16), vh.astype(bf16),
                          preferred_element_type=f32)                    # (S, H, HS)

    context = jnp.concatenate([attn_ctx.reshape(S, A), conv_ctx.reshape(S, A)], axis=-1)
    attn_out = layer_norm(mm(context, p["w_so"]) + p["b_so"] + x, p["ln1_g"], p["ln1_b"])
    inter = gelu(mm(attn_out, p["w_int"]) + p["b_int"])
    return layer_norm(mm(inter, p["w_out"]) + p["b_out"] + attn_out, p["ln2_g"], p["ln2_b"])


def convbert_ref(x, layer_params, *, H, HS, K):
    B, S, _ = x.shape
    mask = jnp.zeros((1, S), jnp.float32)
    outs = []
    for b in range(B):
        h = x[b]
        for p in layer_params:
            h = _ref_layer(h, mask, p, H=H, HS=HS, K=K, eps=LN_EPS)
        outs.append(h)
    return jnp.stack(outs)


# ----------------------------------------------------------------------------------------
# parameter init (torch-equivalent layouts)
# ----------------------------------------------------------------------------------------
def init_layer_params(key, D, H, HS, K, I, std=0.02):
    A = H * HS
    shapes = {
        "wq": (D, A), "bq": (1, A),
        "wk": (D, A), "bk": (1, A),
        "wv": (D, A), "bv": (1, A),
        "w_dw": (K, D),             # depthwise.weight[c, 0, k] stored as [k, c]
        "w_pw": (D, A),             # pointwise.weight[o, c, 0] stored as [c, o]
        "b_sep": (1, A),
        "w_ck": (A, H * K), "b_ck": (1, H * K),
        "w_co": (D, A), "b_co": (1, A),
        "w_so": (D, D), "b_so": (1, D),
        "ln1_g": (1, D), "ln1_b": (1, D),
        "w_int": (D, I), "b_int": (1, I),
        "w_out": (I, D), "b_out": (1, D),
        "ln2_g": (1, D), "ln2_b": (1, D),
    }
    params = {}
    for name, kk in zip(PARAM_NAMES, jax.random.split(key, len(PARAM_NAMES))):
        shp = shapes[name]
        if name.startswith("w"):
            params[name] = (std * jax.random.normal(kk, shp)).astype(jnp.float32)
        elif name.startswith("ln") and name.endswith("_g"):
            params[name] = jnp.ones(shp, jnp.float32)
        else:
            params[name] = jnp.zeros(shp, jnp.float32)
    return params


if __name__ == "__main__":
    # Synthetic config mirroring ConvBertForMatrixRep.__init__ with ConvBert defaults:
    # hidden_dim=32, nhead=4, intermediate_dim=64, kernel_size=3, 2 ConvBertLayers,
    # dropout=0 (eval), head_ratio=2, num_groups=1, hidden_act="gelu", eps=1e-12.
    D, nhead, I, K, num_layers = 32, 4, 64, 3, 2
    head_ratio = 2
    H = nhead // head_ratio            # effective attention heads = 2
    HS = (D // H) // 2                 # per-head size = 8
    B, S = 2, 8

    key = jax.random.PRNGKey(0)
    kx, kp = jax.random.split(key)
    x = jax.random.normal(kx, (B, S, D), jnp.float32)
    layer_params = [
        init_layer_params(k, D, H, HS, K, I) for k in jax.random.split(kp, num_layers)
    ]

    y_ref = jax.block_until_ready(convbert_ref(x, layer_params, H=H, HS=HS, K=K))

    # weight re-layout (stack / split / bf16-cast) is done ONCE and reused across calls
    prepared = prepare_params(layer_params)
    y = convbert_for_matrix_rep(x, layer_params, attention_mask=None,
                                H=H, HS=HS, K=K, prepared=prepared)
    y = jax.block_until_ready(y)

    np.testing.assert_allclose(np.asarray(y), np.asarray(y_ref), atol=1e-2, rtol=1e-2)
    assert y.shape == (B, S, D) and bool(jnp.all(jnp.isfinite(y)))
    print("KERNEL_OK")
</pallas_src>

<mosaic_0001>
module attributes {stable_mosaic.version = 11 : i64} {
  func.func @_convbert_layer_kernel(%arg0: i32, %arg1: memref<1x8x32xf32, #tpu.memory_space<vmem>>, %arg2: memref<1x1x8xf32, #tpu.memory_space<vmem>>, %arg3: memref<32x64xbf16, #tpu.memory_space<vmem>>, %arg4: memref<1x64xf32, #tpu.memory_space<vmem>>, %arg5: memref<3x32xf32, #tpu.memory_space<vmem>>, %arg6: memref<32x16xbf16, #tpu.memory_space<vmem>>, %arg7: memref<1x16xf32, #tpu.memory_space<vmem>>, %arg8: memref<16x6xbf16, #tpu.memory_space<vmem>>, %arg9: memref<1x6xf32, #tpu.memory_space<vmem>>, %arg10: memref<32x32xbf16, #tpu.memory_space<vmem>>, %arg11: memref<1x32xf32, #tpu.memory_space<vmem>>, %arg12: memref<1x32xf32, #tpu.memory_space<vmem>>, %arg13: memref<1x32xf32, #tpu.memory_space<vmem>>, %arg14: memref<32x64xbf16, #tpu.memory_space<vmem>>, %arg15: memref<1x64xf32, #tpu.memory_space<vmem>>, %arg16: memref<64x32xbf16, #tpu.memory_space<vmem>>, %arg17: memref<1x32xf32, #tpu.memory_space<vmem>>, %arg18: memref<1x32xf32, #tpu.memory_space<vmem>>, %arg19: memref<1x32xf32, #tpu.memory_space<vmem>>, %arg20: memref<1x8x32xf32, #tpu.memory_space<vmem>>, %arg21: memref<10x32xf32, #tpu.memory_space<vmem>>, %arg22: memref<10x16xf32, #tpu.memory_space<vmem>>) attributes {dimension_semantics = [#tpu.dimension_semantics<parallel>], iteration_bounds = array<i64: 2>, scalar_prefetch = 0 : i64, scratch_operands = 2 : i64, tpu.core_type = #tpu.core_type<tc>, window_params = [{transform_indices = @transform_0, window_bounds = array<i64: 1, 8, 32>}, {transform_indices = @transform_1, window_bounds = array<i64: 1, 1, 8>}, {pipeline_mode = #tpu.pipeline_mode<synchronous>, transform_indices = @transform_2, window_bounds = array<i64: 32, 64>}, {pipeline_mode = #tpu.pipeline_mode<synchronous>, transform_indices = @transform_3, window_bounds = array<i64: 1, 64>}, {pipeline_mode = #tpu.pipeline_mode<synchronous>, transform_indices = @transform_4, window_bounds = array<i64: 3, 32>}, {pipeline_mode = #tpu.pipeline_mode<synchronous>, transform_indices = @transform_5, window_bounds = array<i64: 32, 16>}, {pipeline_mode = #tpu.pipeline_mode<synchronous>, transform_indices = @transform_6, window_bounds = array<i64: 1, 16>}, {pipeline_mode = #tpu.pipeline_mode<synchronous>, transform_indices = @transform_7, window_bounds = array<i64: 16, 6>}, {pipeline_mode = #tpu.pipeline_mode<synchronous>, transform_indices = @transform_8, window_bounds = array<i64: 1, 6>}, {pipeline_mode = #tpu.pipeline_mode<synchronous>, transform_indices = @transform_9, window_bounds = array<i64: 32, 32>}, {pipeline_mode = #tpu.pipeline_mode<synchronous>, transform_indices = @transform_10, window_bounds = array<i64: 1, 32>}, {pipeline_mode = #tpu.pipeline_mode<synchronous>, transform_indices = @transform_11, window_bounds = array<i64: 1, 32>}, {pipeline_mode = #tpu.pipeline_mode<synchronous>, transform_indices = @transform_12, window_bounds = array<i64: 1, 32>}, {pipeline_mode = #tpu.pipeline_mode<synchronous>, transform_indices = @transform_13, window_bounds = array<i64: 32, 64>}, {pipeline_mode = #tpu.pipeline_mode<synchronous>, transform_indices = @transform_14, window_bounds = array<i64: 1, 64>}, {pipeline_mode = #tpu.pipeline_mode<synchronous>, transform_indices = @transform_15, window_bounds = array<i64: 64, 32>}, {pipeline_mode = #tpu.pipeline_mode<synchronous>, transform_indices = @transform_16, window_bounds = array<i64: 1, 32>}, {pipeline_mode = #tpu.pipeline_mode<synchronous>, transform_indices = @transform_17, window_bounds = array<i64: 1, 32>}, {pipeline_mode = #tpu.pipeline_mode<synchronous>, transform_indices = @transform_18, window_bounds = array<i64: 1, 32>}, {transform_indices = @transform_19, window_bounds = array<i64: 1, 8, 32>}]} {
    %c0 = arith.constant 0 : index
    %c0_0 = arith.constant 0 : index
    %0 = vector.load %arg3[%c0, %c0_0] : memref<32x64xbf16, #tpu.memory_space<vmem>>, vector<32x64xbf16>
    %c0_1 = arith.constant 0 : index
    %c0_2 = arith.constant 0 : index
    %1 = vector.load %arg4[%c0_1, %c0_2] : memref<1x64xf32, #tpu.memory_space<vmem>>, vector<1x64xf32>
    %c0_3 = arith.constant 0 : index
    %c0_4 = arith.constant 0 : index
    %2 = vector.load %arg5[%c0_3, %c0_4] : memref<3x32xf32, #tpu.memory_space<vmem>>, vector<3x32xf32>
    %c0_5 = arith.constant 0 : index
    %c0_6 = arith.constant 0 : index
    %3 = vector.load %arg6[%c0_5, %c0_6] : memref<32x16xbf16, #tpu.memory_space<vmem>>, vector<32x16xbf16>
    %c0_7 = arith.constant 0 : index
    %c0_8 = arith.constant 0 : index
    %4 = vector.load %arg7[%c0_7, %c0_8] : memref<1x16xf32, #tpu.memory_space<vmem>>, vector<1x16xf32>
    %c0_9 = arith.constant 0 : index
    %c0_10 = arith.constant 0 : index
    %5 = vector.load %arg8[%c0_9, %c0_10] : memref<16x6xbf16, #tpu.memory_space<vmem>>, vector<16x6xbf16>
    %c0_11 = arith.constant 0 : index
    %c0_12 = arith.constant 0 : index
    %6 = vector.load %arg9[%c0_11, %c0_12] : memref<1x6xf32, #tpu.memory_space<vmem>>, vector<1x6xf32>
    %c0_13 = arith.constant 0 : index
    %c0_14 = arith.constant 0 : index
    %7 = vector.load %arg10[%c0_13, %c0_14] : memref<32x32xbf16, #tpu.memory_space<vmem>>, vector<32x32xbf16>
    %c0_15 = arith.constant 0 : index
    %c0_16 = arith.constant 0 : index
    %8 = vector.load %arg11[%c0_15, %c0_16] : memref<1x32xf32, #tpu.memory_space<vmem>>, vector<1x32xf32>
    %c0_17 = arith.constant 0 : index
    %c0_18 = arith.constant 0 : index
    %9 = vector.load %arg12[%c0_17, %c0_18] : memref<1x32xf32, #tpu.memory_space<vmem>>, vector<1x32xf32>
    %c0_19 = arith.constant 0 : index
    %c0_20 = arith.constant 0 : index
    %10 = vector.load %arg13[%c0_19, %c0_20] : memref<1x32xf32, #tpu.memory_space<vmem>>, vector<1x32xf32>
    %c0_21 = arith.constant 0 : index
    %c0_22 = arith.constant 0 : index
    %11 = vector.load %arg14[%c0_21, %c0_22] : memref<32x64xbf16, #tpu.memory_space<vmem>>, vector<32x64xbf16>
    %c0_23 = arith.constant 0 : index
    %c0_24 = arith.constant 0 : index
    %12 = vector.load %arg15[%c0_23, %c0_24] : memref<1x64xf32, #tpu.memory_space<vmem>>, vector<1x64xf32>
    %c0_25 = arith.constant 0 : index
    %c0_26 = arith.constant 0 : index
    %13 = vector.load %arg16[%c0_25, %c0_26] : memref<64x32xbf16, #tpu.memory_space<vmem>>, vector<64x32xbf16>
    %c0_27 = arith.constant 0 : index
    %c0_28 = arith.constant 0 : index
    %14 = vector.load %arg17[%c0_27, %c0_28] : memref<1x32xf32, #tpu.memory_space<vmem>>, vector<1x32xf32>
    %c0_29 = arith.constant 0 : index
    %c0_30 = arith.constant 0 : index
    %15 = vector.load %arg18[%c0_29, %c0_30] : memref<1x32xf32, #tpu.memory_space<vmem>>, vector<1x32xf32>
    %c0_31 = arith.constant 0 : index
    %c0_32 = arith.constant 0 : index
    %16 = vector.load %arg19[%c0_31, %c0_32] : memref<1x32xf32, #tpu.memory_space<vmem>>, vector<1x32xf32>
    %c0_33 = arith.constant 0 : index
    %c0_34 = arith.constant 0 : index
    %c0_35 = arith.constant 0 : index
    %17 = vector.load %arg1[%c0_33, %c0_34, %c0_35] : memref<1x8x32xf32, #tpu.memory_space<vmem>>, vector<1x8x32xf32>
    %18 = vector.shape_cast %17 : vector<1x8x32xf32> to vector<8x32xf32>
    %c0_36 = arith.constant 0 : index
    %c0_37 = arith.constant 0 : index
    %c0_38 = arith.constant 0 : index
    %19 = vector.load %arg2[%c0_36, %c0_37, %c0_38] : memref<1x1x8xf32, #tpu.memory_space<vmem>>, vector<1x1x8xf32>
    %20 = vector.shape_cast %19 : vector<1x1x8xf32> to vector<1x8xf32>
    %21 = arith.truncf %18 : vector<8x32xf32> to vector<8x32xbf16>
    %cst = arith.constant dense<0.000000e+00> : vector<8x64xf32>
    %22 = tpu.matmul %21, %0, %cst {dimension_numbers = #tpu.dot_dimension_numbers<[1], [0], [0], [1], [0, 0, 1, 1], [], []>} : vector<8x32xbf16>, vector<32x64xbf16>, vector<8x64xf32> -> vector<8x64xf32>
    %23 = vector.broadcast %1 : vector<1x64xf32> to vector<8x64xf32>
    %24 = arith.addf %22, %23 : vector<8x64xf32>
    %25 = vector.extract_strided_slice %24 {offsets = [0, 0], sizes = [8, 16], strides = [1, 1]} : vector<8x64xf32> to vector<8x16xf32>
    %26 = vector.extract_strided_slice %24 {offsets = [0, 16], sizes = [8, 16], strides = [1, 1]} : vector<8x64xf32> to vector<8x16xf32>
    %27 = vector.extract_strided_slice %24 {offsets = [0, 32], sizes = [8, 16], strides = [1, 1]} : vector<8x64xf32> to vector<8x16xf32>
    %28 = vector.extract_strided_slice %24 {offsets = [0, 48], sizes = [8, 16], strides = [1, 1]} : vector<8x64xf32> to vector<8x16xf32>
    %cst_39 = arith.constant 0.000000e+00 : f32
    %29 = vector.broadcast %cst_39 : f32 to vector<1x32xf32>
    %c0_40 = arith.constant 0 : index
    %c0_41 = arith.constant 0 : index
    %30 = vector.load %arg21[%c0_40, %c0_41] : memref<10x32xf32, #tpu.memory_space<vmem>>, vector<1x32xf32>
    tpu.vector_store %arg21[%c0_40, %c0_41], %29 {strides = array<i32>} : memref<10x32xf32, #tpu.memory_space<vmem>>, vector<1x32xf32>,
    %cst_42 = arith.constant 0.000000e+00 : f32
    %31 = vector.broadcast %cst_42 : f32 to vector<1x32xf32>
    %c9 = arith.constant 9 : index
    %c0_43 = arith.constant 0 : index
    %32 = vector.load %arg21[%c9, %c0_43] : memref<10x32xf32, #tpu.memory_space<vmem>>, vector<1x32xf32>
    tpu.vector_store %arg21[%c9, %c0_43], %31 {strides = array<i32>} : memref<10x32xf32, #tpu.memory_space<vmem>>, vector<1x32xf32>,
    %c1 = arith.constant 1 : index
    %c0_44 = arith.constant 0 : index
    %33 = vector.load %arg21[%c1, %c0_44] : memref<10x32xf32, #tpu.memory_space<vmem>>, vector<8x32xf32>
    tpu.vector_store %arg21[%c1, %c0_44], %18 {strides = array<i32>} : memref<10x32xf32, #tpu.memory_space<vmem>>, vector<8x32xf32>,
    %cst_45 = arith.constant 0.000000e+00 : f32
    %34 = vector.broadcast %cst_45 : f32 to vector<8x32xf32>
    %c0_46 = arith.constant 0 : index
    %c0_47 = arith.constant 0 : index
    %35 = vector.load %arg21[%c0_46, %c0_47] : memref<10x32xf32, #tpu.memory_space<vmem>>, vector<8x32xf32>
    %36 = vector.extract_strided_slice %2 {offsets = [0, 0], sizes = [1, 32], strides = [1, 1]} : vector<3x32xf32> to vector<1x32xf32>
    %37 = vector.broadcast %36 : vector<1x32xf32> to vector<8x32xf32>
    %38 = arith.mulf %35, %37 : vector<8x32xf32>
    %39 = arith.addf %34, %38 : vector<8x32xf32>
    %c1_48 = arith.constant 1 : index
    %c0_49 = arith.constant 0 : index
    %40 = vector.load %arg21[%c1_48, %c0_49] : memref<10x32xf32, #tpu.memory_space<vmem>>, vector<8x32xf32>
    %41 = vector.extract_strided_slice %2 {offsets = [1, 0], sizes = [1, 32], strides = [1, 1]} : vector<3x32xf32> to vector<1x32xf32>
    %42 = vector.broadcast %41 : vector<1x32xf32> to vector<8x32xf32>
    %43 = arith.mulf %40, %42 : vector<8x32xf32>
    %44 = arith.addf %39, %43 : vector<8x32xf32>
    %c2 = arith.constant 2 : index
    %c0_50 = arith.constant 0 : index
    %45 = vector.load %arg21[%c2, %c0_50] : memref<10x32xf32, #tpu.memory_space<vmem>>, vector<8x32xf32>
    %46 = vector.extract_strided_slice %2 {offsets = [2, 0], sizes = [1, 32], strides = [1, 1]} : vector<3x32xf32> to vector<1x32xf32>
    %47 = vector.broadcast %46 : vector<1x32xf32> to vector<8x32xf32>
    %48 = arith.mulf %45, %47 : vector<8x32xf32>
    %49 = arith.addf %44, %48 : vector<8x32xf32>
    %50 = arith.truncf %49 : vector<8x32xf32> to vector<8x32xbf16>
    %cst_51 = arith.constant dense<0.000000e+00> : vector<8x16xf32>
    %51 = tpu.matmul %50, %3, %cst_51 {dimension_numbers = #tpu.dot_dimension_numbers<[1], [0], [0], [1], [0, 0, 1, 1], [], []>} : vector<8x32xbf16>, vector<32x16xbf16>, vector<8x16xf32> -> vector<8x16xf32>
    %52 = vector.broadcast %4 : vector<1x16xf32> to vector<8x16xf32>
    %53 = arith.addf %51, %52 : vector<8x16xf32>
    %54 = arith.mulf %53, %25 : vector<8x16xf32>
    %55 = arith.truncf %54 : vector<8x16xf32> to vector<8x16xbf16>
    %cst_52 = arith.constant dense<0.000000e+00> : vector<8x6xf32>
    %56 = tpu.matmul %55, %5, %cst_52 {dimension_numbers = #tpu.dot_dimension_numbers<[1], [0], [0], [1], [0, 0, 1, 1], [], []>} : vector<8x16xbf16>, vector<16x6xbf16>, vector<8x6xf32> -> vector<8x6xf32>
    %57 = vector.broadcast %6 : vector<1x6xf32> to vector<8x6xf32>
    %58 = arith.addf %56, %57 : vector<8x6xf32>
    %59 = vector.extract_strided_slice %58 {offsets = [0, 0], sizes = [8, 3], strides = [1, 1]} : vector<8x6xf32> to vector<8x3xf32>
    %cst_53 = arith.constant dense<0xFF800000> : vector<8xf32>
    %60 = vector.multi_reduction <maximumf>, %59, %cst_53 [1] : vector<8x3xf32> to vector<8xf32>
    %61 = vector.shape_cast %60 : vector<8xf32> to vector<8x1xf32>
    %62 = vector.broadcast %61 : vector<8x1xf32> to vector<8x3xf32>
    %63 = arith.subf %59, %62 : vector<8x3xf32>
    %64 = math.exp %63 : vector<8x3xf32>
    %cst_54 = arith.constant dense<0.000000e+00> : vector<8xf32>
    %65 = vector.multi_reduction <add>, %64, %cst_54 [1] : vector<8x3xf32> to vector<8xf32>
    %66 = vector.shape_cast %65 : vector<8xf32> to vector<8x1xf32>
    %67 = tpu.reciprocal %66 {approx = true} : vector<8x1xf32> -> vector<8x1xf32>
    %68 = vector.broadcast %67 : vector<8x1xf32> to vector<8x3xf32>
    %69 = arith.mulf %64, %68 : vector<8x3xf32>
    %70 = vector.extract_strided_slice %58 {offsets = [0, 3], sizes = [8, 3], strides = [1, 1]} : vector<8x6xf32> to vector<8x3xf32>
    %cst_55 = arith.constant dense<0xFF800000> : vector<8xf32>
    %71 = vector.multi_reduction <maximumf>, %70, %cst_55 [1] : vector<8x3xf32> to vector<8xf32>
    %72 = vector.shape_cast %71 : vector<8xf32> to vector<8x1xf32>
    %73 = vector.broadcast %72 : vector<8x1xf32> to vector<8x3xf32>
    %74 = arith.subf %70, %73 : vector<8x3xf32>
    %75 = math.exp %74 : vector<8x3xf32>
    %cst_56 = arith.constant dense<0.000000e+00> : vector<8xf32>
    %76 = vector.multi_reduction <add>, %75, %cst_56 [1] : vector<8x3xf32> to vector<8xf32>
    %77 = vector.shape_cast %76 : vector<8xf32> to vector<8x1xf32>
    %78 = tpu.reciprocal %77 {approx = true} : vector<8x1xf32> -> vector<8x1xf32>
    %79 = vector.broadcast %78 : vector<8x1xf32> to vector<8x3xf32>
    %80 = arith.mulf %75, %79 : vector<8x3xf32>
    %cst_57 = arith.constant 0.000000e+00 : f32
    %81 = vector.broadcast %cst_57 : f32 to vector<1x16xf32>
    %c0_58 = arith.constant 0 : index
    %c0_59 = arith.constant 0 : index
    %82 = vector.load %arg22[%c0_58, %c0_59] : memref<10x16xf32, #tpu.memory_space<vmem>>, vector<1x16xf32>
    tpu.vector_store %arg22[%c0_58, %c0_59], %81 {strides = array<i32>} : memref<10x16xf32, #tpu.memory_space<vmem>>, vector<1x16xf32>,
    %cst_60 = arith.constant 0.000000e+00 : f32
    %83 = vector.broadcast %cst_60 : f32 to vector<1x16xf32>
    %c9_61 = arith.constant 9 : index
    %c0_62 = arith.constant 0 : index
    %84 = vector.load %arg22[%c9_61, %c0_62] : memref<10x16xf32, #tpu.memory_space<vmem>>, vector<1x16xf32>
    tpu.vector_store %arg22[%c9_61, %c0_62], %83 {strides = array<i32>} : memref<10x16xf32, #tpu.memory_space<vmem>>, vector<1x16xf32>,
    %c1_63 = arith.constant 1 : index
    %c0_64 = arith.constant 0 : index
    %85 = vector.load %arg22[%c1_63, %c0_64] : memref<10x16xf32, #tpu.memory_space<vmem>>, vector<8x16xf32>
    tpu.vector_store %arg22[%c1_63, %c0_64], %28 {strides = array<i32>} : memref<10x16xf32, #tpu.memory_space<vmem>>, vector<8x16xf32>,
    %cst_65 = arith.constant 0.000000e+00 : f32
    %86 = vector.broadcast %cst_65 : f32 to vector<8x8xf32>
    %cst_66 = arith.constant 0.000000e+00 : f32
    %87 = vector.broadcast %cst_66 : f32 to vector<8x8xf32>
    %c0_67 = arith.constant 0 : index
    %c0_68 = arith.constant 0 : index
    %88 = vector.load %arg22[%c0_67, %c0_68] : memref<10x16xf32, #tpu.memory_space<vmem>>, vector<8x16xf32>
    %89 = vector.extract_strided_slice %88 {offsets = [0, 0], sizes = [8, 8], strides = [1, 1]} : vector<8x16xf32> to vector<8x8xf32>
    %90 = vector.extract_strided_slice %69 {offsets = [0, 0], sizes = [8, 1], strides = [1, 1]} : vector<8x3xf32> to vector<8x1xf32>
    %91 = vector.broadcast %90 : vector<8x1xf32> to vector<8x8xf32>
    %92 = arith.mulf %89, %91 : vector<8x8xf32>
    %93 = arith.addf %86, %92 : vector<8x8xf32>
    %94 = vector.extract_strided_slice %88 {offsets = [0, 8], sizes = [8, 8], strides = [1, 1]} : vector<8x16xf32> to vector<8x8xf32>
    %95 = vector.extract_strided_slice %80 {offsets = [0, 0], sizes = [8, 1], strides = [1, 1]} : vector<8x3xf32> to vector<8x1xf32>
    %96 = vector.broadcast %95 : vector<8x1xf32> to vector<8x8xf32>
    %97 = arith.mulf %94, %96 : vector<8x8xf32>
    %98 = arith.addf %87, %97 : vector<8x8xf32>
    %c1_69 = arith.constant 1 : index
    %c0_70 = arith.constant 0 : index
    %99 = vector.load %arg22[%c1_69, %c0_70] : memref<10x16xf32, #tpu.memory_space<vmem>>, vector<8x16xf32>
    %100 = vector.extract_strided_slice %99 {offsets = [0, 0], sizes = [8, 8], strides = [1, 1]} : vector<8x16xf32> to vector<8x8xf32>
    %101 = vector.extract_strided_slice %69 {offsets = [0, 1], sizes = [8, 1], strides = [1, 1]} : vector<8x3xf32> to vector<8x1xf32>
    %102 = vector.broadcast %101 : vector<8x1xf32> to vector<8x8xf32>
    %103 = arith.mulf %100, %102 : vector<8x8xf32>
    %104 = arith.addf %93, %103 : vector<8x8xf32>
    %105 = vector.extract_strided_slice %99 {offsets = [0, 8], sizes = [8, 8], strides = [1, 1]} : vector<8x16xf32> to vector<8x8xf32>
    %106 = vector.extract_strided_slice %80 {offsets = [0, 1], sizes = [8, 1], strides = [1, 1]} : vector<8x3xf32> to vector<8x1xf32>
    %107 = vector.broadcast %106 : vector<8x1xf32> to vector<8x8xf32>
    %108 = arith.mulf %105, %107 : vector<8x8xf32>
    %109 = arith.addf %98, %108 : vector<8x8xf32>
    %c2_71 = arith.constant 2 : index
    %c0_72 = arith.constant 0 : index
    %110 = vector.load %arg22[%c2_71, %c0_72] : memref<10x16xf32, #tpu.memory_space<vmem>>, vector<8x16xf32>
    %111 = vector.extract_strided_slice %110 {offsets = [0, 0], sizes = [8, 8], strides = [1, 1]} : vector<8x16xf32> to vector<8x8xf32>
    %112 = vector.extract_strided_slice %69 {offsets = [0, 2], sizes = [8, 1], strides = [1, 1]} : vector<8x3xf32> to vector<8x1xf32>
    %113 = vector.broadcast %112 : vector<8x1xf32> to vector<8x8xf32>
    %114 = arith.mulf %111, %113 : vector<8x8xf32>
    %115 = arith.addf %104, %114 : vector<8x8xf32>
    %116 = vector.extract_strided_slice %110 {offsets = [0, 8], sizes = [8, 8], strides = [1, 1]} : vector<8x16xf32> to vector<8x8xf32>
    %117 = vector.extract_strided_slice %80 {offsets = [0, 2], sizes = [8, 1], strides = [1, 1]} : vector<8x3xf32> to vector<8x1xf32>
    %118 = vector.broadcast %117 : vector<8x1xf32> to vector<8x8xf32>
    %119 = arith.mulf %116, %118 : vector<8x8xf32>
    %120 = arith.addf %109, %119 : vector<8x8xf32>
    %121 = vector.extract_strided_slice %25 {offsets = [0, 0], sizes = [8, 8], strides = [1, 1]} : vector<8x16xf32> to vector<8x8xf32>
    %122 = arith.truncf %121 : vector<8x8xf32> to vector<8x8xbf16>
    %123 = vector.extract_strided_slice %26 {offsets = [0, 0], sizes = [8, 8], strides = [1, 1]} : vector<8x16xf32> to vector<8x8xf32>
    %124 = arith.truncf %123 : vector<8x8xf32> to vector<8x8xbf16>
    %125 = vector.extract_strided_slice %27 {offsets = [0, 0], sizes = [8, 8], strides = [1, 1]} : vector<8x16xf32> to vector<8x8xf32>
    %cst_73 = arith.constant dense<0.000000e+00> : vector<8x8xf32>
    %126 = tpu.matmul %122, %124, %cst_73 {dimension_numbers = #tpu.dot_dimension_numbers<[1], [1], [0], [0], [0, 0, 1, 0], [], []>} : vector<8x8xbf16>, vector<8x8xbf16>, vector<8x8xf32> -> vector<8x8xf32>
    %cst_74 = arith.constant 0.353553385 : f32
    %127 = vector.broadcast %cst_74 : f32 to vector<8x8xf32>
    %128 = arith.mulf %126, %127 : vector<8x8xf32>
    %129 = vector.broadcast %20 : vector<1x8xf32> to vector<8x8xf32>
    %130 = arith.addf %128, %129 : vector<8x8xf32>
    %cst_75 = arith.constant dense<0xFF800000> : vector<8xf32>
    %131 = vector.multi_reduction <maximumf>, %130, %cst_75 [1] : vector<8x8xf32> to vector<8xf32>
    %132 = vector.shape_cast %131 : vector<8xf32> to vector<8x1xf32>
    %133 = vector.broadcast %132 : vector<8x1xf32> to vector<8x8xf32>
    %134 = arith.subf %130, %133 : vector<8x8xf32>
    %135 = math.exp %134 : vector<8x8xf32>
    %cst_76 = arith.constant dense<0.000000e+00> : vector<8xf32>
    %136 = vector.multi_reduction <add>, %135, %cst_76 [1] : vector<8x8xf32> to vector<8xf32>
    %137 = vector.shape_cast %136 : vector<8xf32> to vector<8x1xf32>
    %138 = tpu.reciprocal %137 {approx = true} : vector<8x1xf32> -> vector<8x1xf32>
    %139 = vector.broadcast %138 : vector<8x1xf32> to vector<8x8xf32>
    %140 = arith.mulf %135, %139 : vector<8x8xf32>
    %141 = arith.truncf %140 : vector<8x8xf32> to vector<8x8xbf16>
    %142 = arith.truncf %125 : vector<8x8xf32> to vector<8x8xbf16>
    %cst_77 = arith.constant dense<0.000000e+00> : vector<8x8xf32>
    %143 = tpu.matmul %141, %142, %cst_77 {dimension_numbers = #tpu.dot_dimension_numbers<[1], [0], [0], [1], [0, 0, 1, 1], [], []>} : vector<8x8xbf16>, vector<8x8xbf16>, vector<8x8xf32> -> vector<8x8xf32>
    %144 = vector.extract_strided_slice %25 {offsets = [0, 8], sizes = [8, 8], strides = [1, 1]} : vector<8x16xf32> to vector<8x8xf32>
    %145 = arith.truncf %144 : vector<8x8xf32> to vector<8x8xbf16>
    %146 = vector.extract_strided_slice %26 {offsets = [0, 8], sizes = [8, 8], strides = [1, 1]} : vector<8x16xf32> to vector<8x8xf32>
    %147 = arith.truncf %146 : vector<8x8xf32> to vector<8x8xbf16>
    %148 = vector.extract_strided_slice %27 {offsets = [0, 8], sizes = [8, 8], strides = [1, 1]} : vector<8x16xf32> to vector<8x8xf32>
    %cst_78 = arith.constant dense<0.000000e+00> : vector<8x8xf32>
    %149 = tpu.matmul %145, %147, %cst_78 {dimension_numbers = #tpu.dot_dimension_numbers<[1], [1], [0], [0], [0, 0, 1, 0], [], []>} : vector<8x8xbf16>, vector<8x8xbf16>, vector<8x8xf32> -> vector<8x8xf32>
    %cst_79 = arith.constant 0.353553385 : f32
    %150 = vector.broadcast %cst_79 : f32 to vector<8x8xf32>
    %151 = arith.mulf %149, %150 : vector<8x8xf32>
    %152 = vector.broadcast %20 : vector<1x8xf32> to vector<8x8xf32>
    %153 = arith.addf %151, %152 : vector<8x8xf32>
    %cst_80 = arith.constant dense<0xFF800000> : vector<8xf32>
    %154 = vector.multi_reduction <maximumf>, %153, %cst_80 [1] : vector<8x8xf32> to vector<8xf32>
    %155 = vector.shape_cast %154 : vector<8xf32> to vector<8x1xf32>
    %156 = vector.broadcast %155 : vector<8x1xf32> to vector<8x8xf32>
    %157 = arith.subf %153, %156 : vector<8x8xf32>
    %158 = math.exp %157 : vector<8x8xf32>
    %cst_81 = arith.constant dense<0.000000e+00> : vector<8xf32>
    %159 = vector.multi_reduction <add>, %158, %cst_81 [1] : vector<8x8xf32> to vector<8xf32>
    %160 = vector.shape_cast %159 : vector<8xf32> to vector<8x1xf32>
    %161 = tpu.reciprocal %160 {approx = true} : vector<8x1xf32> -> vector<8x1xf32>
    %162 = vector.broadcast %161 : vector<8x1xf32> to vector<8x8xf32>
    %163 = arith.mulf %158, %162 : vector<8x8xf32>
    %164 = arith.truncf %163 : vector<8x8xf32> to vector<8x8xbf16>
    %165 = arith.truncf %148 : vector<8x8xf32> to vector<8x8xbf16>
    %cst_82 = arith.constant dense<0.000000e+00> : vector<8x8xf32>
    %166 = tpu.matmul %164, %165, %cst_82 {dimension_numbers = #tpu.dot_dimension_numbers<[1], [0], [0], [1], [0, 0, 1, 1], [], []>} : vector<8x8xbf16>, vector<8x8xbf16>, vector<8x8xf32> -> vector<8x8xf32>
    %167 = tpu.concatenate %143, %166, %115, %120 in 1 : vector<8x8xf32>, vector<8x8xf32>, vector<8x8xf32>, vector<8x8xf32> -> vector<8x32xf32>
    %168 = arith.truncf %167 : vector<8x32xf32> to vector<8x32xbf16>
    %cst_83 = arith.constant dense<0.000000e+00> : vector<8x32xf32>
    %169 = tpu.matmul %168, %7, %cst_83 {dimension_numbers = #tpu.dot_dimension_numbers<[1], [0], [0], [1], [0, 0, 1, 1], [], []>} : vector<8x32xbf16>, vector<32x32xbf16>, vector<8x32xf32> -> vector<8x32xf32>
    %170 = vector.broadcast %8 : vector<1x32xf32> to vector<8x32xf32>
    %171 = arith.addf %169, %170 : vector<8x32xf32>
    %172 = arith.addf %171, %18 : vector<8x32xf32>
    %cst_84 = arith.constant dense<0.000000e+00> : vector<8xf32>
    %173 = vector.multi_reduction <add>, %172, %cst_84 [1] : vector<8x32xf32> to vector<8xf32>
    %174 = vector.shape_cast %173 : vector<8xf32> to vector<8x1xf32>
    %cst_85 = arith.constant 3.200000e+01 : f32
    %175 = vector.broadcast %cst_85 : f32 to vector<8x1xf32>
    %176 = arith.divf %174, %175 : vector<8x1xf32>
    %177 = vector.broadcast %176 : vector<8x1xf32> to vector<8x32xf32>
    %178 = arith.subf %172, %177 : vector<8x32xf32>
    %179 = arith.mulf %178, %178 : vector<8x32xf32>
    %cst_86 = arith.constant dense<0.000000e+00> : vector<8xf32>
    %180 = vector.multi_reduction <add>, %179, %cst_86 [1] : vector<8x32xf32> to vector<8xf32>
    %181 = vector.shape_cast %180 : vector<8xf32> to vector<8x1xf32>
    %cst_87 = arith.constant 3.200000e+01 : f32
    %182 = vector.broadcast %cst_87 : f32 to vector<8x1xf32>
    %183 = arith.divf %181, %182 : vector<8x1xf32>
    %184 = vector.broadcast %176 : vector<8x1xf32> to vector<8x32xf32>
    %185 = arith.subf %172, %184 : vector<8x32xf32>
    %cst_88 = arith.constant 9.99999996E-13 : f32
    %186 = vector.broadcast %cst_88 : f32 to vector<8x1xf32>
    %187 = arith.addf %183, %186 : vector<8x1xf32>
    %188 = math.rsqrt %187 : vector<8x1xf32>
    %189 = vector.broadcast %188 : vector<8x1xf32> to vector<8x32xf32>
    %190 = arith.mulf %185, %189 : vector<8x32xf32>
    %191 = vector.broadcast %9 : vector<1x32xf32> to vector<8x32xf32>
    %192 = arith.mulf %190, %191 : vector<8x32xf32>
    %193 = vector.broadcast %10 : vector<1x32xf32> to vector<8x32xf32>
    %194 = arith.addf %192, %193 : vector<8x32xf32>
    %195 = arith.truncf %194 : vector<8x32xf32> to vector<8x32xbf16>
    %cst_89 = arith.constant dense<0.000000e+00> : vector<8x64xf32>
    %196 = tpu.matmul %195, %11, %cst_89 {dimension_numbers = #tpu.dot_dimension_numbers<[1], [0], [0], [1], [0, 0, 1, 1], [], []>} : vector<8x32xbf16>, vector<32x64xbf16>, vector<8x64xf32> -> vector<8x64xf32>
    %197 = vector.broadcast %12 : vector<1x64xf32> to vector<8x64xf32>
    %198 = arith.addf %196, %197 : vector<8x64xf32>
    %cst_90 = arith.constant 5.000000e-01 : f32
    %199 = vector.broadcast %cst_90 : f32 to vector<8x64xf32>
    %200 = arith.mulf %199, %198 : vector<8x64xf32>
    %cst_91 = arith.constant 0.707106769 : f32
    %201 = vector.broadcast %cst_91 : f32 to vector<8x64xf32>
    %202 = arith.mulf %198, %201 : vector<8x64xf32>
    %203 = math.erf %202 : vector<8x64xf32>
    %cst_92 = arith.constant 1.000000e+00 : f32
    %204 = vector.broadcast %cst_92 : f32 to vector<8x64xf32>
    %205 = arith.addf %204, %203 : vector<8x64xf32>
    %206 = arith.mulf %200, %205 : vector<8x64xf32>
    %207 = arith.truncf %206 : vector<8x64xf32> to vector<8x64xbf16>
    %cst_93 = arith.constant dense<0.000000e+00> : vector<8x32xf32>
    %208 = tpu.matmul %207, %13, %cst_93 {dimension_numbers = #tpu.dot_dimension_numbers<[1], [0], [0], [1], [0, 0, 1, 1], [], []>} : vector<8x64xbf16>, vector<64x32xbf16>, vector<8x32xf32> -> vector<8x32xf32>
    %209 = vector.broadcast %14 : vector<1x32xf32> to vector<8x32xf32>
    %210 = arith.addf %208, %209 : vector<8x32xf32>
    %211 = arith.addf %210, %194 : vector<8x32xf32>
    %cst_94 = arith.constant dense<0.000000e+00> : vector<8xf32>
    %212 = vector.multi_reduction <add>, %211, %cst_94 [1] : vector<8x32xf32> to vector<8xf32>
    %213 = vector.shape_cast %212 : vector<8xf32> to vector<8x1xf32>
    %cst_95 = arith.constant 3.200000e+01 : f32
    %214 = vector.broadcast %cst_95 : f32 to vector<8x1xf32>
    %215 = arith.divf %213, %214 : vector<8x1xf32>
    %216 = vector.broadcast %215 : vector<8x1xf32> to vector<8x32xf32>
    %217 = arith.subf %211, %216 : vector<8x32xf32>
    %218 = arith.mulf %217, %217 : vector<8x32xf32>
    %cst_96 = arith.constant dense<0.000000e+00> : vector<8xf32>
    %219 = vector.multi_reduction <add>, %218, %cst_96 [1] : vector<8x32xf32> to vector<8xf32>
    %220 = vector.shape_cast %219 : vector<8xf32> to vector<8x1xf32>
    %cst_97 = arith.constant 3.200000e+01 : f32
    %221 = vector.broadcast %cst_97 : f32 to vector<8x1xf32>
    %222 = arith.divf %220, %221 : vector<8x1xf32>
    %223 = vector.broadcast %215 : vector<8x1xf32> to vector<8x32xf32>
    %224 = arith.subf %211, %223 : vector<8x32xf32>
    %cst_98 = arith.constant 9.99999996E-13 : f32
    %225 = vector.broadcast %cst_98 : f32 to vector<8x1xf32>
    %226 = arith.addf %222, %225 : vector<8x1xf32>
    %227 = math.rsqrt %226 : vector<8x1xf32>
    %228 = vector.broadcast %227 : vector<8x1xf32> to vector<8x32xf32>
    %229 = arith.mulf %224, %228 : vector<8x32xf32>
    %230 = vector.broadcast %15 : vector<1x32xf32> to vector<8x32xf32>
    %231 = arith.mulf %229, %230 : vector<8x32xf32>
    %232 = vector.broadcast %16 : vector<1x32xf32> to vector<8x32xf32>
    %233 = arith.addf %231, %232 : vector<8x32xf32>
    %c0_99 = arith.constant 0 : index
    %c0_100 = arith.constant 0 : index
    %c0_101 = arith.constant 0 : index
    %234 = vector.load %arg20[%c0_99, %c0_100, %c0_101] : memref<1x8x32xf32, #tpu.memory_space<vmem>>, vector<1x8x32xf32>
    %235 = vector.shape_cast %234 : vector<1x8x32xf32> to vector<8x32xf32>
    %236 = vector.shape_cast %233 : vector<8x32xf32> to vector<1x8x32xf32>
    tpu.vector_store %arg20[%c0_99, %c0_100, %c0_101], %236 {strides = array<i32>} : memref<1x8x32xf32, #tpu.memory_space<vmem>>, vector<1x8x32xf32>,
    return
  }
  func.func @transform_0(%arg0: i32) -> (i32, i32, i32) {
    %c0_i32 = arith.constant 0 : i32
    %c0_i32_0 = arith.constant 0 : i32
    %c0_i32_1 = arith.constant 0 : i32
    return %arg0, %c0_i32, %c0_i32_0 : i32, i32, i32
  }
  func.func @transform_1(%arg0: i32) -> (i32, i32, i32) {
    %c0_i32 = arith.constant 0 : i32
    %c0_i32_0 = arith.constant 0 : i32
    %c0_i32_1 = arith.constant 0 : i32
    return %arg0, %c0_i32, %c0_i32_0 : i32, i32, i32
  }
  func.func @transform_2(%arg0: i32) -> (i32, i32) {
    %c0_i32 = arith.constant 0 : i32
    %c0_i32_0 = arith.constant 0 : i32
    %c0_i32_1 = arith.constant 0 : i32
    return %c0_i32, %c0_i32_0 : i32, i32
  }
  func.func @transform_3(%arg0: i32) -> (i32, i32) {
    %c0_i32 = arith.constant 0 : i32
    %c0_i32_0 = arith.constant 0 : i32
    %c0_i32_1 = arith.constant 0 : i32
    return %c0_i32, %c0_i32_0 : i32, i32
  }
  func.func @transform_4(%arg0: i32) -> (i32, i32) {
    %c0_i32 = arith.constant 0 : i32
    %c0_i32_0 = arith.constant 0 : i32
    %c0_i32_1 = arith.constant 0 : i32
    return %c0_i32, %c0_i32_0 : i32, i32
  }
  func.func @transform_5(%arg0: i32) -> (i32, i32) {
    %c0_i32 = arith.constant 0 : i32
    %c0_i32_0 = arith.constant 0 : i32
    %c0_i32_1 = arith.constant 0 : i32
    return %c0_i32, %c0_i32_0 : i32, i32
  }
  func.func @transform_6(%arg0: i32) -> (i32, i32) {
    %c0_i32 = arith.constant 0 : i32
    %c0_i32_0 = arith.constant 0 : i32
    %c0_i32_1 = arith.constant 0 : i32
    return %c0_i32, %c0_i32_0 : i32, i32
  }
  func.func @transform_7(%arg0: i32) -> (i32, i32) {
    %c0_i32 = arith.constant 0 : i32
    %c0_i32_0 = arith.constant 0 : i32
    %c0_i32_1 = arith.constant 0 : i32
    return %c0_i32, %c0_i32_0 : i32, i32
  }
  func.func @transform_8(%arg0: i32) -> (i32, i32) {
    %c0_i32 = arith.constant 0 : i32
    %c0_i32_0 = arith.constant 0 : i32
    %c0_i32_1 = arith.constant 0 : i32
    return %c0_i32, %c0_i32_0 : i32, i32
  }
  func.func @transform_9(%arg0: i32) -> (i32, i32) {
    %c0_i32 = arith.constant 0 : i32
    %c0_i32_0 = arith.constant 0 : i32
    %c0_i32_1 = arith.constant 0 : i32
    return %c0_i32, %c0_i32_0 : i32, i32
  }
  func.func @transform_10(%arg0: i32) -> (i32, i32) {
    %c0_i32 = arith.constant 0 : i32
    %c0_i32_0 = arith.constant 0 : i32
    %c0_i32_1 = arith.constant 0 : i32
    return %c0_i32, %c0_i32_0 : i32, i32
  }
  func.func @transform_11(%arg0: i32) -> (i32, i32) {
    %c0_i32 = arith.constant 0 : i32
    %c0_i32_0 = arith.constant 0 : i32
    %c0_i32_1 = arith.constant 0 : i32
    return %c0_i32, %c0_i32_0 : i32, i32
  }
  func.func @transform_12(%arg0: i32) -> (i32, i32) {
    %c0_i32 = arith.constant 0 : i32
    %c0_i32_0 = arith.constant 0 : i32
    %c0_i32_1 = arith.constant 0 : i32
    return %c0_i32, %c0_i32_0 : i32, i32
  }
  func.func @transform_13(%arg0: i32) -> (i32, i32) {
    %c0_i32 = arith.constant 0 : i32
    %c0_i32_0 = arith.constant 0 : i32
    %c0_i32_1 = arith.constant 0 : i32
    return %c0_i32, %c0_i32_0 : i32, i32
  }
  func.func @transform_14(%arg0: i32) -> (i32, i32) {
    %c0_i32 = arith.constant 0 : i32
    %c0_i32_0 = arith.constant 0 : i32
    %c0_i32_1 = arith.constant 0 : i32
    return %c0_i32, %c0_i32_0 : i32, i32
  }
  func.func @transform_15(%arg0: i32) -> (i32, i32) {
    %c0_i32 = arith.constant 0 : i32
    %c0_i32_0 = arith.constant 0 : i32
    %c0_i32_1 = arith.constant 0 : i32
    return %c0_i32, %c0_i32_0 : i32, i32
  }
  func.func @transform_16(%arg0: i32) -> (i32, i32) {
    %c0_i32 = arith.constant 0 : i32
    %c0_i32_0 = arith.constant 0 : i32
    %c0_i32_1 = arith.constant 0 : i32
    return %c0_i32, %c0_i32_0 : i32, i32
  }
  func.func @transform_17(%arg0: i32) -> (i32, i32) {
    %c0_i32 = arith.constant 0 : i32
    %c0_i32_0 = arith.constant 0 : i32
    %c0_i32_1 = arith.constant 0 : i32
    return %c0_i32, %c0_i32_0 : i32, i32
  }
  func.func @transform_18(%arg0: i32) -> (i32, i32) {
    %c0_i32 = arith.constant 0 : i32
    %c0_i32_0 = arith.constant 0 : i32
    %c0_i32_1 = arith.constant 0 : i32
    return %c0_i32, %c0_i32_0 : i32, i32
  }
  func.func @transform_19(%arg0: i32) -> (i32, i32, i32) {
    %c0_i32 = arith.constant 0 : i32
    %c0_i32_0 = arith.constant 0 : i32
    %c0_i32_1 = arith.constant 0 : i32
    return %arg0, %c0_i32, %c0_i32_0 : i32, i32, i32
  }
}

module attributes {stable_mosaic.version = 11 : i64} {
  func.func @_convbert_layer_kernel(%arg0: i32, %arg1: memref<1x8x32xf32, #tpu.memory_space<vmem>>, %arg2: memref<1x1x8xf32, #tpu.memory_space<vmem>>, %arg3: memref<32x64xbf16, #tpu.memory_space<vmem>>, %arg4: memref<1x64xf32, #tpu.memory_space<vmem>>, %arg5: memref<3x32xf32, #tpu.memory_space<vmem>>, %arg6: memref<32x16xbf16, #tpu.memory_space<vmem>>, %arg7: memref<1x16xf32, #tpu.memory_space<vmem>>, %arg8: memref<16x6xbf16, #tpu.memory_space<vmem>>, %arg9: memref<1x6xf32, #tpu.memory_space<vmem>>, %arg10: memref<32x32xbf16, #tpu.memory_space<vmem>>, %arg11: memref<1x32xf32, #tpu.memory_space<vmem>>, %arg12: memref<1x32xf32, #tpu.memory_space<vmem>>, %arg13: memref<1x32xf32, #tpu.memory_space<vmem>>, %arg14: memref<32x64xbf16, #tpu.memory_space<vmem>>, %arg15: memref<1x64xf32, #tpu.memory_space<vmem>>, %arg16: memref<64x32xbf16, #tpu.memory_space<vmem>>, %arg17: memref<1x32xf32, #tpu.memory_space<vmem>>, %arg18: memref<1x32xf32, #tpu.memory_space<vmem>>, %arg19: memref<1x32xf32, #tpu.memory_space<vmem>>, %arg20: memref<1x8x32xf32, #tpu.memory_space<vmem>>, %arg21: memref<10x32xf32, #tpu.memory_space<vmem>>, %arg22: memref<10x16xf32, #tpu.memory_space<vmem>>) attributes {dimension_semantics = [#tpu.dimension_semantics<parallel>], iteration_bounds = array<i64: 2>, scalar_prefetch = 0 : i64, scratch_operands = 2 : i64, tpu.core_type = #tpu.core_type<tc>, window_params = [{transform_indices = @transform_0, window_bounds = array<i64: 1, 8, 32>}, {transform_indices = @transform_1, window_bounds = array<i64: 1, 1, 8>}, {pipeline_mode = #tpu.pipeline_mode<synchronous>, transform_indices = @transform_2, window_bounds = array<i64: 32, 64>}, {pipeline_mode = #tpu.pipeline_mode<synchronous>, transform_indices = @transform_3, window_bounds = array<i64: 1, 64>}, {pipeline_mode = #tpu.pipeline_mode<synchronous>, transform_indices = @transform_4, window_bounds = array<i64: 3, 32>}, {pipeline_mode = #tpu.pipeline_mode<synchronous>, transform_indices = @transform_5, window_bounds = array<i64: 32, 16>}, {pipeline_mode = #tpu.pipeline_mode<synchronous>, transform_indices = @transform_6, window_bounds = array<i64: 1, 16>}, {pipeline_mode = #tpu.pipeline_mode<synchronous>, transform_indices = @transform_7, window_bounds = array<i64: 16, 6>}, {pipeline_mode = #tpu.pipeline_mode<synchronous>, transform_indices = @transform_8, window_bounds = array<i64: 1, 6>}, {pipeline_mode = #tpu.pipeline_mode<synchronous>, transform_indices = @transform_9, window_bounds = array<i64: 32, 32>}, {pipeline_mode = #tpu.pipeline_mode<synchronous>, transform_indices = @transform_10, window_bounds = array<i64: 1, 32>}, {pipeline_mode = #tpu.pipeline_mode<synchronous>, transform_indices = @transform_11, window_bounds = array<i64: 1, 32>}, {pipeline_mode = #tpu.pipeline_mode<synchronous>, transform_indices = @transform_12, window_bounds = array<i64: 1, 32>}, {pipeline_mode = #tpu.pipeline_mode<synchronous>, transform_indices = @transform_13, window_bounds = array<i64: 32, 64>}, {pipeline_mode = #tpu.pipeline_mode<synchronous>, transform_indices = @transform_14, window_bounds = array<i64: 1, 64>}, {pipeline_mode = #tpu.pipeline_mode<synchronous>, transform_indices = @transform_15, window_bounds = array<i64: 64, 32>}, {pipeline_mode = #tpu.pipeline_mode<synchronous>, transform_indices = @transform_16, window_bounds = array<i64: 1, 32>}, {pipeline_mode = #tpu.pipeline_mode<synchronous>, transform_indices = @transform_17, window_bounds = array<i64: 1, 32>}, {pipeline_mode = #tpu.pipeline_mode<synchronous>, transform_indices = @transform_18, window_bounds = array<i64: 1, 32>}, {transform_indices = @transform_19, window_bounds = array<i64: 1, 8, 32>}]} {
    %c0 = arith.constant 0 : index
    %c0_0 = arith.constant 0 : index
    %0 = vector.load %arg3[%c0, %c0_0] : memref<32x64xbf16, #tpu.memory_space<vmem>>, vector<32x64xbf16>
    %c0_1 = arith.constant 0 : index
    %c0_2 = arith.constant 0 : index
    %1 = vector.load %arg4[%c0_1, %c0_2] : memref<1x64xf32, #tpu.memory_space<vmem>>, vector<1x64xf32>
    %c0_3 = arith.constant 0 : index
    %c0_4 = arith.constant 0 : index
    %2 = vector.load %arg5[%c0_3, %c0_4] : memref<3x32xf32, #tpu.memory_space<vmem>>, vector<3x32xf32>
    %c0_5 = arith.constant 0 : index
    %c0_6 = arith.constant 0 : index
    %3 = vector.load %arg6[%c0_5, %c0_6] : memref<32x16xbf16, #tpu.memory_space<vmem>>, vector<32x16xbf16>
    %c0_7 = arith.constant 0 : index
    %c0_8 = arith.constant 0 : index
    %4 = vector.load %arg7[%c0_7, %c0_8] : memref<1x16xf32, #tpu.memory_space<vmem>>, vector<1x16xf32>
    %c0_9 = arith.constant 0 : index
    %c0_10 = arith.constant 0 : index
    %5 = vector.load %arg8[%c0_9, %c0_10] : memref<16x6xbf16, #tpu.memory_space<vmem>>, vector<16x6xbf16>
    %c0_11 = arith.constant 0 : index
    %c0_12 = arith.constant 0 : index
    %6 = vector.load %arg9[%c0_11, %c0_12] : memref<1x6xf32, #tpu.memory_space<vmem>>, vector<1x6xf32>
    %c0_13 = arith.constant 0 : index
    %c0_14 = arith.constant 0 : index
    %7 = vector.load %arg10[%c0_13, %c0_14] : memref<32x32xbf16, #tpu.memory_space<vmem>>, vector<32x32xbf16>
    %c0_15 = arith.constant 0 : index
    %c0_16 = arith.constant 0 : index
    %8 = vector.load %arg11[%c0_15, %c0_16] : memref<1x32xf32, #tpu.memory_space<vmem>>, vector<1x32xf32>
    %c0_17 = arith.constant 0 : index
    %c0_18 = arith.constant 0 : index
    %9 = vector.load %arg12[%c0_17, %c0_18] : memref<1x32xf32, #tpu.memory_space<vmem>>, vector<1x32xf32>
    %c0_19 = arith.constant 0 : index
    %c0_20 = arith.constant 0 : index
    %10 = vector.load %arg13[%c0_19, %c0_20] : memref<1x32xf32, #tpu.memory_space<vmem>>, vector<1x32xf32>
    %c0_21 = arith.constant 0 : index
    %c0_22 = arith.constant 0 : index
    %11 = vector.load %arg14[%c0_21, %c0_22] : memref<32x64xbf16, #tpu.memory_space<vmem>>, vector<32x64xbf16>
    %c0_23 = arith.constant 0 : index
    %c0_24 = arith.constant 0 : index
    %12 = vector.load %arg15[%c0_23, %c0_24] : memref<1x64xf32, #tpu.memory_space<vmem>>, vector<1x64xf32>
    %c0_25 = arith.constant 0 : index
    %c0_26 = arith.constant 0 : index
    %13 = vector.load %arg16[%c0_25, %c0_26] : memref<64x32xbf16, #tpu.memory_space<vmem>>, vector<64x32xbf16>
    %c0_27 = arith.constant 0 : index
    %c0_28 = arith.constant 0 : index
    %14 = vector.load %arg17[%c0_27, %c0_28] : memref<1x32xf32, #tpu.memory_space<vmem>>, vector<1x32xf32>
    %c0_29 = arith.constant 0 : index
    %c0_30 = arith.constant 0 : index
    %15 = vector.load %arg18[%c0_29, %c0_30] : memref<1x32xf32, #tpu.memory_space<vmem>>, vector<1x32xf32>
    %c0_31 = arith.constant 0 : index
    %c0_32 = arith.constant 0 : index
    %16 = vector.load %arg19[%c0_31, %c0_32] : memref<1x32xf32, #tpu.memory_space<vmem>>, vector<1x32xf32>
    %c0_33 = arith.constant 0 : index
    %c0_34 = arith.constant 0 : index
    %c0_35 = arith.constant 0 : index
    %17 = vector.load %arg1[%c0_33, %c0_34, %c0_35] : memref<1x8x32xf32, #tpu.memory_space<vmem>>, vector<1x8x32xf32>
    %18 = vector.shape_cast %17 : vector<1x8x32xf32> to vector<8x32xf32>
    %c0_36 = arith.constant 0 : index
    %c0_37 = arith.constant 0 : index
    %c0_38 = arith.constant 0 : index
    %19 = vector.load %arg2[%c0_36, %c0_37, %c0_38] : memref<1x1x8xf32, #tpu.memory_space<vmem>>, vector<1x1x8xf32>
    %20 = vector.shape_cast %19 : vector<1x1x8xf32> to vector<1x8xf32>
    %21 = arith.truncf %18 : vector<8x32xf32> to vector<8x32xbf16>
    %cst = arith.constant dense<0.000000e+00> : vector<8x64xf32>
    %22 = tpu.matmul %21, %0, %cst {dimension_numbers = #tpu.dot_dimension_numbers<[1], [0], [0], [1], [0, 0, 1, 1], [], []>} : vector<8x32xbf16>, vector<32x64xbf16>, vector<8x64xf32> -> vector<8x64xf32>
    %23 = vector.broadcast %1 : vector<1x64xf32> to vector<8x64xf32>
    %24 = arith.addf %22, %23 : vector<8x64xf32>
    %25 = vector.extract_strided_slice %24 {offsets = [0, 0], sizes = [8, 16], strides = [1, 1]} : vector<8x64xf32> to vector<8x16xf32>
    %26 = vector.extract_strided_slice %24 {offsets = [0, 16], sizes = [8, 16], strides = [1, 1]} : vector<8x64xf32> to vector<8x16xf32>
    %27 = vector.extract_strided_slice %24 {offsets = [0, 32], sizes = [8, 16], strides = [1, 1]} : vector<8x64xf32> to vector<8x16xf32>
    %28 = vector.extract_strided_slice %24 {offsets = [0, 48], sizes = [8, 16], strides = [1, 1]} : vector<8x64xf32> to vector<8x16xf32>
    %cst_39 = arith.constant 0.000000e+00 : f32
    %29 = vector.broadcast %cst_39 : f32 to vector<1x32xf32>
    %c0_40 = arith.constant 0 : index
    %c0_41 = arith.constant 0 : index
    %30 = vector.load %arg21[%c0_40, %c0_41] : memref<10x32xf32, #tpu.memory_space<vmem>>, vector<1x32xf32>
    tpu.vector_store %arg21[%c0_40, %c0_41], %29 {strides = array<i32>} : memref<10x32xf32, #tpu.memory_space<vmem>>, vector<1x32xf32>,
    %cst_42 = arith.constant 0.000000e+00 : f32
    %31 = vector.broadcast %cst_42 : f32 to vector<1x32xf32>
    %c9 = arith.constant 9 : index
    %c0_43 = arith.constant 0 : index
    %32 = vector.load %arg21[%c9, %c0_43] : memref<10x32xf32, #tpu.memory_space<vmem>>, vector<1x32xf32>
    tpu.vector_store %arg21[%c9, %c0_43], %31 {strides = array<i32>} : memref<10x32xf32, #tpu.memory_space<vmem>>, vector<1x32xf32>,
    %c1 = arith.constant 1 : index
    %c0_44 = arith.constant 0 : index
    %33 = vector.load %arg21[%c1, %c0_44] : memref<10x32xf32, #tpu.memory_space<vmem>>, vector<8x32xf32>
    tpu.vector_store %arg21[%c1, %c0_44], %18 {strides = array<i32>} : memref<10x32xf32, #tpu.memory_space<vmem>>, vector<8x32xf32>,
    %cst_45 = arith.constant 0.000000e+00 : f32
    %34 = vector.broadcast %cst_45 : f32 to vector<8x32xf32>
    %c0_46 = arith.constant 0 : index
    %c0_47 = arith.constant 0 : index
    %35 = vector.load %arg21[%c0_46, %c0_47] : memref<10x32xf32, #tpu.memory_space<vmem>>, vector<8x32xf32>
    %36 = vector.extract_strided_slice %2 {offsets = [0, 0], sizes = [1, 32], strides = [1, 1]} : vector<3x32xf32> to vector<1x32xf32>
    %37 = vector.broadcast %36 : vector<1x32xf32> to vector<8x32xf32>
    %38 = arith.mulf %35, %37 : vector<8x32xf32>
    %39 = arith.addf %34, %38 : vector<8x32xf32>
    %c1_48 = arith.constant 1 : index
    %c0_49 = arith.constant 0 : index
    %40 = vector.load %arg21[%c1_48, %c0_49] : memref<10x32xf32, #tpu.memory_space<vmem>>, vector<8x32xf32>
    %41 = vector.extract_strided_slice %2 {offsets = [1, 0], sizes = [1, 32], strides = [1, 1]} : vector<3x32xf32> to vector<1x32xf32>
    %42 = vector.broadcast %41 : vector<1x32xf32> to vector<8x32xf32>
    %43 = arith.mulf %40, %42 : vector<8x32xf32>
    %44 = arith.addf %39, %43 : vector<8x32xf32>
    %c2 = arith.constant 2 : index
    %c0_50 = arith.constant 0 : index
    %45 = vector.load %arg21[%c2, %c0_50] : memref<10x32xf32, #tpu.memory_space<vmem>>, vector<8x32xf32>
    %46 = vector.extract_strided_slice %2 {offsets = [2, 0], sizes = [1, 32], strides = [1, 1]} : vector<3x32xf32> to vector<1x32xf32>
    %47 = vector.broadcast %46 : vector<1x32xf32> to vector<8x32xf32>
    %48 = arith.mulf %45, %47 : vector<8x32xf32>
    %49 = arith.addf %44, %48 : vector<8x32xf32>
    %50 = arith.truncf %49 : vector<8x32xf32> to vector<8x32xbf16>
    %cst_51 = arith.constant dense<0.000000e+00> : vector<8x16xf32>
    %51 = tpu.matmul %50, %3, %cst_51 {dimension_numbers = #tpu.dot_dimension_numbers<[1], [0], [0], [1], [0, 0, 1, 1], [], []>} : vector<8x32xbf16>, vector<32x16xbf16>, vector<8x16xf32> -> vector<8x16xf32>
    %52 = vector.broadcast %4 : vector<1x16xf32> to vector<8x16xf32>
    %53 = arith.addf %51, %52 : vector<8x16xf32>
    %54 = arith.mulf %53, %25 : vector<8x16xf32>
    %55 = arith.truncf %54 : vector<8x16xf32> to vector<8x16xbf16>
    %cst_52 = arith.constant dense<0.000000e+00> : vector<8x6xf32>
    %56 = tpu.matmul %55, %5, %cst_52 {dimension_numbers = #tpu.dot_dimension_numbers<[1], [0], [0], [1], [0, 0, 1, 1], [], []>} : vector<8x16xbf16>, vector<16x6xbf16>, vector<8x6xf32> -> vector<8x6xf32>
    %57 = vector.broadcast %6 : vector<1x6xf32> to vector<8x6xf32>
    %58 = arith.addf %56, %57 : vector<8x6xf32>
    %59 = vector.extract_strided_slice %58 {offsets = [0, 0], sizes = [8, 3], strides = [1, 1]} : vector<8x6xf32> to vector<8x3xf32>
    %cst_53 = arith.constant dense<0xFF800000> : vector<8xf32>
    %60 = vector.multi_reduction <maximumf>, %59, %cst_53 [1] : vector<8x3xf32> to vector<8xf32>
    %61 = vector.shape_cast %60 : vector<8xf32> to vector<8x1xf32>
    %62 = vector.broadcast %61 : vector<8x1xf32> to vector<8x3xf32>
    %63 = arith.subf %59, %62 : vector<8x3xf32>
    %64 = math.exp %63 : vector<8x3xf32>
    %cst_54 = arith.constant dense<0.000000e+00> : vector<8xf32>
    %65 = vector.multi_reduction <add>, %64, %cst_54 [1] : vector<8x3xf32> to vector<8xf32>
    %66 = vector.shape_cast %65 : vector<8xf32> to vector<8x1xf32>
    %67 = tpu.reciprocal %66 {approx = true} : vector<8x1xf32> -> vector<8x1xf32>
    %68 = vector.broadcast %67 : vector<8x1xf32> to vector<8x3xf32>
    %69 = arith.mulf %64, %68 : vector<8x3xf32>
    %70 = vector.extract_strided_slice %58 {offsets = [0, 3], sizes = [8, 3], strides = [1, 1]} : vector<8x6xf32> to vector<8x3xf32>
    %cst_55 = arith.constant dense<0xFF800000> : vector<8xf32>
    %71 = vector.multi_reduction <maximumf>, %70, %cst_55 [1] : vector<8x3xf32> to vector<8xf32>
    %72 = vector.shape_cast %71 : vector<8xf32> to vector<8x1xf32>
    %73 = vector.broadcast %72 : vector<8x1xf32> to vector<8x3xf32>
    %74 = arith.subf %70, %73 : vector<8x3xf32>
    %75 = math.exp %74 : vector<8x3xf32>
    %cst_56 = arith.constant dense<0.000000e+00> : vector<8xf32>
    %76 = vector.multi_reduction <add>, %75, %cst_56 [1] : vector<8x3xf32> to vector<8xf32>
    %77 = vector.shape_cast %76 : vector<8xf32> to vector<8x1xf32>
    %78 = tpu.reciprocal %77 {approx = true} : vector<8x1xf32> -> vector<8x1xf32>
    %79 = vector.broadcast %78 : vector<8x1xf32> to vector<8x3xf32>
    %80 = arith.mulf %75, %79 : vector<8x3xf32>
    %cst_57 = arith.constant 0.000000e+00 : f32
    %81 = vector.broadcast %cst_57 : f32 to vector<1x16xf32>
    %c0_58 = arith.constant 0 : index
    %c0_59 = arith.constant 0 : index
    %82 = vector.load %arg22[%c0_58, %c0_59] : memref<10x16xf32, #tpu.memory_space<vmem>>, vector<1x16xf32>
    tpu.vector_store %arg22[%c0_58, %c0_59], %81 {strides = array<i32>} : memref<10x16xf32, #tpu.memory_space<vmem>>, vector<1x16xf32>,
    %cst_60 = arith.constant 0.000000e+00 : f32
    %83 = vector.broadcast %cst_60 : f32 to vector<1x16xf32>
    %c9_61 = arith.constant 9 : index
    %c0_62 = arith.constant 0 : index
    %84 = vector.load %arg22[%c9_61, %c0_62] : memref<10x16xf32, #tpu.memory_space<vmem>>, vector<1x16xf32>
    tpu.vector_store %arg22[%c9_61, %c0_62], %83 {strides = array<i32>} : memref<10x16xf32, #tpu.memory_space<vmem>>, vector<1x16xf32>,
    %c1_63 = arith.constant 1 : index
    %c0_64 = arith.constant 0 : index
    %85 = vector.load %arg22[%c1_63, %c0_64] : memref<10x16xf32, #tpu.memory_space<vmem>>, vector<8x16xf32>
    tpu.vector_store %arg22[%c1_63, %c0_64], %28 {strides = array<i32>} : memref<10x16xf32, #tpu.memory_space<vmem>>, vector<8x16xf32>,
    %cst_65 = arith.constant 0.000000e+00 : f32
    %86 = vector.broadcast %cst_65 : f32 to vector<8x8xf32>
    %cst_66 = arith.constant 0.000000e+00 : f32
    %87 = vector.broadcast %cst_66 : f32 to vector<8x8xf32>
    %c0_67 = arith.constant 0 : index
    %c0_68 = arith.constant 0 : index
    %88 = vector.load %arg22[%c0_67, %c0_68] : memref<10x16xf32, #tpu.memory_space<vmem>>, vector<8x16xf32>
    %89 = vector.extract_strided_slice %88 {offsets = [0, 0], sizes = [8, 8], strides = [1, 1]} : vector<8x16xf32> to vector<8x8xf32>
    %90 = vector.extract_strided_slice %69 {offsets = [0, 0], sizes = [8, 1], strides = [1, 1]} : vector<8x3xf32> to vector<8x1xf32>
    %91 = vector.broadcast %90 : vector<8x1xf32> to vector<8x8xf32>
    %92 = arith.mulf %89, %91 : vector<8x8xf32>
    %93 = arith.addf %86, %92 : vector<8x8xf32>
    %94 = vector.extract_strided_slice %88 {offsets = [0, 8], sizes = [8, 8], strides = [1, 1]} : vector<8x16xf32> to vector<8x8xf32>
    %95 = vector.extract_strided_slice %80 {offsets = [0, 0], sizes = [8, 1], strides = [1, 1]} : vector<8x3xf32> to vector<8x1xf32>
    %96 = vector.broadcast %95 : vector<8x1xf32> to vector<8x8xf32>
    %97 = arith.mulf %94, %96 : vector<8x8xf32>
    %98 = arith.addf %87, %97 : vector<8x8xf32>
    %c1_69 = arith.constant 1 : index
    %c0_70 = arith.constant 0 : index
    %99 = vector.load %arg22[%c1_69, %c0_70] : memref<10x16xf32, #tpu.memory_space<vmem>>, vector<8x16xf32>
    %100 = vector.extract_strided_slice %99 {offsets = [0, 0], sizes = [8, 8], strides = [1, 1]} : vector<8x16xf32> to vector<8x8xf32>
    %101 = vector.extract_strided_slice %69 {offsets = [0, 1], sizes = [8, 1], strides = [1, 1]} : vector<8x3xf32> to vector<8x1xf32>
    %102 = vector.broadcast %101 : vector<8x1xf32> to vector<8x8xf32>
    %103 = arith.mulf %100, %102 : vector<8x8xf32>
    %104 = arith.addf %93, %103 : vector<8x8xf32>
    %105 = vector.extract_strided_slice %99 {offsets = [0, 8], sizes = [8, 8], strides = [1, 1]} : vector<8x16xf32> to vector<8x8xf32>
    %106 = vector.extract_strided_slice %80 {offsets = [0, 1], sizes = [8, 1], strides = [1, 1]} : vector<8x3xf32> to vector<8x1xf32>
    %107 = vector.broadcast %106 : vector<8x1xf32> to vector<8x8xf32>
    %108 = arith.mulf %105, %107 : vector<8x8xf32>
    %109 = arith.addf %98, %108 : vector<8x8xf32>
    %c2_71 = arith.constant 2 : index
    %c0_72 = arith.constant 0 : index
    %110 = vector.load %arg22[%c2_71, %c0_72] : memref<10x16xf32, #tpu.memory_space<vmem>>, vector<8x16xf32>
    %111 = vector.extract_strided_slice %110 {offsets = [0, 0], sizes = [8, 8], strides = [1, 1]} : vector<8x16xf32> to vector<8x8xf32>
    %112 = vector.extract_strided_slice %69 {offsets = [0, 2], sizes = [8, 1], strides = [1, 1]} : vector<8x3xf32> to vector<8x1xf32>
    %113 = vector.broadcast %112 : vector<8x1xf32> to vector<8x8xf32>
    %114 = arith.mulf %111, %113 : vector<8x8xf32>
    %115 = arith.addf %104, %114 : vector<8x8xf32>
    %116 = vector.extract_strided_slice %110 {offsets = [0, 8], sizes = [8, 8], strides = [1, 1]} : vector<8x16xf32> to vector<8x8xf32>
    %117 = vector.extract_strided_slice %80 {offsets = [0, 2], sizes = [8, 1], strides = [1, 1]} : vector<8x3xf32> to vector<8x1xf32>
    %118 = vector.broadcast %117 : vector<8x1xf32> to vector<8x8xf32>
    %119 = arith.mulf %116, %118 : vector<8x8xf32>
    %120 = arith.addf %109, %119 : vector<8x8xf32>
    %121 = vector.extract_strided_slice %25 {offsets = [0, 0], sizes = [8, 8], strides = [1, 1]} : vector<8x16xf32> to vector<8x8xf32>
    %122 = arith.truncf %121 : vector<8x8xf32> to vector<8x8xbf16>
    %123 = vector.extract_strided_slice %26 {offsets = [0, 0], sizes = [8, 8], strides = [1, 1]} : vector<8x16xf32> to vector<8x8xf32>
    %124 = arith.truncf %123 : vector<8x8xf32> to vector<8x8xbf16>
    %125 = vector.extract_strided_slice %27 {offsets = [0, 0], sizes = [8, 8], strides = [1, 1]} : vector<8x16xf32> to vector<8x8xf32>
    %cst_73 = arith.constant dense<0.000000e+00> : vector<8x8xf32>
    %126 = tpu.matmul %122, %124, %cst_73 {dimension_numbers = #tpu.dot_dimension_numbers<[1], [1], [0], [0], [0, 0, 1, 0], [], []>} : vector<8x8xbf16>, vector<8x8xbf16>, vector<8x8xf32> -> vector<8x8xf32>
    %cst_74 = arith.constant 0.353553385 : f32
    %127 = vector.broadcast %cst_74 : f32 to vector<8x8xf32>
    %128 = arith.mulf %126, %127 : vector<8x8xf32>
    %129 = vector.broadcast %20 : vector<1x8xf32> to vector<8x8xf32>
    %130 = arith.addf %128, %129 : vector<8x8xf32>
    %cst_75 = arith.constant dense<0xFF800000> : vector<8xf32>
    %131 = vector.multi_reduction <maximumf>, %130, %cst_75 [1] : vector<8x8xf32> to vector<8xf32>
    %132 = vector.shape_cast %131 : vector<8xf32> to vector<8x1xf32>
    %133 = vector.broadcast %132 : vector<8x1xf32> to vector<8x8xf32>
    %134 = arith.subf %130, %133 : vector<8x8xf32>
    %135 = math.exp %134 : vector<8x8xf32>
    %cst_76 = arith.constant dense<0.000000e+00> : vector<8xf32>
    %136 = vector.multi_reduction <add>, %135, %cst_76 [1] : vector<8x8xf32> to vector<8xf32>
    %137 = vector.shape_cast %136 : vector<8xf32> to vector<8x1xf32>
    %138 = tpu.reciprocal %137 {approx = true} : vector<8x1xf32> -> vector<8x1xf32>
    %139 = vector.broadcast %138 : vector<8x1xf32> to vector<8x8xf32>
    %140 = arith.mulf %135, %139 : vector<8x8xf32>
    %141 = arith.truncf %140 : vector<8x8xf32> to vector<8x8xbf16>
    %142 = arith.truncf %125 : vector<8x8xf32> to vector<8x8xbf16>
    %cst_77 = arith.constant dense<0.000000e+00> : vector<8x8xf32>
    %143 = tpu.matmul %141, %142, %cst_77 {dimension_numbers = #tpu.dot_dimension_numbers<[1], [0], [0], [1], [0, 0, 1, 1], [], []>} : vector<8x8xbf16>, vector<8x8xbf16>, vector<8x8xf32> -> vector<8x8xf32>
    %144 = vector.extract_strided_slice %25 {offsets = [0, 8], sizes = [8, 8], strides = [1, 1]} : vector<8x16xf32> to vector<8x8xf32>
    %145 = arith.truncf %144 : vector<8x8xf32> to vector<8x8xbf16>
    %146 = vector.extract_strided_slice %26 {offsets = [0, 8], sizes = [8, 8], strides = [1, 1]} : vector<8x16xf32> to vector<8x8xf32>
    %147 = arith.truncf %146 : vector<8x8xf32> to vector<8x8xbf16>
    %148 = vector.extract_strided_slice %27 {offsets = [0, 8], sizes = [8, 8], strides = [1, 1]} : vector<8x16xf32> to vector<8x8xf32>
    %cst_78 = arith.constant dense<0.000000e+00> : vector<8x8xf32>
    %149 = tpu.matmul %145, %147, %cst_78 {dimension_numbers = #tpu.dot_dimension_numbers<[1], [1], [0], [0], [0, 0, 1, 0], [], []>} : vector<8x8xbf16>, vector<8x8xbf16>, vector<8x8xf32> -> vector<8x8xf32>
    %cst_79 = arith.constant 0.353553385 : f32
    %150 = vector.broadcast %cst_79 : f32 to vector<8x8xf32>
    %151 = arith.mulf %149, %150 : vector<8x8xf32>
    %152 = vector.broadcast %20 : vector<1x8xf32> to vector<8x8xf32>
    %153 = arith.addf %151, %152 : vector<8x8xf32>
    %cst_80 = arith.constant dense<0xFF800000> : vector<8xf32>
    %154 = vector.multi_reduction <maximumf>, %153, %cst_80 [1] : vector<8x8xf32> to vector<8xf32>
    %155 = vector.shape_cast %154 : vector<8xf32> to vector<8x1xf32>
    %156 = vector.broadcast %155 : vector<8x1xf32> to vector<8x8xf32>
    %157 = arith.subf %153, %156 : vector<8x8xf32>
    %158 = math.exp %157 : vector<8x8xf32>
    %cst_81 = arith.constant dense<0.000000e+00> : vector<8xf32>
    %159 = vector.multi_reduction <add>, %158, %cst_81 [1] : vector<8x8xf32> to vector<8xf32>
    %160 = vector.shape_cast %159 : vector<8xf32> to vector<8x1xf32>
    %161 = tpu.reciprocal %160 {approx = true} : vector<8x1xf32> -> vector<8x1xf32>
    %162 = vector.broadcast %161 : vector<8x1xf32> to vector<8x8xf32>
    %163 = arith.mulf %158, %162 : vector<8x8xf32>
    %164 = arith.truncf %163 : vector<8x8xf32> to vector<8x8xbf16>
    %165 = arith.truncf %148 : vector<8x8xf32> to vector<8x8xbf16>
    %cst_82 = arith.constant dense<0.000000e+00> : vector<8x8xf32>
    %166 = tpu.matmul %164, %165, %cst_82 {dimension_numbers = #tpu.dot_dimension_numbers<[1], [0], [0], [1], [0, 0, 1, 1], [], []>} : vector<8x8xbf16>, vector<8x8xbf16>, vector<8x8xf32> -> vector<8x8xf32>
    %167 = tpu.concatenate %143, %166, %115, %120 in 1 : vector<8x8xf32>, vector<8x8xf32>, vector<8x8xf32>, vector<8x8xf32> -> vector<8x32xf32>
    %168 = arith.truncf %167 : vector<8x32xf32> to vector<8x32xbf16>
    %cst_83 = arith.constant dense<0.000000e+00> : vector<8x32xf32>
    %169 = tpu.matmul %168, %7, %cst_83 {dimension_numbers = #tpu.dot_dimension_numbers<[1], [0], [0], [1], [0, 0, 1, 1], [], []>} : vector<8x32xbf16>, vector<32x32xbf16>, vector<8x32xf32> -> vector<8x32xf32>
    %170 = vector.broadcast %8 : vector<1x32xf32> to vector<8x32xf32>
    %171 = arith.addf %169, %170 : vector<8x32xf32>
    %172 = arith.addf %171, %18 : vector<8x32xf32>
    %cst_84 = arith.constant dense<0.000000e+00> : vector<8xf32>
    %173 = vector.multi_reduction <add>, %172, %cst_84 [1] : vector<8x32xf32> to vector<8xf32>
    %174 = vector.shape_cast %173 : vector<8xf32> to vector<8x1xf32>
    %cst_85 = arith.constant 3.200000e+01 : f32
    %175 = vector.broadcast %cst_85 : f32 to vector<8x1xf32>
    %176 = arith.divf %174, %175 : vector<8x1xf32>
    %177 = vector.broadcast %176 : vector<8x1xf32> to vector<8x32xf32>
    %178 = arith.subf %172, %177 : vector<8x32xf32>
    %179 = arith.mulf %178, %178 : vector<8x32xf32>
    %cst_86 = arith.constant dense<0.000000e+00> : vector<8xf32>
    %180 = vector.multi_reduction <add>, %179, %cst_86 [1] : vector<8x32xf32> to vector<8xf32>
    %181 = vector.shape_cast %180 : vector<8xf32> to vector<8x1xf32>
    %cst_87 = arith.constant 3.200000e+01 : f32
    %182 = vector.broadcast %cst_87 : f32 to vector<8x1xf32>
    %183 = arith.divf %181, %182 : vector<8x1xf32>
    %184 = vector.broadcast %176 : vector<8x1xf32> to vector<8x32xf32>
    %185 = arith.subf %172, %184 : vector<8x32xf32>
    %cst_88 = arith.constant 9.99999996E-13 : f32
    %186 = vector.broadcast %cst_88 : f32 to vector<8x1xf32>
    %187 = arith.addf %183, %186 : vector<8x1xf32>
    %188 = math.rsqrt %187 : vector<8x1xf32>
    %189 = vector.broadcast %188 : vector<8x1xf32> to vector<8x32xf32>
    %190 = arith.mulf %185, %189 : vector<8x32xf32>
    %191 = vector.broadcast %9 : vector<1x32xf32> to vector<8x32xf32>
    %192 = arith.mulf %190, %191 : vector<8x32xf32>
    %193 = vector.broadcast %10 : vector<1x32xf32> to vector<8x32xf32>
    %194 = arith.addf %192, %193 : vector<8x32xf32>
    %195 = arith.truncf %194 : vector<8x32xf32> to vector<8x32xbf16>
    %cst_89 = arith.constant dense<0.000000e+00> : vector<8x64xf32>
    %196 = tpu.matmul %195, %11, %cst_89 {dimension_numbers = #tpu.dot_dimension_numbers<[1], [0], [0], [1], [0, 0, 1, 1], [], []>} : vector<8x32xbf16>, vector<32x64xbf16>, vector<8x64xf32> -> vector<8x64xf32>
    %197 = vector.broadcast %12 : vector<1x64xf32> to vector<8x64xf32>
    %198 = arith.addf %196, %197 : vector<8x64xf32>
    %cst_90 = arith.constant 5.000000e-01 : f32
    %199 = vector.broadcast %cst_90 : f32 to vector<8x64xf32>
    %200 = arith.mulf %199, %198 : vector<8x64xf32>
    %cst_91 = arith.constant 0.707106769 : f32
    %201 = vector.broadcast %cst_91 : f32 to vector<8x64xf32>
    %202 = arith.mulf %198, %201 : vector<8x64xf32>
    %203 = math.erf %202 : vector<8x64xf32>
    %cst_92 = arith.constant 1.000000e+00 : f32
    %204 = vector.broadcast %cst_92 : f32 to vector<8x64xf32>
    %205 = arith.addf %204, %203 : vector<8x64xf32>
    %206 = arith.mulf %200, %205 : vector<8x64xf32>
    %207 = arith.truncf %206 : vector<8x64xf32> to vector<8x64xbf16>
    %cst_93 = arith.constant dense<0.000000e+00> : vector<8x32xf32>
    %208 = tpu.matmul %207, %13, %cst_93 {dimension_numbers = #tpu.dot_dimension_numbers<[1], [0], [0], [1], [0, 0, 1, 1], [], []>} : vector<8x64xbf16>, vector<64x32xbf16>, vector<8x32xf32> -> vector<8x32xf32>
    %209 = vector.broadcast %14 : vector<1x32xf32> to vector<8x32xf32>
    %210 = arith.addf %208, %209 : vector<8x32xf32>
    %211 = arith.addf %210, %194 : vector<8x32xf32>
    %cst_94 = arith.constant dense<0.000000e+00> : vector<8xf32>
    %212 = vector.multi_reduction <add>, %211, %cst_94 [1] : vector<8x32xf32> to vector<8xf32>
    %213 = vector.shape_cast %212 : vector<8xf32> to vector<8x1xf32>
    %cst_95 = arith.constant 3.200000e+01 : f32
    %214 = vector.broadcast %cst_95 : f32 to vector<8x1xf32>
    %215 = arith.divf %213, %214 : vector<8x1xf32>
    %216 = vector.broadcast %215 : vector<8x1xf32> to vector<8x32xf32>
    %217 = arith.subf %211, %216 : vector<8x32xf32>
    %218 = arith.mulf %217, %217 : vector<8x32xf32>
    %cst_96 = arith.constant dense<0.000000e+00> : vector<8xf32>
    %219 = vector.multi_reduction <add>, %218, %cst_96 [1] : vector<8x32xf32> to vector<8xf32>
    %220 = vector.shape_cast %219 : vector<8xf32> to vector<8x1xf32>
    %cst_97 = arith.constant 3.200000e+01 : f32
    %221 = vector.broadcast %cst_97 : f32 to vector<8x1xf32>
    %222 = arith.divf %220, %221 : vector<8x1xf32>
    %223 = vector.broadcast %215 : vector<8x1xf32> to vector<8x32xf32>
    %224 = arith.subf %211, %223 : vector<8x32xf32>
    %cst_98 = arith.constant 9.99999996E-13 : f32
    %225 = vector.broadcast %cst_98 : f32 to vector<8x1xf32>
    %226 = arith.addf %222, %225 : vector<8x1xf32>
    %227 = math.rsqrt %226 : vector<8x1xf32>
    %228 = vector.broadcast %227 : vector<8x1xf32> to vector<8x32xf32>
    %229 = arith.mulf %224, %228 : vector<8x32xf32>
    %230 = vector.broadcast %15 : vector<1x32xf32> to vector<8x32xf32>
    %231 = arith.mulf %229, %230 : vector<8x32xf32>
    %232 = vector.broadcast %16 : vector<1x32xf32> to vector<8x32xf32>
    %233 = arith.addf %231, %232 : vector<8x32xf32>
    %c0_99 = arith.constant 0 : index
    %c0_100 = arith.constant 0 : index
    %c0_101 = arith.constant 0 : index
    %234 = vector.load %arg20[%c0_99, %c0_100, %c0_101] : memref<1x8x32xf32, #tpu.memory_space<vmem>>, vector<1x8x32xf32>
    %235 = vector.shape_cast %234 : vector<1x8x32xf32> to vector<8x32xf32>
    %236 = vector.shape_cast %233 : vector<8x32xf32> to vector<1x8x32xf32>
    tpu.vector_store %arg20[%c0_99, %c0_100, %c0_101], %236 {strides = array<i32>} : memref<1x8x32xf32, #tpu.memory_space<vmem>>, vector<1x8x32xf32>,
    return
  }
  func.func @transform_0(%arg0: i32) -> (i32, i32, i32) {
    %c0_i32 = arith.constant 0 : i32
    %c0_i32_0 = arith.constant 0 : i32
    %c0_i32_1 = arith.constant 0 : i32
    return %arg0, %c0_i32, %c0_i32_0 : i32, i32, i32
  }
  func.func @transform_1(%arg0: i32) -> (i32, i32, i32) {
    %c0_i32 = arith.constant 0 : i32
    %c0_i32_0 = arith.constant 0 : i32
    %c0_i32_1 = arith.constant 0 : i32
    return %arg0, %c0_i32, %c0_i32_0 : i32, i32, i32
  }
  func.func @transform_2(%arg0: i32) -> (i32, i32) {
    %c0_i32 = arith.constant 0 : i32
    %c0_i32_0 = arith.constant 0 : i32
    %c0_i32_1 = arith.constant 0 : i32
    return %c0_i32, %c0_i32_0 : i32, i32
  }
  func.func @transform_3(%arg0: i32) -> (i32, i32) {
    %c0_i32 = arith.constant 0 : i32
    %c0_i32_0 = arith.constant 0 : i32
    %c0_i32_1 = arith.constant 0 : i32
    return %c0_i32, %c0_i32_0 : i32, i32
  }
  func.func @transform_4(%arg0: i32) -> (i32, i32) {
    %c0_i32 = arith.constant 0 : i32
    %c0_i32_0 = arith.constant 0 : i32
    %c0_i32_1 = arith.constant 0 : i32
    return %c0_i32, %c0_i32_0 : i32, i32
  }
  func.func @transform_5(%arg0: i32) -> (i32, i32) {
    %c0_i32 = arith.constant 0 : i32
    %c0_i32_0 = arith.constant 0 : i32
    %c0_i32_1 = arith.constant 0 : i32
    return %c0_i32, %c0_i32_0 : i32, i32
  }
  func.func @transform_6(%arg0: i32) -> (i32, i32) {
    %c0_i32 = arith.constant 0 : i32
    %c0_i32_0 = arith.constant 0 : i32
    %c0_i32_1 = arith.constant 0 : i32
    return %c0_i32, %c0_i32_0 : i32, i32
  }
  func.func @transform_7(%arg0: i32) -> (i32, i32) {
    %c0_i32 = arith.constant 0 : i32
    %c0_i32_0 = arith.constant 0 : i32
    %c0_i32_1 = arith.constant 0 : i32
    return %c0_i32, %c0_i32_0 : i32, i32
  }
  func.func @transform_8(%arg0: i32) -> (i32, i32) {
    %c0_i32 = arith.constant 0 : i32
    %c0_i32_0 = arith.constant 0 : i32
    %c0_i32_1 = arith.constant 0 : i32
    return %c0_i32, %c0_i32_0 : i32, i32
  }
  func.func @transform_9(%arg0: i32) -> (i32, i32) {
    %c0_i32 = arith.constant 0 : i32
    %c0_i32_0 = arith.constant 0 : i32
    %c0_i32_1 = arith.constant 0 : i32
    return %c0_i32, %c0_i32_0 : i32, i32
  }
  func.func @transform_10(%arg0: i32) -> (i32, i32) {
    %c0_i32 = arith.constant 0 : i32
    %c0_i32_0 = arith.constant 0 : i32
    %c0_i32_1 = arith.constant 0 : i32
    return %c0_i32, %c0_i32_0 : i32, i32
  }
  func.func @transform_11(%arg0: i32) -> (i32, i32) {
    %c0_i32 = arith.constant 0 : i32
    %c0_i32_0 = arith.constant 0 : i32
    %c0_i32_1 = arith.constant 0 : i32
    return %c0_i32, %c0_i32_0 : i32, i32
  }
  func.func @transform_12(%arg0: i32) -> (i32, i32) {
    %c0_i32 = arith.constant 0 : i32
    %c0_i32_0 = arith.constant 0 : i32
    %c0_i32_1 = arith.constant 0 : i32
    return %c0_i32, %c0_i32_0 : i32, i32
  }
  func.func @transform_13(%arg0: i32) -> (i32, i32) {
    %c0_i32 = arith.constant 0 : i32
    %c0_i32_0 = arith.constant 0 : i32
    %c0_i32_1 = arith.constant 0 : i32
    return %c0_i32, %c0_i32_0 : i32, i32
  }
  func.func @transform_14(%arg0: i32) -> (i32, i32) {
    %c0_i32 = arith.constant 0 : i32
    %c0_i32_0 = arith.constant 0 : i32
    %c0_i32_1 = arith.constant 0 : i32
    return %c0_i32, %c0_i32_0 : i32, i32
  }
  func.func @transform_15(%arg0: i32) -> (i32, i32) {
    %c0_i32 = arith.constant 0 : i32
    %c0_i32_0 = arith.constant 0 : i32
    %c0_i32_1 = arith.constant 0 : i32
    return %c0_i32, %c0_i32_0 : i32, i32
  }
  func.func @transform_16(%arg0: i32) -> (i32, i32) {
    %c0_i32 = arith.constant 0 : i32
    %c0_i32_0 = arith.constant 0 : i32
    %c0_i32_1 = arith.constant 0 : i32
    return %c0_i32, %c0_i32_0 : i32, i32
  }
  func.func @transform_17(%arg0: i32) -> (i32, i32) {
    %c0_i32 = arith.constant 0 : i32
    %c0_i32_0 = arith.constant 0 : i32
    %c0_i32_1 = arith.constant 0 : i32
    return %c0_i32, %c0_i32_0 : i32, i32
  }
  func.func @transform_18(%arg0: i32) -> (i32, i32) {
    %c0_i32 = arith.constant 0 : i32
    %c0_i32_0 = arith.constant 0 : i32
    %c0_i32_1 = arith.constant 0 : i32
    return %c0_i32, %c0_i32_0 : i32, i32
  }
  func.func @transform_19(%arg0: i32) -> (i32, i32, i32) {
    %c0_i32 = arith.constant 0 : i32
    %c0_i32_0 = arith.constant 0 : i32
    %c0_i32_1 = arith.constant 0 : i32
    return %arg0, %c0_i32, %c0_i32_0 : i32, i32, i32
  }
}

</mosaic_0001>

<llo_original>
// kernel: _convbert_forward.3
$region0: #{_convbert_forward.3}
  #allocation0 [shape = 'u32[]', space=smem, size = 0x4, offset = 0x4, fixed_abs, tag = 'smem constant byte address 0x4 - core index']
  #allocation1 [shape = 'u32[72,128]{1,0:T(1,128)}', space=vmem, size = 0x9000, scoped, tag = 'internal scratch']
  #allocation2 [shape = 'f32[10,32]{1,0:T(8,128)}', space=vmem, size = 0x2000, scoped, tag = 'scratch operand']
  #allocation3 [shape = 'f32[10,16]{1,0:T(8,128)}', space=vmem, size = 0x2000, scoped, tag = 'scratch operand']
  %s0 = inlined_call_operand.hbm [shape: f32[2,8,32], index: 0, kind: input, shape index: {}, may-alias: {0,19}]
  %s1 = inlined_call_operand.vmem [shape: f32[2,1,8], index: 1, kind: input, shape index: {}]
  %s2 = inlined_call_operand.vmem [shape: bf16[32,64], index: 2, kind: input, shape index: {}]
  %s3 = inlined_call_operand.vmem [shape: f32[1,64], index: 3, kind: input, shape index: {}]
  %s4 = inlined_call_operand.vmem [shape: f32[3,32], index: 4, kind: input, shape index: {}]
  %s5 = inlined_call_operand.vmem [shape: bf16[32,16], index: 5, kind: input, shape index: {}]
  %s6 = inlined_call_operand.vmem [shape: f32[1,16], index: 6, kind: input, shape index: {}]
  %s7 = inlined_call_operand.vmem [shape: bf16[16,6], index: 7, kind: input, shape index: {}]
  %s8 = inlined_call_operand.vmem [shape: f32[1,6], index: 8, kind: input, shape index: {}]
  %s9 = inlined_call_operand.vmem [shape: bf16[32,32], index: 9, kind: input, shape index: {}]
  %s10 = inlined_call_operand.vmem [shape: f32[1,32], index: 10, kind: input, shape index: {}]
  %s11 = inlined_call_operand.vmem [shape: f32[1,32], index: 11, kind: input, shape index: {}]
  %s12 = inlined_call_operand.vmem [shape: f32[1,32], index: 12, kind: input, shape index: {}]
  %s13 = inlined_call_operand.vmem [shape: bf16[32,64], index: 13, kind: input, shape index: {}]
  %s14 = inlined_call_operand.vmem [shape: f32[1,64], index: 14, kind: input, shape index: {}]
  %s15 = inlined_call_operand.vmem [shape: bf16[64,32], index: 15, kind: input, shape index: {}]
  %s16 = inlined_call_operand.vmem [shape: f32[1,32], index: 16, kind: input, shape index: {}]
  %s17 = inlined_call_operand.vmem [shape: f32[1,32], index: 17, kind: input, shape index: {}]
  %s18 = inlined_call_operand.vmem [shape: f32[1,32], index: 18, kind: input, shape index: {}]
  %s19 = inlined_call_operand.hbm [shape: f32[2,8,32], index: 19, kind: output, shape index: {}, may-alias: {0,19}]
  %s20 = sld [smem:[#allocation0]]
  $region113: #{_convbert_forward.3} parent=0
    _
  %s22 = ssub.s32 1, %s20
  %s23 = scalar_select 0, %s22, %s20
  $region1: #{_convbert_forward.3} parent=0
    #allocation4 [shape = 'u8[8192]{0}', space=vmem, size = 0x2000, scoped, tag = 'input window, operand 0']
    #allocation5 [shape = 's32[2]{0}', space=sflag, size = 0x8, scoped, tag = 'scoped memory for _convbert_forward.3']
    #allocation6 [shape = 's32[2]{0}', space=sflag, size = 0x8, scoped, tag = 'scoped memory for _convbert_forward.3']
    #allocation7 [shape = 'u8[8192]{0}', space=vmem, size = 0x2000, scoped, tag = 'output window, operand 0']
    %24 = vsyncpa [#allocation5], 0
    %s25 = scalar_lea.sflag [#allocation5], 1
    %26 = vsyncpa %s25, 0
    %27 = vsyncpa [#allocation6], 0
    %s28 = scalar_lea.sflag [#allocation6], 1
    %29 = vsyncpa %s28, 0
    loop: start=0, step=1, limit=4
    $region2: #{_convbert_forward.3} parent=1 // loop_pre_header
      _
    $region3: #{_convbert_forward.3} parent=1 // loop_header
      %s31 = sphi 0, %s35
      %p32 = scmp.ge.s32.totalorder %s31, 4
      %s41 = sphi 0, %s43
      %s44 = sphi 0, %s41
      %s45 = sphi 0, %s44
      %s61 = sphi 0, %s45
      %s67 = sphi 0, %s69
      %s70 = sphi 0, %s67
      %s71 = sphi 0, %s70
      %s87 = sphi 0, %s71
      %s91 = sphi 0, %s91
      %s93 = sphi 0, %s91
      %s94 = sphi 0, %s93
      %s108 = sphi 0, %s94
      %s112 = sphi 0, %s112
      %s114 = sphi 0, %s112
      %s115 = sphi 0, %s114
      %s129 = sphi 0, %s115
      %s133 = sphi 0, %s133
      %s135 = sphi 0, %s133
      %s136 = sphi 0, %s135
      %s150 = sphi 0, %s136
      %s154 = sphi 0, %s154
      %s156 = sphi 0, %s154
      %s157 = sphi 0, %s156
      %s171 = sphi 0, %s157
      %s175 = sphi 0, %s175
      %s177 = sphi 0, %s175
      %s178 = sphi 0, %s177
      %s192 = sphi 0, %s178
      %s196 = sphi 0, %s196
      %s198 = sphi 0, %s196
      %s199 = sphi 0, %s198
      %s213 = sphi 0, %s199
      %s217 = sphi 0, %s217
      %s219 = sphi 0, %s217
      %s220 = sphi 0, %s219
      %s234 = sphi 0, %s220
      %s238 = sphi 0, %s238
      %s240 = sphi 0, %s238
      %s241 = sphi 0, %s240
      %s255 = sphi 0, %s241
      %s259 = sphi 0, %s259
      %s261 = sphi 0, %s259
      %s262 = sphi 0, %s261
      %s276 = sphi 0, %s262
      %s280 = sphi 0, %s280
      %s282 = sphi 0, %s280
      %s283 = sphi 0, %s282
      %s297 = sphi 0, %s283
      %s301 = sphi 0, %s301
      %s303 = sphi 0, %s301
      %s304 = sphi 0, %s303
      %s318 = sphi 0, %s304
      %s322 = sphi 0, %s322
      %s324 = sphi 0, %s322
      %s325 = sphi 0, %s324
      %s339 = sphi 0, %s325
      %s343 = sphi 0, %s343
      %s345 = sphi 0, %s343
      %s346 = sphi 0, %s345
      %s360 = sphi 0, %s346
      %s364 = sphi 0, %s364
      %s366 = sphi 0, %s364
      %s367 = sphi 0, %s366
      %s381 = sphi 0, %s367
      %s385 = sphi 0, %s385
      %s387 = sphi 0, %s385
      %s388 = sphi 0, %s387
      %s402 = sphi 0, %s388
      %s406 = sphi 0, %s406
      %s408 = sphi 0, %s406
      %s409 = sphi 0, %s408
      %s423 = sphi 0, %s409
      %s427 = sphi 0, %s427
      %s429 = sphi 0, %s427
      %s430 = sphi 0, %s429
      %s444 = sphi 0, %s430
      %s450 = sphi 0, %s452
      %s453 = sphi 0, %s450
      %s454 = sphi 0, %s453
      %s470 = sphi 0, %s454
    $region4: #{_convbert_forward.3} parent=1 // loop_header_branch
      %34 = sbr.rel (%p32) target = $region8
    $region5: #{_convbert_forward.3} parent=1 // loop_body
      %s36 = ssub.s32 %s31, 1
      %s37 = ssub.s32 %s31, 2
      %s38 = sadd.s32 %s31, 1
      %s39 = ssub.s32 %s31, %s38
      %p40 = scmp.eq.s32.totalorder %s39, 0
      %s42 = sadd.s32 %s41, 1
      %s43 = scalar_select %p40, %s41, %s42
      %p46 = pneg %p40
      %p47 = scmp.eq.s32.totalorder %s31, 1
      %p48 = por %p46, %p47
      %p49 = scmp.ne.s32.totalorder %s41, %s44
      %p50 = scmp.eq.s32.totalorder %s31, 0
      %p51 = por %p49, %p50
      %p52 = scmp.ne.s32.totalorder %s41, %s44
      %p53 = scmp.eq.s32.totalorder %s36, 1
      %p54 = por %p52, %p53
      %p55 = scmp.ne.s32.totalorder %s44, %s45
      %p56 = scmp.eq.s32.totalorder %s36, 0
      %p57 = por %p55, %p56
      %p58 = scmp.ne.s32.totalorder %s44, %s45
      %p59 = scmp.eq.s32.totalorder %s37, 1
      %p60 = por %p58, %p59
      %p62 = scmp.ne.s32.totalorder %s45, %s61
      %p63 = scmp.eq.s32.totalorder %s37, 0
      %p64 = por %p62, %p63
      %s65 = ssub.s32 %s31, %s38
      %p66 = scmp.eq.s32.totalorder %s65, 0
      %s68 = sadd.s32 %s67, 1
      %s69 = scalar_select %p66, %s67, %s68
      %p72 = pneg %p66
      %p73 = scmp.eq.s32.totalorder %s31, 1
      %p74 = por %p72, %p73
      %p75 = scmp.ne.s32.totalorder %s67, %s70
      %p76 = scmp.eq.s32.totalorder %s31, 0
      %p77 = por %p75, %p76
      %p78 = scmp.ne.s32.totalorder %s67, %s70
      %p79 = scmp.eq.s32.totalorder %s36, 1
      %p80 = por %p78, %p79
      %p81 = scmp.ne.s32.totalorder %s70, %s71
      %p82 = scmp.eq.s32.totalorder %s36, 0
      %p83 = por %p81, %p82
      %p84 = scmp.ne.s32.totalorder %s70, %s71
      %p85 = scmp.eq.s32.totalorder %s37, 1
      %p86 = por %p84, %p85
      %p88 = scmp.ne.s32.totalorder %s71, %s87
      %p89 = scmp.eq.s32.totalorder %s37, 0
      %p90 = por %p88, %p89
      %s92 = sadd.s32 %s91, 1
      %p95 = scmp.eq.s32.totalorder %s31, 1
      %p96 = scmp.ne.s32.totalorder %s91, %s93
      %p97 = scmp.eq.s32.totalorder %s31, 0
      %p98 = por %p96, %p97
      %p99 = scmp.ne.s32.totalorder %s91, %s93
      %p100 = scmp.eq.s32.totalorder %s36, 1
      %p101 = por %p99, %p100
      %p102 = scmp.ne.s32.totalorder %s93, %s94
      %p103 = scmp.eq.s32.totalorder %s36, 0
      %p104 = por %p102, %p103
      %p105 = scmp.ne.s32.totalorder %s93, %s94
      %p106 = scmp.eq.s32.totalorder %s37, 1
      %p107 = por %p105, %p106
      %p109 = scmp.ne.s32.totalorder %s94, %s108
      %p110 = scmp.eq.s32.totalorder %s37, 0
      %p111 = por %p109, %p110
      %s113 = sadd.s32 %s112, 1
      %p116 = scmp.eq.s32.totalorder %s31, 1
      %p117 = scmp.ne.s32.totalorder %s112, %s114
      %p118 = scmp.eq.s32.totalorder %s31, 0
      %p119 = por %p117, %p118
      %p120 = scmp.ne.s32.totalorder %s112, %s114
      %p121 = scmp.eq.s32.totalorder %s36, 1
      %p122 = por %p120, %p121
      %p123 = scmp.ne.s32.totalorder %s114, %s115
      %p124 = scmp.eq.s32.totalorder %s36, 0
      %p125 = por %p123, %p124
      %p126 = scmp.ne.s32.totalorder %s114, %s115
      %p127 = scmp.eq.s32.totalorder %s37, 1
      %p128 = por %p126, %p127
      %p130 = scmp.ne.s32.totalorder %s115, %s129
      %p131 = scmp.eq.s32.totalorder %s37, 0
      %p132 = por %p130, %p131
      %s134 = sadd.s32 %s133, 1
      %p137 = scmp.eq.s32.totalorder %s31, 1
      %p138 = scmp.ne.s32.totalorder %s133, %s135
      %p139 = scmp.eq.s32.totalorder %s31, 0
      %p140 = por %p138, %p139
      %p141 = scmp.ne.s32.totalorder %s133, %s135
      %p142 = scmp.eq.s32.totalorder %s36, 1
      %p143 = por %p141, %p142
      %p144 = scmp.ne.s32.totalorder %s135, %s136
      %p145 = scmp.eq.s32.totalorder %s36, 0
      %p146 = por %p144, %p145
      %p147 = scmp.ne.s32.totalorder %s135, %s136
      %p148 = scmp.eq.s32.totalorder %s37, 1
      %p149 = por %p147, %p148
      %p151 = scmp.ne.s32.totalorder %s136, %s150
      %p152 = scmp.eq.s32.totalorder %s37, 0
      %p153 = por %p151, %p152
      %s155 = sadd.s32 %s154, 1
      %p158 = scmp.eq.s32.totalorder %s31, 1
      %p159 = scmp.ne.s32.totalorder %s154, %s156
      %p160 = scmp.eq.s32.totalorder %s31, 0
      %p161 = por %p159, %p160
      %p162 = scmp.ne.s32.totalorder %s154, %s156
      %p163 = scmp.eq.s32.totalorder %s36, 1
      %p164 = por %p162, %p163
      %p165 = scmp.ne.s32.totalorder %s156, %s157
      %p166 = scmp.eq.s32.totalorder %s36, 0
      %p167 = por %p165, %p166
      %p168 = scmp.ne.s32.totalorder %s156, %s157
      %p169 = scmp.eq.s32.totalorder %s37, 1
      %p170 = por %p168, %p169
      %p172 = scmp.ne.s32.totalorder %s157, %s171
      %p173 = scmp.eq.s32.totalorder %s37, 0
      %p174 = por %p172, %p173
      %s176 = sadd.s32 %s175, 1
      %p179 = scmp.eq.s32.totalorder %s31, 1
      %p180 = scmp.ne.s32.totalorder %s175, %s177
      %p181 = scmp.eq.s32.totalorder %s31, 0
      %p182 = por %p180, %p181
      %p183 = scmp.ne.s32.totalorder %s175, %s177
      %p184 = scmp.eq.s32.totalorder %s36, 1
      %p185 = por %p183, %p184
      %p186 = scmp.ne.s32.totalorder %s177, %s178
      %p187 = scmp.eq.s32.totalorder %s36, 0
      %p188 = por %p186, %p187
      %p189 = scmp.ne.s32.totalorder %s177, %s178
      %p190 = scmp.eq.s32.totalorder %s37, 1
      %p191 = por %p189, %p190
      %p193 = scmp.ne.s32.totalorder %s178, %s192
      %p194 = scmp.eq.s32.totalorder %s37, 0
      %p195 = por %p193, %p194
      %s197 = sadd.s32 %s196, 1
      %p200 = scmp.eq.s32.totalorder %s31, 1
      %p201 = scmp.ne.s32.totalorder %s196, %s198
      %p202 = scmp.eq.s32.totalorder %s31, 0
      %p203 = por %p201, %p202
      %p204 = scmp.ne.s32.totalorder %s196, %s198
      %p205 = scmp.eq.s32.totalorder %s36, 1
      %p206 = por %p204, %p205
      %p207 = scmp.ne.s32.totalorder %s198, %s199
      %p208 = scmp.eq.s32.totalorder %s36, 0
      %p209 = por %p207, %p208
      %p210 = scmp.ne.s32.totalorder %s198, %s199
      %p211 = scmp.eq.s32.totalorder %s37, 1
      %p212 = por %p210, %p211
      %p214 = scmp.ne.s32.totalorder %s199, %s213
      %p215 = scmp.eq.s32.totalorder %s37, 0
      %p216 = por %p214, %p215
      %s218 = sadd.s32 %s217, 1
      %p221 = scmp.eq.s32.totalorder %s31, 1
      %p222 = scmp.ne.s32.totalorder %s217, %s219
      %p223 = scmp.eq.s32.totalorder %s31, 0
      %p224 = por %p222, %p223
      %p225 = scmp.ne.s32.totalorder %s217, %s219
      %p226 = scmp.eq.s32.totalorder %s36, 1
      %p227 = por %p225, %p226
      %p228 = scmp.ne.s32.totalorder %s219, %s220
      %p229 = scmp.eq.s32.totalorder %s36, 0
      %p230 = por %p228, %p229
      %p231 = scmp.ne.s32.totalorder %s219, %s220
      %p232 = scmp.eq.s32.totalorder %s37, 1
      %p233 = por %p231, %p232
      %p235 = scmp.ne.s32.totalorder %s220, %s234
      %p236 = scmp.eq.s32.totalorder %s37, 0
      %p237 = por %p235, %p236
      %s239 = sadd.s32 %s238, 1
      %p242 = scmp.eq.s32.totalorder %s31, 1
      %p243 = scmp.ne.s32.totalorder %s238, %s240
      %p244 = scmp.eq.s32.totalorder %s31, 0
      %p245 = por %p243, %p244
      %p246 = scmp.ne.s32.totalorder %s238, %s240
      %p247 = scmp.eq.s32.totalorder %s36, 1
      %p248 = por %p246, %p247
      %p249 = scmp.ne.s32.totalorder %s240, %s241
      %p250 = scmp.eq.s32.totalorder %s36, 0
      %p251 = por %p249, %p250
      %p252 = scmp.ne.s32.totalorder %s240, %s241
      %p253 = scmp.eq.s32.totalorder %s37, 1
      %p254 = por %p252, %p253
      %p256 = scmp.ne.s32.totalorder %s241, %s255
      %p257 = scmp.eq.s32.totalorder %s37, 0
      %p258 = por %p256, %p257
      %s260 = sadd.s32 %s259, 1
      %p263 = scmp.eq.s32.totalorder %s31, 1
      %p264 = scmp.ne.s32.totalorder %s259, %s261
      %p265 = scmp.eq.s32.totalorder %s31, 0
      %p266 = por %p264, %p265
      %p267 = scmp.ne.s32.totalorder %s259, %s261
      %p268 = scmp.eq.s32.totalorder %s36, 1
      %p269 = por %p267, %p268
      %p270 = scmp.ne.s32.totalorder %s261, %s262
      %p271 = scmp.eq.s32.totalorder %s36, 0
      %p272 = por %p270, %p271
      %p273 = scmp.ne.s32.totalorder %s261, %s262
      %p274 = scmp.eq.s32.totalorder %s37, 1
      %p275 = por %p273, %p274
      %p277 = scmp.ne.s32.totalorder %s262, %s276
      %p278 = scmp.eq.s32.totalorder %s37, 0
      %p279 = por %p277, %p278
      %s281 = sadd.s32 %s280, 1
      %p284 = scmp.eq.s32.totalorder %s31, 1
      %p285 = scmp.ne.s32.totalorder %s280, %s282
      %p286 = scmp.eq.s32.totalorder %s31, 0
      %p287 = por %p285, %p286
      %p288 = scmp.ne.s32.totalorder %s280, %s282
      %p289 = scmp.eq.s32.totalorder %s36, 1
      %p290 = por %p288, %p289
      %p291 = scmp.ne.s32.totalorder %s282, %s283
      %p292 = scmp.eq.s32.totalorder %s36, 0
      %p293 = por %p291, %p292
      %p294 = scmp.ne.s32.totalorder %s282, %s283
      %p295 = scmp.eq.s32.totalorder %s37, 1
      %p296 = por %p294, %p295
      %p298 = scmp.ne.s32.totalorder %s283, %s297
      %p299 = scmp.eq.s32.totalorder %s37, 0
      %p300 = por %p298, %p299
      %s302 = sadd.s32 %s301, 1
      %p305 = scmp.eq.s32.totalorder %s31, 1
      %p306 = scmp.ne.s32.totalorder %s301, %s303
      %p307 = scmp.eq.s32.totalorder %s31, 0
      %p308 = por %p306, %p307
      %p309 = scmp.ne.s32.totalorder %s301, %s303
      %p310 = scmp.eq.s32.totalorder %s36, 1
      %p311 = por %p309, %p310
      %p312 = scmp.ne.s32.totalorder %s303, %s304
      %p313 = scmp.eq.s32.totalorder %s36, 0
      %p314 = por %p312, %p313
      %p315 = scmp.ne.s32.totalorder %s303, %s304
      %p316 = scmp.eq.s32.totalorder %s37, 1
      %p317 = por %p315, %p316
      %p319 = scmp.ne.s32.totalorder %s304, %s318
      %p320 = scmp.eq.s32.totalorder %s37, 0
      %p321 = por %p319, %p320
      %s323 = sadd.s32 %s322, 1
      %p326 = scmp.eq.s32.totalorder %s31, 1
      %p327 = scmp.ne.s32.totalorder %s322, %s324
      %p328 = scmp.eq.s32.totalorder %s31, 0
      %p329 = por %p327, %p328
      %p330 = scmp.ne.s32.totalorder %s322, %s324
      %p331 = scmp.eq.s32.totalorder %s36, 1
      %p332 = por %p330, %p331
      %p333 = scmp.ne.s32.totalorder %s324, %s325
      %p334 = scmp.eq.s32.totalorder %s36, 0
      %p335 = por %p333, %p334
      %p336 = scmp.ne.s32.totalorder %s324, %s325
      %p337 = scmp.eq.s32.totalorder %s37, 1
      %p338 = por %p336, %p337
      %p340 = scmp.ne.s32.totalorder %s325, %s339
      %p341 = scmp.eq.s32.totalorder %s37, 0
      %p342 = por %p340, %p341
      %s344 = sadd.s32 %s343, 1
      %p347 = scmp.eq.s32.totalorder %s31, 1
      %p348 = scmp.ne.s32.totalorder %s343, %s345
      %p349 = scmp.eq.s32.totalorder %s31, 0
      %p350 = por %p348, %p349
      %p351 = scmp.ne.s32.totalorder %s343, %s345
      %p352 = scmp.eq.s32.totalorder %s36, 1
      %p353 = por %p351, %p352
      %p354 = scmp.ne.s32.totalorder %s345, %s346
      %p355 = scmp.eq.s32.totalorder %s36, 0
      %p356 = por %p354, %p355
      %p357 = scmp.ne.s32.totalorder %s345, %s346
      %p358 = scmp.eq.s32.totalorder %s37, 1
      %p359 = por %p357, %p358
      %p361 = scmp.ne.s32.totalorder %s346, %s360
      %p362 = scmp.eq.s32.totalorder %s37, 0
      %p363 = por %p361, %p362
      %s365 = sadd.s32 %s364, 1
      %p368 = scmp.eq.s32.totalorder %s31, 1
      %p369 = scmp.ne.s32.totalorder %s364, %s366
      %p370 = scmp.eq.s32.totalorder %s31, 0
      %p371 = por %p369, %p370
      %p372 = scmp.ne.s32.totalorder %s364, %s366
      %p373 = scmp.eq.s32.totalorder %s36, 1
      %p374 = por %p372, %p373
      %p375 = scmp.ne.s32.totalorder %s366, %s367
      %p376 = scmp.eq.s32.totalorder %s36, 0
      %p377 = por %p375, %p376
      %p378 = scmp.ne.s32.totalorder %s366, %s367
      %p379 = scmp.eq.s32.totalorder %s37, 1
      %p380 = por %p378, %p379
      %p382 = scmp.ne.s32.totalorder %s367, %s381
      %p383 = scmp.eq.s32.totalorder %s37, 0
      %p384 = por %p382, %p383
      %s386 = sadd.s32 %s385, 1
      %p389 = scmp.eq.s32.totalorder %s31, 1
      %p390 = scmp.ne.s32.totalorder %s385, %s387
      %p391 = scmp.eq.s32.totalorder %s31, 0
      %p392 = por %p390, %p391
      %p393 = scmp.ne.s32.totalorder %s385, %s387
      %p394 = scmp.eq.s32.totalorder %s36, 1
      %p395 = por %p393, %p394
      %p396 = scmp.ne.s32.totalorder %s387, %s388
      %p397 = scmp.eq.s32.totalorder %s36, 0
      %p398 = por %p396, %p397
      %p399 = scmp.ne.s32.totalorder %s387, %s388
      %p400 = scmp.eq.s32.totalorder %s37, 1
      %p401 = por %p399, %p400
      %p403 = scmp.ne.s32.totalorder %s388, %s402
      %p404 = scmp.eq.s32.totalorder %s37, 0
      %p405 = por %p403, %p404
      %s407 = sadd.s32 %s406, 1
      %p410 = scmp.eq.s32.totalorder %s31, 1
      %p411 = scmp.ne.s32.totalorder %s406, %s408
      %p412 = scmp.eq.s32.totalorder %s31, 0
      %p413 = por %p411, %p412
      %p414 = scmp.ne.s32.totalorder %s406, %s408
      %p415 = scmp.eq.s32.totalorder %s36, 1
      %p416 = por %p414, %p415
      %p417 = scmp.ne.s32.totalorder %s408, %s409
      %p418 = scmp.eq.s32.totalorder %s36, 0
      %p419 = por %p417, %p418
      %p420 = scmp.ne.s32.totalorder %s408, %s409
      %p421 = scmp.eq.s32.totalorder %s37, 1
      %p422 = por %p420, %p421
      %p424 = scmp.ne.s32.totalorder %s409, %s423
      %p425 = scmp.eq.s32.totalorder %s37, 0
      %p426 = por %p424, %p425
      %s428 = sadd.s32 %s427, 1
      %p431 = scmp.eq.s32.totalorder %s31, 1
      %p432 = scmp.ne.s32.totalorder %s427, %s429
      %p433 = scmp.eq.s32.totalorder %s31, 0
      %p434 = por %p432, %p433
      %p435 = scmp.ne.s32.totalorder %s427, %s429
      %p436 = scmp.eq.s32.totalorder %s36, 1
      %p437 = por %p435, %p436
      %p438 = scmp.ne.s32.totalorder %s429, %s430
      %p439 = scmp.eq.s32.totalorder %s36, 0
      %p440 = por %p438, %p439
      %p441 = scmp.ne.s32.totalorder %s429, %s430
      %p442 = scmp.eq.s32.totalorder %s37, 1
      %p443 = por %p441, %p442
      %p445 = scmp.ne.s32.totalorder %s430, %s444
      %p446 = scmp.eq.s32.totalorder %s37, 0
      %p447 = por %p445, %p446
      %s448 = ssub.s32 %s31, %s38
      %p449 = scmp.eq.s32.totalorder %s448, 0
      %s451 = sadd.s32 %s450, 1
      %s452 = scalar_select %p449, %s450, %s451
      %p455 = pneg %p449
      %p456 = scmp.eq.s32.totalorder %s31, 1
      %p457 = por %p455, %p456
      %p458 = scmp.ne.s32.totalorder %s450, %s453
      %p459 = scmp.eq.s32.totalorder %s31, 0
      %p460 = por %p458, %p459
      %p461 = scmp.ne.s32.totalorder %s450, %s453
      %p462 = scmp.eq.s32.totalorder %s36, 1
      %p463 = por %p461, %p462
      %p464 = scmp.ne.s32.totalorder %s453, %s454
      %p465 = scmp.eq.s32.totalorder %s36, 0
      %p466 = por %p464, %p465
      %p467 = scmp.ne.s32.totalorder %s453, %s454
      %p468 = scmp.eq.s32.totalorder %s37, 1
      %p469 = por %p467, %p468
      %p471 = scmp.ne.s32.totalorder %s454, %s470
      %p472 = scmp.eq.s32.totalorder %s37, 0
      %p473 = por %p471, %p472
      %p474 = scmp.le.s32.totalorder 1, %s31
      %p475 = scmp.lt.s32.totalorder %s31, 3
      %p476 = pnand %p474, %p475
      %p477 = pneg %p476
      // Predicated region
      $region9: #{_convbert_forward.3} parent=5 // pred_check
        _
      $region10: #{_convbert_forward.3} parent=5 // pred_check_branch
        %479 = sbr.rel (%p476) target = $region12
      $region11: #{_convbert_forward.3} parent=5 // pred_region
        %s480 = ssub.s32 %s31, 1
        // Predicated region
        $region13: #{_convbert_forward.3} parent=11 // pred_check
          %p481 = pneg %p104
        $region14: #{_convbert_forward.3} parent=11 // pred_check_branch
          %483 = sbr.rel (%p481) target = $region16
        $region15: #{_convbert_forward.3} parent=11 // pred_region
          _
        $region16: #{_convbert_forward.3} parent=11 // pred_fallthru
          _
        // Predicated region
        $region17: #{_convbert_forward.3} parent=11 // pred_check
          %p484 = pneg %p125
        $region18: #{_convbert_forward.3} parent=11 // pred_check_branch
          %486 = sbr.rel (%p484) target = $region20
        $region19: #{_convbert_forward.3} parent=11 // pred_region
          _
        $region20: #{_convbert_forward.3} parent=11 // pred_fallthru
          _
        // Predicated region
        $region21: #{_convbert_forward.3} parent=11 // pred_check
          %p487 = pneg %p146
        $region22: #{_convbert_forward.3} parent=11 // pred_check_branch
          %489 = sbr.rel (%p487) target = $region24
        $region23: #{_convbert_forward.3} parent=11 // pred_region
          _
        $region24: #{_convbert_forward.3} parent=11 // pred_fallthru
          _
        // Predicated region
        $region25: #{_convbert_forward.3} parent=11 // pred_check
          %p490 = pneg %p167
        $region26: #{_convbert_forward.3} parent=11 // pred_check_branch
          %492 = sbr.rel (%p490) target = $region28
        $region27: #{_convbert_forward.3} parent=11 // pred_region
          _
        $region28: #{_convbert_forward.3} parent=11 // pred_fallthru
          _
        // Predicated region
        $region29: #{_convbert_forward.3} parent=11 // pred_check
          %p493 = pneg %p188
        $region30: #{_convbert_forward.3} parent=11 // pred_check_branch
          %495 = sbr.rel (%p493) target = $region32
        $region31: #{_convbert_forward.3} parent=11 // pred_region
          _
        $region32: #{_convbert_forward.3} parent=11 // pred_fallthru
          _
        // Predicated region
        $region33: #{_convbert_forward.3} parent=11 // pred_check
          %p496 = pneg %p209
        $region34: #{_convbert_forward.3} parent=11 // pred_check_branch
          %498 = sbr.rel (%p496) target = $region36
        $region35: #{_convbert_forward.3} parent=11 // pred_region
          _
        $region36: #{_convbert_forward.3} parent=11 // pred_fallthru
          _
        // Predicated region
        $region37: #{_convbert_forward.3} parent=11 // pred_check
          %p499 = pneg %p230
        $region38: #{_convbert_forward.3} parent=11 // pred_check_branch
          %501 = sbr.rel (%p499) target = $region40
        $region39: #{_convbert_forward.3} parent=11 // pred_region
          _
        $region40: #{_convbert_forward.3} parent=11 // pred_fallthru
          _
        // Predicated region
        $region41: #{_convbert_forward.3} parent=11 // pred_check
          %p502 = pneg %p251
        $region42: #{_convbert_forward.3} parent=11 // pred_check_branch
          %504 = sbr.rel (%p502) target = $region44
        $region43: #{_convbert_forward.3} parent=11 // pred_region
          _
        $region44: #{_convbert_forward.3} parent=11 // pred_fallthru
          _
        // Predicated region
        $region45: #{_convbert_forward.3} parent=11 // pred_check
          %p505 = pneg %p272
        $region46: #{_convbert_forward.3} parent=11 // pred_check_branch
          %507 = sbr.rel (%p505) target = $region48
        $region47: #{_convbert_forward.3} parent=11 // pred_region
          _
        $region48: #{_convbert_forward.3} parent=11 // pred_fallthru
          _
        // Predicated region
        $region49: #{_convbert_forward.3} parent=11 // pred_check
          %p508 = pneg %p293
        $region50: #{_convbert_forward.3} parent=11 // pred_check_branch
          %510 = sbr.rel (%p508) target = $region52
        $region51: #{_convbert_forward.3} parent=11 // pred_region
          _
        $region52: #{_convbert_forward.3} parent=11 // pred_fallthru
          _
        // Predicated region
        $region53: #{_convbert_forward.3} parent=11 // pred_check
          %p511 = pneg %p314
        $region54: #{_convbert_forward.3} parent=11 // pred_check_branch
          %513 = sbr.rel (%p511) target = $region56
        $region55: #{_convbert_forward.3} parent=11 // pred_region
          _
        $region56: #{_convbert_forward.3} parent=11 // pred_fallthru
          _
        // Predicated region
        $region57: #{_convbert_forward.3} parent=11 // pred_check
          %p514 = pneg %p335
        $region58: #{_convbert_forward.3} parent=11 // pred_check_branch
          %516 = sbr.rel (%p514) target = $region60
        $region59: #{_convbert_forward.3} parent=11 // pred_region
          _
        $region60: #{_convbert_forward.3} parent=11 // pred_fallthru
          _
        // Predicated region
        $region61: #{_convbert_forward.3} parent=11 // pred_check
          %p517 = pneg %p356
        $region62: #{_convbert_forward.3} parent=11 // pred_check_branch
          %519 = sbr.rel (%p517) target = $region64
        $region63: #{_convbert_forward.3} parent=11 // pred_region
          _
        $region64: #{_convbert_forward.3} parent=11 // pred_fallthru
          _
        // Predicated region
        $region65: #{_convbert_forward.3} parent=11 // pred_check
          %p520 = pneg %p377
        $region66: #{_convbert_forward.3} parent=11 // pred_check_branch
          %522 = sbr.rel (%p520) target = $region68
        $region67: #{_convbert_forward.3} parent=11 // pred_region
          _
        $region68: #{_convbert_forward.3} parent=11 // pred_fallthru
          _
        // Predicated region
        $region69: #{_convbert_forward.3} parent=11 // pred_check
          %p523 = pneg %p398
        $region70: #{_convbert_forward.3} parent=11 // pred_check_branch
          %525 = sbr.rel (%p523) target = $region72
        $region71: #{_convbert_forward.3} parent=11 // pred_region
          _
        $region72: #{_convbert_forward.3} parent=11 // pred_fallthru
          _
        // Predicated region
        $region73: #{_convbert_forward.3} parent=11 // pred_check
          %p526 = pneg %p419
        $region74: #{_convbert_forward.3} parent=11 // pred_check_branch
          %528 = sbr.rel (%p526) target = $region76
        $region75: #{_convbert_forward.3} parent=11 // pred_region
          _
        $region76: #{_convbert_forward.3} parent=11 // pred_fallthru
          _
        // Predicated region
        $region77: #{_convbert_forward.3} parent=11 // pred_check
          %p529 = pneg %p440
        $region78: #{_convbert_forward.3} parent=11 // pred_check_branch
          %531 = sbr.rel (%p529) target = $region80
        $region79: #{_convbert_forward.3} parent=11 // pred_region
          _
        $region80: #{_convbert_forward.3} parent=11 // pred_fallthru
          _
      $region12: #{_convbert_forward.3} parent=5 // pred_fallthru
        _
      %p532 = scmp.lt.s32.totalorder %s31, 2
      // Predicated region
      $region81: #{_convbert_forward.3} parent=5 // pred_check
        %p533 = pneg %p532
      $region82: #{_convbert_forward.3} parent=5 // pred_check_branch
        %535 = sbr.rel (%p533) target = $region84
      $region83: #{_convbert_forward.3} parent=5 // pred_region
        // Predicated region
        $region85: #{_convbert_forward.3} parent=83 // pred_check
          %p536 = pneg %p51
        $region86: #{_convbert_forward.3} parent=83 // pred_check_branch
          %538 = sbr.rel (%p536) target = $region88
        $region87: #{_convbert_forward.3} parent=83 // pred_region
          %s539 = sand.u32 %s41, 1
          %s540 = scalar_lea.sflag [#allocation5], %s539
          %s541 = sand.u32 %s41, 1
          %s542 = smul.addr %s541, 8
          %s543 = scalar_lea.vmem [#allocation4], %s542
          %545 = vsyncadd %s540, 0
          %s546 = smul.addr %s31, 8
          %s547 = scalar_lea.hbm %s0, %s546
          %s549 = sshll.u32 %s547, 4
          %s550 = int_to_ptr.hbm [resolvable:$true] %s549
          %s551 = sshll.u32 %s543, 4
          %s552 = int_to_ptr.vmem [resolvable:$true] %s551
          %554 = dma.hbm_to_vmem [thread:$0]  %s550, 128, %s552, %s540
        $region88: #{_convbert_forward.3} parent=83 // pred_fallthru
          _
        // Predicated region
        $region89: #{_convbert_forward.3} parent=83 // pred_check
          %p555 = pneg %p77
        $region90: #{_convbert_forward.3} parent=83 // pred_check_branch
          %557 = sbr.rel (%p555) target = $region92
        $region91: #{_convbert_forward.3} parent=83 // pred_region
          %p558 = scmp.lt.s32.totalorder %s31, 1
          %s559 = scalar_select %p558, %s31, 1
          %s560 = scalar_lea.vmem %s1, %s559
        $region92: #{_convbert_forward.3} parent=83 // pred_fallthru
          _
      $region84: #{_convbert_forward.3} parent=5 // pred_fallthru
        _
      %p561 = scmp.le.s32.totalorder 1, %s31
      %p562 = scmp.lt.s32.totalorder %s31, 3
      %p563 = pnand %p561, %p562
      %p564 = pneg %p563
      // Predicated region
      $region93: #{_convbert_forward.3} parent=5 // pred_check
        _
      $region94: #{_convbert_forward.3} parent=5 // pred_check_branch
        %566 = sbr.rel (%p563) target = $region96
      $region95: #{_convbert_forward.3} parent=5 // pred_region
        %s567 = ssub.s32 %s31, 1
        %s568 = sand.u32 %s44, 1
        %s569 = scalar_lea.sflag [#allocation5], %s568
        %s570 = sand.u32 %s44, 1
        %s571 = smul.addr %s570, 8
        %s572 = scalar_lea.vmem [#allocation4], %s571
        // Predicated region
        $region97: #{_convbert_forward.3} parent=95 // pred_check
          %p573 = pneg %p57
        $region98: #{_convbert_forward.3} parent=95 // pred_check_branch
          %575 = sbr.rel (%p573) target = $region100
        $region99: #{_convbert_forward.3} parent=95 // pred_region
          %577 = dma.done %s569, 128
        $region100: #{_convbert_forward.3} parent=95 // pred_fallthru
          _
        %s578 = sand.u32 %s44, 1
        %s579 = scalar_lea.sflag [#allocation5], %s578
        %s580 = sand.u32 %s44, 1
        %s581 = smul.addr %s580, 8
        %s582 = scalar_lea.vmem [#allocation4], %s581
        %p583 = pneg %p57
        %p584 = pneg %p54
        %p585 = scmp.lt.s32.totalorder %s36, 1
        %s586 = scalar_select %p585, %s36, 1
        %s587 = scalar_lea.vmem %s1, %s586
        %p588 = pneg %p83
        %p589 = pneg %p80
        %p590 = pneg %p104
        %p591 = pneg %p101
        %p592 = pneg %p125
        %p593 = pneg %p122
        %p594 = pneg %p146
        %p595 = pneg %p143
        %p596 = pneg %p167
        %p597 = pneg %p164
        %p598 = pneg %p188
        %p599 = pneg %p185
        %p600 = pneg %p209
        %p601 = pneg %p206
        %p602 = pneg %p230
        %p603 = pneg %p227
        %p604 = pneg %p251
        %p605 = pneg %p248
        %p606 = pneg %p272
        %p607 = pneg %p269
        %p608 = pneg %p293
        %p609 = pneg %p290
        %p610 = pneg %p314
        %p611 = pneg %p311
        %p612 = pneg %p335
        %p613 = pneg %p332
        %p614 = pneg %p356
        %p615 = pneg %p353
        %p616 = pneg %p377
        %p617 = pneg %p374
        %p618 = pneg %p398
        %p619 = pneg %p395
        %p620 = pneg %p419
        %p621 = pneg %p416
        %p622 = pneg %p440
        %p623 = pneg %p437
        %p624 = pneg %p466
        %p625 = pneg %p463
        %s626 = sand.u32 %s453, 1
        %s627 = scalar_lea.sflag [#allocation6], %s626
        %s628 = sand.u32 %s453, 1
        %s629 = smul.addr %s628, 8
        %s630 = scalar_lea.vmem [#allocation7], %s629
        %p631 = scmp.lt.s32.totalorder %s36, 1
        %s632 = scalar_select %p631, %s36, 1
        %s633 = scalar_lea.vmem %s1, %s632
        %v635 = vld [vmem:[%s2] sm:$0xf]
        %v636 = vld [vmem:[%s2 + $0x4] sm:$0xf]
        %v637 = vld [vmem:[%s2 + $0x8] sm:$0xf]
        %v638 = vld [vmem:[%s2 + $0xc] sm:$0xf]
        %v639 = vld [vmem:[%s3] sm:$0x1]
        %v640 = vld [vmem:[%s4] sm:$0x7]
        %v641 = vld [vmem:[%s5] sm:$0xf]
        %v642 = vld [vmem:[%s5 + $0x4] sm:$0xf]
        %v643 = vld [vmem:[%s5 + $0x8] sm:$0xf]
        %v644 = vld [vmem:[%s5 + $0xc] sm:$0xf]
        %v645 = vld [vmem:[%s6] sm:$0x1]
        %v646 = vld [vmem:[%s7] sm:$0xf]
        %v647 = vld [vmem:[%s7 + $0x4] sm:$0xf]
        %v648 = vld [vmem:[%s8] sm:$0x1]
        %v649 = vld [vmem:[%s9] sm:$0xf]
        %v650 = vld [vmem:[%s9 + $0x4] sm:$0xf]
        %v651 = vld [vmem:[%s9 + $0x8] sm:$0xf]
        %v652 = vld [vmem:[%s9 + $0xc] sm:$0xf]
        %v653 = vld [vmem:[%s10] sm:$0x1]
        %v654 = vld [vmem:[%s11] sm:$0x1]
        %v655 = vld [vmem:[%s12] sm:$0x1]
        %v656 = vld [vmem:[%s13] sm:$0xf]
        %v657 = vld [vmem:[%s13 + $0x4] sm:$0xf]
        %v658 = vld [vmem:[%s13 + $0x8] sm:$0xf]
        %v659 = vld [vmem:[%s13 + $0xc] sm:$0xf]
        %v660 = vld [vmem:[%s14] sm:$0x1]
        %v661 = vld [vmem:[%s15] sm:$0xf]
        %v662 = vld [vmem:[%s15 + $0x4] sm:$0xf]
        %v663 = vld [vmem:[%s15 + $0x8] sm:$0xf]
        %v664 = vld [vmem:[%s15 + $0xc] sm:$0xf]
        %v665 = vld [vmem:[%s15 + $0x10] sm:$0xf]
        %v666 = vld [vmem:[%s15 + $0x14] sm:$0xf]
        %v667 = vld [vmem:[%s15 + $0x18] sm:$0xf]
        %v668 = vld [vmem:[%s15 + $0x1c] sm:$0xf]
        %v669 = vld [vmem:[%s16] sm:$0x1]
        %v670 = vld [vmem:[%s17] sm:$0x1]
        %v671 = vld [vmem:[%s18] sm:$0x1]
        %v672 = vld [vmem:[%s572] sm:$0xff]
        %v673 = vld [vmem:[%s633] sm:$0x1]
        %v674 = vpack.c.bf16 %v672, %v672
        %v676 = vperm.slane %v639, 0
        %v682 = vunpack.c.l.b16 %v635
        %v683 = vunpack.c.l.b16 %v636
        %v684 = vunpack.c.l.b16 %v637
        %v685 = vunpack.c.l.b16 %v638
        %v686 = vpack.c.b16 %v683, %v682
        %v687 = vpack.c.b16 %v685, %v684
        %vm690 = vcmask 261120
        %v692 = vsel %vm690, %v674, 0
        %694 = vmatpush.bf16.msra.mxu0 0
        %695 = vmatpush.bf16.msra.mxu0 0
        %696 = vmatpush.bf16.msra.mxu0 0
        %697 = vmatpush.bf16.msra.mxu0 0
        %698 = vmatpush.bf16.msra.mxu0 0
        %699 = vmatpush.bf16.msra.mxu0 0
        %700 = vmatpush.bf16.msra.mxu0 %v687
        %701 = vmatpush.bf16.msra.mxu0 %v686
        %702 = vmatmul.bf16.gmra.mxu0 %v692
        %v703 = vpop.f32.mrf.mxu0
        %v704 = vadd.f32 %v676, %v703
        %v705 = vpop.f32.mrf.mxu0
        %706 = vdwg.mxu0
        %vm707 = vcmask 253952
        %708 = vst.msk [vmem:[#allocation2] sm:$0x1] %vm707, 0.0
        %709 = vst.msk [vmem:[#allocation2 + $0x9] sm:$0x1] %vm707, 0.0
        %710 = vst.msk [vmem:[#allocation2 + $0x1] sm:$0xff] %vm690, %v672
        %v711 = vld [vmem:[#allocation2] sm:$0xff]
        %v712 = vperm.slane %v640, 0
        %v713 = vmul.f32 %v711, %v712
        %v714 = vadd.f32 %v713, 0.0
        %v715 = vld [vmem:[#allocation2 + $0x1] sm:$0xff]
        %v716 = vperm.slane %v640, 1
        %v717 = vmul.f32 %v715, %v716
        %v718 = vadd.f32 %v714, %v717
        %v719 = vld [vmem:[#allocation2 + $0x2] sm:$0xff]
        %v720 = vperm.slane %v640, 2
        %v721 = vmul.f32 %v719, %v720
        %v722 = vadd.f32 %v718, %v721
        %v723 = vpack.c.bf16 %v722, %v722
        %v725 = vperm.slane %v645, 0
        %v731 = vunpack.c.l.b16 %v641
        %v732 = vunpack.c.l.b16 %v642
        %v733 = vunpack.c.l.b16 %v643
        %v734 = vunpack.c.l.b16 %v644
        %v735 = vpack.c.b16 %v732, %v731
        %v736 = vpack.c.b16 %v734, %v733
        %v740 = vsel %vm690, %v723, 0
        %742 = vmatpush.bf16.msra.mxu0 0
        %743 = vmatpush.bf16.msra.mxu0 0
        %744 = vmatpush.bf16.msra.mxu0 0
        %745 = vmatpush.bf16.msra.mxu0 0
        %746 = vmatpush.bf16.msra.mxu0 0
        %747 = vmatpush.bf16.msra.mxu0 0
        %748 = vmatpush.bf16.msra.mxu0 %v736
        %749 = vmatpush.bf16.msra.mxu0 %v735
        %750 = vmatmul.bf16.gmra.mxu0 %v740
        %v751 = vpop.f32.mrf.mxu0
        %v752 = vadd.f32 %v725, %v751
        %v753 = vpop.f32.mrf.mxu0
        %754 = vdwg.mxu0
        %v755 = vmul.f32 %v752, %v704
        %v756 = vpack.c.bf16 %v755, %v755
        %v758 = vperm.slane %v648, 0
        %v762 = vunpack.c.l.b16 %v646
        %v763 = vunpack.c.l.b16 %v647
        %v764 = vpack.c.b16 %v763, %v762
        %vm766 = vcmask 130048
        %v768 = vsel %vm766, %v756, 0
        %770 = vmatpush.bf16.msra.mxu0 0
        %771 = vmatpush.bf16.msra.mxu0 0
        %772 = vmatpush.bf16.msra.mxu0 0
        %773 = vmatpush.bf16.msra.mxu0 0
        %774 = vmatpush.bf16.msra.mxu0 0
        %775 = vmatpush.bf16.msra.mxu0 0
        %776 = vmatpush.bf16.msra.mxu0 0
        %777 = vmatpush.bf16.msra.mxu0 %v764
        %778 = vmatmul.bf16.gmra.mxu0 %v768
        %v779 = vpop.f32.mrf.mxu0
        %v780 = vadd.f32 %v758, %v779
        %v781 = vpop.f32.mrf.mxu0
        %782 = vdwg.mxu0
        %vm783 = vcmask 23552
        %v784 = vsel %vm783, %v780, -inf
        %785 = vmax.xlane.f32.xlu0 %v784
        %v786 = vpop.xlane.xlu0 %785
        %v787 = vsub.f32 %v780, %v786
        %v788 = vmul.f32 %v787, 1.442695
        %v789 = vpow.pop %v788
        %v790 = vsel %vm783, %v789, 0.0
        %791 = vadd.xlane.f32.xlu0 %v790
        %v792 = vpop.xlane.xlu0 %791
        %v793 = vrcp.pop %v792
        %v794 = vmul.f32 %v789, %v793
        %vm795 = vcmask 48152
        %v796 = vsel %vm795, %v780, -inf
        %797 = vmax.xlane.f32.xlu0 %v796
        %v798 = vpop.xlane.xlu0 %797
        %v799 = vsub.f32 %v780, %v798
        %v800 = vmul.f32 %v799, 1.442695
        %v801 = vpow.pop %v800
        %803 = vrot.lane.b32.xlu0 %v801, 125
        %v804 = vpop.permute.xlu0 %803
        %v806 = vsel %vm783, %v804, 0.0
        %807 = vadd.xlane.f32.xlu0 %v806
        %v808 = vpop.xlane.xlu0 %807
        %v809 = vrcp.pop %v808
        %v810 = vmul.f32 %v801, %v809
        %vm811 = vcmask 122880
        %812 = vst.msk [vmem:[#allocation3] sm:$0x1] %vm811, 0.0
        %813 = vst.msk [vmem:[#allocation3 + $0x9] sm:$0x1] %vm811, 0.0
        %815 = vrot.lane.b32.xlu0 %v704, 80
        %v816 = vpop.permute.xlu0 %815
        %818 = vst.msk [vmem:[#allocation3 + $0x1] sm:$0xff] %vm766, %v816
        %v819 = vld [vmem:[#allocation3] sm:$0xff]
        %821 = vset.pattern.permute.xlu0 0
        %822 = vperm.xlu0 %821, %v794
        %v823 = vpop.permute.xlu0 %822
        %v825 = vmul.f32 %v819, %v823
        %v826 = vadd.f32 %v825, 0.0
        %828 = vset.pattern.permute.xlu0 3
        %829 = vperm.xlu0 %828, %v810
        %v830 = vpop.permute.xlu0 %829
        %v832 = vmul.f32 %v819, %v830
        %v833 = vadd.f32 %v832, 0.0
        %v834 = vld [vmem:[#allocation3 + $0x1] sm:$0xff]
        %835 = vset.pattern.permute.xlu0 1
        %836 = vperm.xlu0 %835, %v794
        %v837 = vpop.permute.xlu0 %836
        %v839 = vmul.f32 %v834, %v837
        %v840 = vadd.f32 %v826, %v839
        %841 = vset.pattern.permute.xlu0 4
        %842 = vperm.xlu0 %841, %v810
        %v843 = vpop.permute.xlu0 %842
        %v845 = vmul.f32 %v834, %v843
        %v846 = vadd.f32 %v833, %v845
        %v847 = vld [vmem:[#allocation3 + $0x2] sm:$0xff]
        %848 = vset.pattern.permute.xlu0 2
        %849 = vperm.xlu0 %848, %v794
        %v850 = vpop.permute.xlu0 %849
        %v852 = vmul.f32 %v847, %v850
        %v853 = vadd.f32 %v840, %v852
        %854 = vset.pattern.permute.xlu0 5
        %855 = vperm.xlu0 %854, %v810
        %v856 = vpop.permute.xlu0 %855
        %v858 = vmul.f32 %v847, %v856
        %v859 = vadd.f32 %v846, %v858
        %v860 = vpack.c.bf16 %v704, %v704
        %862 = vrot.lane.b32.xlu0 %v860, 112
        %v863 = vpop.permute.xlu0 %862
        %vm864 = vcmask 64512
        %v866 = vsel %vm864, %v860, 0
        %v869 = vsel %vm864, %v863, 0
        %871 = vmatpush.bf16.xpose.msra.mxu0 0
        %872 = vmatpush.bf16.xpose.msra.mxu0 0
        %873 = vmatpush.bf16.xpose.msra.mxu0 0
        %874 = vmatpush.bf16.xpose.msra.mxu0 0
        %875 = vmatpush.bf16.xpose.msra.mxu0 0
        %876 = vmatpush.bf16.xpose.msra.mxu0 0
        %877 = vmatpush.bf16.xpose.msra.mxu0 0
        %878 = vmatpush.bf16.xpose.msra.mxu0 %v869
        %879 = vmatmul.bf16.gmra.mxu0 %v866
        %v880 = vpop.f32.mrf.mxu0
        %v881 = vadd.f32 0.0, %v880
        %v882 = vpop.f32.mrf.mxu0
        %883 = vdwg.mxu0
        %v884 = vmul.f32 %v881, 0.35355338
        %v886 = vperm.slane %v673, 0
        %v888 = vadd.f32 %v884, %v886
        %v889 = vsel %vm864, %v888, -inf
        %890 = vmax.xlane.f32.xlu0 %v889
        %v891 = vpop.xlane.xlu0 %890
        %v892 = vsub.f32 %v888, %v891
        %v893 = vmul.f32 %v892, 1.442695
        %v894 = vpow.pop %v893
        %v895 = vsel %vm864, %v894, 0.0
        %896 = vadd.xlane.f32.xlu0 %v895
        %v897 = vpop.xlane.xlu0 %896
        %v898 = vrcp.pop %v897
        %v899 = vmul.f32 %v894, %v898
        %v900 = vpack.c.bf16 %v899, %v899
        %901 = vrot.lane.b32.xlu0 %v860, 96
        %v902 = vpop.permute.xlu0 %901
        %v904 = vsel %vm864, %v900, 0
        %vm906 = vcmask 1043456
        %v908 = vsel %vm906, %v902, 0
        %910 = vmatpush.bf16.msra.mxu0 0
        %911 = vmatpush.bf16.msra.mxu0 0
        %912 = vmatpush.bf16.msra.mxu0 0
        %913 = vmatpush.bf16.msra.mxu0 0
        %914 = vmatpush.bf16.msra.mxu0 0
        %915 = vmatpush.bf16.msra.mxu0 0
        %916 = vmatpush.bf16.msra.mxu0 0
        %917 = vmatpush.bf16.msra.mxu0 %v908
        %918 = vmatmul.bf16.gmra.mxu0 %v904
        %v919 = vpop.f32.mrf.mxu0
        %v920 = vadd.f32 0.0, %v919
        %v921 = vpop.f32.mrf.mxu0
        %922 = vdwg.mxu0
        %923 = vrot.lane.b32.xlu0 %v860, 120
        %v924 = vpop.permute.xlu0 %923
        %925 = vrot.lane.b32.xlu0 %v860, 104
        %v926 = vpop.permute.xlu0 %925
        %v928 = vsel %vm864, %v924, 0
        %v931 = vsel %vm864, %v926, 0
        %933 = vmatpush.bf16.xpose.msra.mxu0 0
        %934 = vmatpush.bf16.xpose.msra.mxu0 0
        %935 = vmatpush.bf16.xpose.msra.mxu0 0
        %936 = vmatpush.bf16.xpose.msra.mxu0 0
        %937 = vmatpush.bf16.xpose.msra.mxu0 0
        %938 = vmatpush.bf16.xpose.msra.mxu0 0
        %939 = vmatpush.bf16.xpose.msra.mxu0 0
        %940 = vmatpush.bf16.xpose.msra.mxu0 %v931
        %941 = vmatmul.bf16.gmra.mxu0 %v928
        %v942 = vpop.f32.mrf.mxu0
        %v943 = vadd.f32 0.0, %v942
        %v944 = vpop.f32.mrf.mxu0
        %945 = vdwg.mxu0
        %v946 = vmul.f32 %v943, 0.35355338
        %v947 = vadd.f32 %v946, %v886
        %v948 = vsel %vm864, %v947, -inf
        %949 = vmax.xlane.f32.xlu0 %v948
        %v950 = vpop.xlane.xlu0 %949
        %v951 = vsub.f32 %v947, %v950
        %v952 = vmul.f32 %v951, 1.442695
        %v953 = vpow.pop %v952
        %v954 = vsel %vm864, %v953, 0.0
        %955 = vadd.xlane.f32.xlu0 %v954
        %v956 = vpop.xlane.xlu0 %955
        %v957 = vrcp.pop %v956
        %v958 = vmul.f32 %v953, %v957
        %v959 = vpack.c.bf16 %v958, %v958
        %960 = vrot.lane.b32.xlu0 %v860, 88
        %v961 = vpop.permute.xlu0 %960
        %v963 = vsel %vm864, %v959, 0
        %v966 = vsel %vm906, %v961, 0
        %968 = vmatpush.bf16.msra.mxu0 0
        %969 = vmatpush.bf16.msra.mxu0 0
        %970 = vmatpush.bf16.msra.mxu0 0
        %971 = vmatpush.bf16.msra.mxu0 0
        %972 = vmatpush.bf16.msra.mxu0 0
        %973 = vmatpush.bf16.msra.mxu0 0
        %974 = vmatpush.bf16.msra.mxu0 0
        %975 = vmatpush.bf16.msra.mxu0 %v966
        %976 = vmatmul.bf16.gmra.mxu0 %v963
        %v977 = vpop.f32.mrf.mxu0
        %v978 = vadd.f32 0.0, %v977
        %v979 = vpop.f32.mrf.mxu0
        %980 = vdwg.mxu0
        %982 = vrot.lane.b32.xlu0 %v978, 8
        %v983 = vpop.permute.xlu0 %982
        %986 = vrot.lane.b32.xlu0 %v853, 16
        %v987 = vpop.permute.xlu0 %986
        %990 = vrot.lane.b32.xlu0 %v859, 16
        %v991 = vpop.permute.xlu0 %990
        %v993 = vsel %vm864, %v920, %v983
        %v994 = vsel %vm766, %v993, %v987
        %vm995 = vcmask 195584
        %v996 = vsel %vm995, %v994, %v991
        %v997 = vpack.c.bf16 %v996, %v996
        %v999 = vperm.slane %v653, 0
        %v1005 = vunpack.c.l.b16 %v649
        %v1006 = vunpack.c.l.b16 %v650
        %v1007 = vunpack.c.l.b16 %v651
        %v1008 = vunpack.c.l.b16 %v652
        %v1009 = vpack.c.b16 %v1006, %v1005
        %v1010 = vpack.c.b16 %v1008, %v1007
        %v1014 = vsel %vm690, %v997, 0
        %1016 = vmatpush.bf16.msra.mxu0 0
        %1017 = vmatpush.bf16.msra.mxu0 0
        %1018 = vmatpush.bf16.msra.mxu0 0
        %1019 = vmatpush.bf16.msra.mxu0 0
        %1020 = vmatpush.bf16.msra.mxu0 0
        %1021 = vmatpush.bf16.msra.mxu0 0
        %1022 = vmatpush.bf16.msra.mxu0 %v1010
        %1023 = vmatpush.bf16.msra.mxu0 %v1009
        %1024 = vmatmul.bf16.gmra.mxu0 %v1014
        %v1025 = vpop.f32.mrf.mxu0
        %v1026 = vadd.f32 %v999, %v1025
        %v1027 = vpop.f32.mrf.mxu0
        %1028 = vdwg.mxu0
        %v1029 = vadd.f32 %v1026, %v672
        %v1030 = vsel %vm690, %v1029, 0.0
        %1031 = vadd.xlane.f32.xlu0 %v1030
        %v1032 = vpop.xlane.xlu0 %1031
        %v1033 = vrcp.pop 32.0
        %v1034 = vmul.f32 32.0, %v1033
        %v1035 = vsub.f32 1.0, %v1034
        %v1036 = vmul.f32 %v1033, %v1035
        %v1037 = vadd.f32 %v1033, %v1036
        %vm1038 = vweird.f32 %v1033
        %v1039 = vsel %vm1038, %v1033, %v1037
        %v1040 = vmul.f32 %v1032, %v1039
        %v1041 = vsub.f32 %v1029, %v1040
        %v1042 = vmul.f32 %v1041, %v1041
        %v1043 = vsel %vm690, %v1042, 0.0
        %1044 = vadd.xlane.f32.xlu0 %v1043
        %v1045 = vpop.xlane.xlu0 %1044
        %v1046 = vmul.f32 %v1045, %v1039
        %v1047 = vadd.f32 %v1046, 1e-12
        %v1048 = vrsqrt.pop %v1047
        %v1049 = vmul.f32 %v1048, %v1047
        %v1050 = vmul.f32 %v1049, %v1048
        %v1051 = vmul.f32 0.5, %v1050
        %v1052 = vsub.f32 1.5, %v1051
        %v1053 = vmul.f32 %v1048, %v1052
        %vm1054 = vweird.f32 %v1047
        %vm1055 = vweird.f32 %v1048
        %vm1056 = vmor %vm1054, %vm1055
        %v1057 = vsel %vm1056, %v1048, %v1053
        %v1058 = vmul.f32 %v1041, %v1057
        %v1060 = vperm.slane %v654, 0
        %v1062 = vmul.f32 %v1058, %v1060
        %v1064 = vperm.slane %v655, 0
        %v1066 = vadd.f32 %v1062, %v1064
        %v1067 = vpack.c.bf16 %v1066, %v1066
        %v1069 = vperm.slane %v660, 0
        %v1075 = vunpack.c.l.b16 %v656
        %v1076 = vunpack.c.l.b16 %v657
        %v1077 = vunpack.c.l.b16 %v658
        %v1078 = vunpack.c.l.b16 %v659
        %v1079 = vpack.c.b16 %v1076, %v1075
        %v1080 = vpack.c.b16 %v1078, %v1077
        %v1084 = vsel %vm690, %v1067, 0
        %1086 = vmatpush.bf16.msra.mxu0 0
        %1087 = vmatpush.bf16.msra.mxu0 0
        %1088 = vmatpush.bf16.msra.mxu0 0
        %1089 = vmatpush.bf16.msra.mxu0 0
        %1090 = vmatpush.bf16.msra.mxu0 0
        %1091 = vmatpush.bf16.msra.mxu0 0
        %1092 = vmatpush.bf16.msra.mxu0 %v1080
        %1093 = vmatpush.bf16.msra.mxu0 %v1079
        %1094 = vmatmul.bf16.gmra.mxu0 %v1084
        %v1095 = vpop.f32.mrf.mxu0
        %v1096 = vadd.f32 %v1069, %v1095
        %v1097 = vpop.f32.mrf.mxu0
        %1098 = vdwg.mxu0
        %v1099 = vmul.f32 %v1096, 0.5
        %v1100 = vmul.f32 %v1096, 0.70710677
        %v1101 = vmul.f32 %v1100, %v1100
        %v1102 = vmin.f32 16.0, %v1101
        %v1103 = vmul.f32 %v1102, 2.1237322e-06
        %v1104 = vadd.f32 %v1103, 0.00028619796
        %v1105 = vmul.f32 %v1102, %v1104
        %v1106 = vadd.f32 %v1105, 0.0036580483
        %v1107 = vmul.f32 %v1102, %v1106
        %v1108 = vadd.f32 %v1107, 0.05243302
        %v1109 = vmul.f32 %v1102, %v1108
        %v1110 = vadd.f32 %v1109, 0.18741608
        %v1111 = vmul.f32 %v1102, %v1110
        %v1112 = vadd.f32 %v1111, 1.1283791
        %v1113 = vmul.f32 %v1100, %v1112
        %v1114 = vmul.f32 %v1102, 3.8918573e-05
        %v1115 = vadd.f32 %v1114, 0.001143296
        %v1116 = vmul.f32 %v1102, %v1115
        %v1117 = vadd.f32 %v1116, 0.014752088
        %v1118 = vmul.f32 %v1102, %v1117
        %v1119 = vadd.f32 %v1118, 0.112945676
        %v1120 = vmul.f32 %v1102, %v1119
        %v1121 = vadd.f32 %v1120, 0.4994258
        %v1122 = vmul.f32 %v1102, %v1121
        %v1123 = vadd.f32 %v1122, 1.0
        %v1124 = vrcp.pop %v1123
        %v1125 = vmul.f32 %v1123, %v1124
        %v1126 = vsub.f32 1.0, %v1125
        %v1127 = vmul.f32 %v1124, %v1126
        %v1128 = vadd.f32 %v1124, %v1127
        %vm1129 = vweird.f32 %v1123
        %vm1130 = vweird.f32 %v1124
        %vm1131 = vmor %vm1129, %vm1130
        %v1132 = vsel %vm1131, %v1124, %v1128
        %v1133 = vand.u32 2147483647, %v1123
        %vm1134 = vcmp.eq.f32.partialorder %v1133, 8.507059e+37
        %v1135 = vand.u32 %v1123, 2147483648
        %v1136 = vor.u32 1.1754944e-38, %v1135
        %v1137 = vsel %vm1134, %v1136, %v1132
        %v1138 = vmul.f32 %v1113, %v1137
        %v1139 = vmin.f32 %v1138, 1.0
        %v1140 = vmax.f32 %v1139, -1.0
        %v1141 = vadd.f32 %v1140, 1.0
        %v1142 = vmul.f32 %v1099, %v1141
        %v1143 = vpack.c.bf16 %v1142, %v1142
        %v1145 = vperm.slane %v669, 0
        %v1155 = vunpack.c.l.b16 %v661
        %v1156 = vunpack.c.l.b16 %v662
        %v1157 = vunpack.c.l.b16 %v663
        %v1158 = vunpack.c.l.b16 %v664
        %v1159 = vunpack.c.l.b16 %v665
        %v1160 = vunpack.c.l.b16 %v666
        %v1161 = vunpack.c.l.b16 %v667
        %v1162 = vunpack.c.l.b16 %v668
        %v1163 = vpack.c.b16 %v1156, %v1155
        %v1164 = vpack.c.b16 %v1158, %v1157
        %v1165 = vpack.c.b16 %v1160, %v1159
        %v1166 = vpack.c.b16 %v1162, %v1161
        %vm1171 = vcmask 523264
        %v1173 = vsel %vm1171, %v1143, 0
        %1175 = vmatpush.bf16.msra.mxu0 0
        %1176 = vmatpush.bf16.msra.mxu0 0
        %1177 = vmatpush.bf16.msra.mxu0 0
        %1178 = vmatpush.bf16.msra.mxu0 0
        %1179 = vmatpush.bf16.msra.mxu0 %v1166
        %1180 = vmatpush.bf16.msra.mxu0 %v1165
        %1181 = vmatpush.bf16.msra.mxu0 %v1164
        %1182 = vmatpush.bf16.msra.mxu0 %v1163
        %1183 = vmatmul.bf16.gmra.mxu0 %v1173
        %v1184 = vpop.f32.mrf.mxu0
        %v1185 = vadd.f32 %v1145, %v1184
        %v1186 = vpop.f32.mrf.mxu0
        %1187 = vdwg.mxu0
        %v1188 = vadd.f32 %v1185, %v1066
        %v1189 = vsel %vm690, %v1188, 0.0
        %1190 = vadd.xlane.f32.xlu0 %v1189
        %v1191 = vpop.xlane.xlu0 %1190
        %v1192 = vmul.f32 %v1191, %v1039
        %v1193 = vsub.f32 %v1188, %v1192
        %v1194 = vmul.f32 %v1193, %v1193
        %v1195 = vsel %vm690, %v1194, 0.0
        %1196 = vadd.xlane.f32.xlu0 %v1195
        %v1197 = vpop.xlane.xlu0 %1196
        %v1198 = vmul.f32 %v1197, %v1039
        %v1199 = vadd.f32 %v1198, 1e-12
        %v1200 = vrsqrt.pop %v1199
        %v1201 = vmul.f32 %v1200, %v1199
        %v1202 = vmul.f32 %v1201, %v1200
        %v1203 = vmul.f32 0.5, %v1202
        %v1204 = vsub.f32 1.5, %v1203
        %v1205 = vmul.f32 %v1200, %v1204
        %vm1206 = vweird.f32 %v1199
        %vm1207 = vweird.f32 %v1200
        %vm1208 = vmor %vm1206, %vm1207
        %v1209 = vsel %vm1208, %v1200, %v1205
        %v1210 = vmul.f32 %v1193, %v1209
        %v1212 = vperm.slane %v670, 0
        %v1214 = vmul.f32 %v1210, %v1212
        %v1216 = vperm.slane %v671, 0
        %v1218 = vadd.f32 %v1214, %v1216
        %1219 = vst.msk [vmem:[%s630] sm:$0xff] %vm690, %v1218
        %s1220 = sand.u32 %s453, 1
        %s1221 = scalar_lea.sflag [#allocation6], %s1220
        %s1222 = sand.u32 %s453, 1
        %s1223 = smul.addr %s1222, 8
        %s1224 = scalar_lea.vmem [#allocation7], %s1223
        // Predicated region
        $region101: #{_convbert_forward.3} parent=95 // pred_check
          %p1225 = pneg %p463
        $region102: #{_convbert_forward.3} parent=95 // pred_check_branch
          %1227 = sbr.rel (%p1225) target = $region104
        $region103: #{_convbert_forward.3} parent=95 // pred_region
          %1229 = vsyncadd %s1221, 0
          %s1230 = smul.addr %s36, 8
          %s1231 = scalar_lea.hbm %s19, %s1230
          %s1233 = sshll.u32 %s1224, 4
          %s1234 = int_to_ptr.vmem [resolvable:$true] %s1233
          %s1235 = sshll.u32 %s1231, 4
          %s1236 = int_to_ptr.hbm [resolvable:$true] %s1235
          %1238 = dma.vmem_to_hbm [thread:$0]  %s1234, 128, %s1236, %s1221
        $region104: #{_convbert_forward.3} parent=95 // pred_fallthru
          _
      $region96: #{_convbert_forward.3} parent=5 // pred_fallthru
        _
      %p1239 = scmp.le.s32.totalorder 2, %s31
      // Predicated region
      $region105: #{_convbert_forward.3} parent=5 // pred_check
        %p1240 = pneg %p1239
      $region106: #{_convbert_forward.3} parent=5 // pred_check_branch
        %1242 = sbr.rel (%p1240) target = $region108
      $region107: #{_convbert_forward.3} parent=5 // pred_region
        %s1243 = ssub.s32 %s31, 2
        // Predicated region
        $region109: #{_convbert_forward.3} parent=107 // pred_check
          %p1244 = pneg %p469
        $region110: #{_convbert_forward.3} parent=107 // pred_check_branch
          %1246 = sbr.rel (%p1244) target = $region112
        $region111: #{_convbert_forward.3} parent=107 // pred_region
          %s1247 = sand.u32 %s454, 1
          %s1248 = scalar_lea.sflag [#allocation6], %s1247
          %s1249 = sand.u32 %s454, 1
          %s1250 = smul.addr %s1249, 8
          %s1251 = scalar_lea.vmem [#allocation7], %s1250
          %1253 = dma.done %s1248, 128
        $region112: #{_convbert_forward.3} parent=107 // pred_fallthru
          _
      $region108: #{_convbert_forward.3} parent=5 // pred_fallthru
        _
    $region6: #{_convbert_forward.3} parent=1 // loop_footer
      %s35 = sadd.s32 1, %s31
    $region7: #{_convbert_forward.3} parent=1 // loop_footer_branch
      %30 = sbr.rel target = $region3
    $region8: #{_convbert_forward.3} parent=1 // loop_exit
      _
    %1254 = vsyncpa [#allocation5], 1
    %s1255 = scalar_lea.sflag [#allocation5], 1
    %1256 = vsyncpa %s1255, 1
    %1257 = vsyncpa [#allocation6], 1
    %s1258 = scalar_lea.sflag [#allocation6], 1
    %1259 = vsyncpa %s1258, 1

// kernel: _convbert_forward.2
$region0: #{_convbert_forward.2}
  #allocation0 [shape = 'u32[]', space=smem, size = 0x4, offset = 0x4, fixed_abs, tag = 'smem constant byte address 0x4 - core index']
  #allocation1 [shape = 'u32[72,128]{1,0:T(1,128)}', space=vmem, size = 0x9000, scoped, tag = 'internal scratch']
  #allocation2 [shape = 'f32[10,32]{1,0:T(8,128)}', space=vmem, size = 0x2000, scoped, tag = 'scratch operand']
  #allocation3 [shape = 'f32[10,16]{1,0:T(8,128)}', space=vmem, size = 0x2000, scoped, tag = 'scratch operand']
  %s0 = inlined_call_operand.vmem [shape: f32[2,8,32], index: 0, kind: input, shape index: {}, may-alias: {0,19}]
  %s1 = inlined_call_operand.vmem [shape: f32[2,1,8], index: 1, kind: input, shape index: {}]
  %s2 = inlined_call_operand.vmem [shape: bf16[32,64], index: 2, kind: input, shape index: {}]
  %s3 = inlined_call_operand.vmem [shape: f32[1,64], index: 3, kind: input, shape index: {}]
  %s4 = inlined_call_operand.vmem [shape: f32[3,32], index: 4, kind: input, shape index: {}]
  %s5 = inlined_call_operand.vmem [shape: bf16[32,16], index: 5, kind: input, shape index: {}]
  %s6 = inlined_call_operand.vmem [shape: f32[1,16], index: 6, kind: input, shape index: {}]
  %s7 = inlined_call_operand.vmem [shape: bf16[16,6], index: 7, kind: input, shape index: {}]
  %s8 = inlined_call_operand.vmem [shape: f32[1,6], index: 8, kind: input, shape index: {}]
  %s9 = inlined_call_operand.vmem [shape: bf16[32,32], index: 9, kind: input, shape index: {}]
  %s10 = inlined_call_operand.vmem [shape: f32[1,32], index: 10, kind: input, shape index: {}]
  %s11 = inlined_call_operand.vmem [shape: f32[1,32], index: 11, kind: input, shape index: {}]
  %s12 = inlined_call_operand.vmem [shape: f32[1,32], index: 12, kind: input, shape index: {}]
  %s13 = inlined_call_operand.vmem [shape: bf16[32,64], index: 13, kind: input, shape index: {}]
  %s14 = inlined_call_operand.vmem [shape: f32[1,64], index: 14, kind: input, shape index: {}]
  %s15 = inlined_call_operand.vmem [shape: bf16[64,32], index: 15, kind: input, shape index: {}]
  %s16 = inlined_call_operand.vmem [shape: f32[1,32], index: 16, kind: input, shape index: {}]
  %s17 = inlined_call_operand.vmem [shape: f32[1,32], index: 17, kind: input, shape index: {}]
  %s18 = inlined_call_operand.vmem [shape: f32[1,32], index: 18, kind: input, shape index: {}]
  %s19 = inlined_call_operand.vmem [shape: f32[2,8,32], index: 19, kind: output, shape index: {}, may-alias: {0,19}]
  %s20 = sld [smem:[#allocation0]]
  $region109: #{_convbert_forward.2} parent=0
    _
  %s22 = ssub.s32 1, %s20
  %s23 = scalar_select 0, %s22, %s20
  loop: start=0, step=1, limit=4
  $region2: #{_convbert_forward.2} parent=0 // loop_pre_header
    _
  $region3: #{_convbert_forward.2} parent=0 // loop_header
    %s25 = sphi 0, %s29
    %p26 = scmp.ge.s32.totalorder %s25, 4
    %s35 = sphi 0, %s37
    %s38 = sphi 0, %s35
    %s39 = sphi 0, %s38
    %s55 = sphi 0, %s39
    %s61 = sphi 0, %s63
    %s64 = sphi 0, %s61
    %s65 = sphi 0, %s64
    %s81 = sphi 0, %s65
    %s85 = sphi 0, %s85
    %s87 = sphi 0, %s85
    %s88 = sphi 0, %s87
    %s102 = sphi 0, %s88
    %s106 = sphi 0, %s106
    %s108 = sphi 0, %s106
    %s109 = sphi 0, %s108
    %s123 = sphi 0, %s109
    %s127 = sphi 0, %s127
    %s129 = sphi 0, %s127
    %s130 = sphi 0, %s129
    %s144 = sphi 0, %s130
    %s148 = sphi 0, %s148
    %s150 = sphi 0, %s148
    %s151 = sphi 0, %s150
    %s165 = sphi 0, %s151
    %s169 = sphi 0, %s169
    %s171 = sphi 0, %s169
    %s172 = sphi 0, %s171
    %s186 = sphi 0, %s172
    %s190 = sphi 0, %s190
    %s192 = sphi 0, %s190
    %s193 = sphi 0, %s192
    %s207 = sphi 0, %s193
    %s211 = sphi 0, %s211
    %s213 = sphi 0, %s211
    %s214 = sphi 0, %s213
    %s228 = sphi 0, %s214
    %s232 = sphi 0, %s232
    %s234 = sphi 0, %s232
    %s235 = sphi 0, %s234
    %s249 = sphi 0, %s235
    %s253 = sphi 0, %s253
    %s255 = sphi 0, %s253
    %s256 = sphi 0, %s255
    %s270 = sphi 0, %s256
    %s274 = sphi 0, %s274
    %s276 = sphi 0, %s274
    %s277 = sphi 0, %s276
    %s291 = sphi 0, %s277
    %s295 = sphi 0, %s295
    %s297 = sphi 0, %s295
    %s298 = sphi 0, %s297
    %s312 = sphi 0, %s298
    %s316 = sphi 0, %s316
    %s318 = sphi 0, %s316
    %s319 = sphi 0, %s318
    %s333 = sphi 0, %s319
    %s337 = sphi 0, %s337
    %s339 = sphi 0, %s337
    %s340 = sphi 0, %s339
    %s354 = sphi 0, %s340
    %s358 = sphi 0, %s358
    %s360 = sphi 0, %s358
    %s361 = sphi 0, %s360
    %s375 = sphi 0, %s361
    %s379 = sphi 0, %s379
    %s381 = sphi 0, %s379
    %s382 = sphi 0, %s381
    %s396 = sphi 0, %s382
    %s400 = sphi 0, %s400
    %s402 = sphi 0, %s400
    %s403 = sphi 0, %s402
    %s417 = sphi 0, %s403
    %s421 = sphi 0, %s421
    %s423 = sphi 0, %s421
    %s424 = sphi 0, %s423
    %s438 = sphi 0, %s424
    %s444 = sphi 0, %s446
    %s447 = sphi 0, %s444
    %s448 = sphi 0, %s447
    %s464 = sphi 0, %s448
  $region4: #{_convbert_forward.2} parent=0 // loop_header_branch
    %28 = sbr.rel (%p26) target = $region8
  $region5: #{_convbert_forward.2} parent=0 // loop_body
    %s30 = ssub.s32 %s25, 1
    %s31 = ssub.s32 %s25, 2
    %s32 = sadd.s32 %s25, 1
    %s33 = ssub.s32 %s25, %s32
    %p34 = scmp.eq.s32.totalorder %s33, 0
    %s36 = sadd.s32 %s35, 1
    %s37 = scalar_select %p34, %s35, %s36
    %p40 = pneg %p34
    %p41 = scmp.eq.s32.totalorder %s25, 1
    %p42 = por %p40, %p41
    %p43 = scmp.ne.s32.totalorder %s35, %s38
    %p44 = scmp.eq.s32.totalorder %s25, 0
    %p45 = por %p43, %p44
    %p46 = scmp.ne.s32.totalorder %s35, %s38
    %p47 = scmp.eq.s32.totalorder %s30, 1
    %p48 = por %p46, %p47
    %p49 = scmp.ne.s32.totalorder %s38, %s39
    %p50 = scmp.eq.s32.totalorder %s30, 0
    %p51 = por %p49, %p50
    %p52 = scmp.ne.s32.totalorder %s38, %s39
    %p53 = scmp.eq.s32.totalorder %s31, 1
    %p54 = por %p52, %p53
    %p56 = scmp.ne.s32.totalorder %s39, %s55
    %p57 = scmp.eq.s32.totalorder %s31, 0
    %p58 = por %p56, %p57
    %s59 = ssub.s32 %s25, %s32
    %p60 = scmp.eq.s32.totalorder %s59, 0
    %s62 = sadd.s32 %s61, 1
    %s63 = scalar_select %p60, %s61, %s62
    %p66 = pneg %p60
    %p67 = scmp.eq.s32.totalorder %s25, 1
    %p68 = por %p66, %p67
    %p69 = scmp.ne.s32.totalorder %s61, %s64
    %p70 = scmp.eq.s32.totalorder %s25, 0
    %p71 = por %p69, %p70
    %p72 = scmp.ne.s32.totalorder %s61, %s64
    %p73 = scmp.eq.s32.totalorder %s30, 1
    %p74 = por %p72, %p73
    %p75 = scmp.ne.s32.totalorder %s64, %s65
    %p76 = scmp.eq.s32.totalorder %s30, 0
    %p77 = por %p75, %p76
    %p78 = scmp.ne.s32.totalorder %s64, %s65
    %p79 = scmp.eq.s32.totalorder %s31, 1
    %p80 = por %p78, %p79
    %p82 = scmp.ne.s32.totalorder %s65, %s81
    %p83 = scmp.eq.s32.totalorder %s31, 0
    %p84 = por %p82, %p83
    %s86 = sadd.s32 %s85, 1
    %p89 = scmp.eq.s32.totalorder %s25, 1
    %p90 = scmp.ne.s32.totalorder %s85, %s87
    %p91 = scmp.eq.s32.totalorder %s25, 0
    %p92 = por %p90, %p91
    %p93 = scmp.ne.s32.totalorder %s85, %s87
    %p94 = scmp.eq.s32.totalorder %s30, 1
    %p95 = por %p93, %p94
    %p96 = scmp.ne.s32.totalorder %s87, %s88
    %p97 = scmp.eq.s32.totalorder %s30, 0
    %p98 = por %p96, %p97
    %p99 = scmp.ne.s32.totalorder %s87, %s88
    %p100 = scmp.eq.s32.totalorder %s31, 1
    %p101 = por %p99, %p100
    %p103 = scmp.ne.s32.totalorder %s88, %s102
    %p104 = scmp.eq.s32.totalorder %s31, 0
    %p105 = por %p103, %p104
    %s107 = sadd.s32 %s106, 1
    %p110 = scmp.eq.s32.totalorder %s25, 1
    %p111 = scmp.ne.s32.totalorder %s106, %s108
    %p112 = scmp.eq.s32.totalorder %s25, 0
    %p113 = por %p111, %p112
    %p114 = scmp.ne.s32.totalorder %s106, %s108
    %p115 = scmp.eq.s32.totalorder %s30, 1
    %p116 = por %p114, %p115
    %p117 = scmp.ne.s32.totalorder %s108, %s109
    %p118 = scmp.eq.s32.totalorder %s30, 0
    %p119 = por %p117, %p118
    %p120 = scmp.ne.s32.totalorder %s108, %s109
    %p121 = scmp.eq.s32.totalorder %s31, 1
    %p122 = por %p120, %p121
    %p124 = scmp.ne.s32.totalorder %s109, %s123
    %p125 = scmp.eq.s32.totalorder %s31, 0
    %p126 = por %p124, %p125
    %s128 = sadd.s32 %s127, 1
    %p131 = scmp.eq.s32.totalorder %s25, 1
    %p132 = scmp.ne.s32.totalorder %s127, %s129
    %p133 = scmp.eq.s32.totalorder %s25, 0
    %p134 = por %p132, %p133
    %p135 = scmp.ne.s32.totalorder %s127, %s129
    %p136 = scmp.eq.s32.totalorder %s30, 1
    %p137 = por %p135, %p136
    %p138 = scmp.ne.s32.totalorder %s129, %s130
    %p139 = scmp.eq.s32.totalorder %s30, 0
    %p140 = por %p138, %p139
    %p141 = scmp.ne.s32.totalorder %s129, %s130
    %p142 = scmp.eq.s32.totalorder %s31, 1
    %p143 = por %p141, %p142
    %p145 = scmp.ne.s32.totalorder %s130, %s144
    %p146 = scmp.eq.s32.totalorder %s31, 0
    %p147 = por %p145, %p146
    %s149 = sadd.s32 %s148, 1
    %p152 = scmp.eq.s32.totalorder %s25, 1
    %p153 = scmp.ne.s32.totalorder %s148, %s150
    %p154 = scmp.eq.s32.totalorder %s25, 0
    %p155 = por %p153, %p154
    %p156 = scmp.ne.s32.totalorder %s148, %s150
    %p157 = scmp.eq.s32.totalorder %s30, 1
    %p158 = por %p156, %p157
    %p159 = scmp.ne.s32.totalorder %s150, %s151
    %p160 = scmp.eq.s32.totalorder %s30, 0
    %p161 = por %p159, %p160
    %p162 = scmp.ne.s32.totalorder %s150, %s151
    %p163 = scmp.eq.s32.totalorder %s31, 1
    %p164 = por %p162, %p163
    %p166 = scmp.ne.s32.totalorder %s151, %s165
    %p167 = scmp.eq.s32.totalorder %s31, 0
    %p168 = por %p166, %p167
    %s170 = sadd.s32 %s169, 1
    %p173 = scmp.eq.s32.totalorder %s25, 1
    %p174 = scmp.ne.s32.totalorder %s169, %s171
    %p175 = scmp.eq.s32.totalorder %s25, 0
    %p176 = por %p174, %p175
    %p177 = scmp.ne.s32.totalorder %s169, %s171
    %p178 = scmp.eq.s32.totalorder %s30, 1
    %p179 = por %p177, %p178
    %p180 = scmp.ne.s32.totalorder %s171, %s172
    %p181 = scmp.eq.s32.totalorder %s30, 0
    %p182 = por %p180, %p181
    %p183 = scmp.ne.s32.totalorder %s171, %s172
    %p184 = scmp.eq.s32.totalorder %s31, 1
    %p185 = por %p183, %p184
    %p187 = scmp.ne.s32.totalorder %s172, %s186
    %p188 = scmp.eq.s32.totalorder %s31, 0
    %p189 = por %p187, %p188
    %s191 = sadd.s32 %s190, 1
    %p194 = scmp.eq.s32.totalorder %s25, 1
    %p195 = scmp.ne.s32.totalorder %s190, %s192
    %p196 = scmp.eq.s32.totalorder %s25, 0
    %p197 = por %p195, %p196
    %p198 = scmp.ne.s32.totalorder %s190, %s192
    %p199 = scmp.eq.s32.totalorder %s30, 1
    %p200 = por %p198, %p199
    %p201 = scmp.ne.s32.totalorder %s192, %s193
    %p202 = scmp.eq.s32.totalorder %s30, 0
    %p203 = por %p201, %p202
    %p204 = scmp.ne.s32.totalorder %s192, %s193
    %p205 = scmp.eq.s32.totalorder %s31, 1
    %p206 = por %p204, %p205
    %p208 = scmp.ne.s32.totalorder %s193, %s207
    %p209 = scmp.eq.s32.totalorder %s31, 0
    %p210 = por %p208, %p209
    %s212 = sadd.s32 %s211, 1
    %p215 = scmp.eq.s32.totalorder %s25, 1
    %p216 = scmp.ne.s32.totalorder %s211, %s213
    %p217 = scmp.eq.s32.totalorder %s25, 0
    %p218 = por %p216, %p217
    %p219 = scmp.ne.s32.totalorder %s211, %s213
    %p220 = scmp.eq.s32.totalorder %s30, 1
    %p221 = por %p219, %p220
    %p222 = scmp.ne.s32.totalorder %s213, %s214
    %p223 = scmp.eq.s32.totalorder %s30, 0
    %p224 = por %p222, %p223
    %p225 = scmp.ne.s32.totalorder %s213, %s214
    %p226 = scmp.eq.s32.totalorder %s31, 1
    %p227 = por %p225, %p226
    %p229 = scmp.ne.s32.totalorder %s214, %s228
    %p230 = scmp.eq.s32.totalorder %s31, 0
    %p231 = por %p229, %p230
    %s233 = sadd.s32 %s232, 1
    %p236 = scmp.eq.s32.totalorder %s25, 1
    %p237 = scmp.ne.s32.totalorder %s232, %s234
    %p238 = scmp.eq.s32.totalorder %s25, 0
    %p239 = por %p237, %p238
    %p240 = scmp.ne.s32.totalorder %s232, %s234
    %p241 = scmp.eq.s32.totalorder %s30, 1
    %p242 = por %p240, %p241
    %p243 = scmp.ne.s32.totalorder %s234, %s235
    %p244 = scmp.eq.s32.totalorder %s30, 0
    %p245 = por %p243, %p244
    %p246 = scmp.ne.s32.totalorder %s234, %s235
    %p247 = scmp.eq.s32.totalorder %s31, 1
    %p248 = por %p246, %p247
    %p250 = scmp.ne.s32.totalorder %s235, %s249
    %p251 = scmp.eq.s32.totalorder %s31, 0
    %p252 = por %p250, %p251
    %s254 = sadd.s32 %s253, 1
    %p257 = scmp.eq.s32.totalorder %s25, 1
    %p258 = scmp.ne.s32.totalorder %s253, %s255
    %p259 = scmp.eq.s32.totalorder %s25, 0
    %p260 = por %p258, %p259
    %p261 = scmp.ne.s32.totalorder %s253, %s255
    %p262 = scmp.eq.s32.totalorder %s30, 1
    %p263 = por %p261, %p262
    %p264 = scmp.ne.s32.totalorder %s255, %s256
    %p265 = scmp.eq.s32.totalorder %s30, 0
    %p266 = por %p264, %p265
    %p267 = scmp.ne.s32.totalorder %s255, %s256
    %p268 = scmp.eq.s32.totalorder %s31, 1
    %p269 = por %p267, %p268
    %p271 = scmp.ne.s32.totalorder %s256, %s270
    %p272 = scmp.eq.s32.totalorder %s31, 0
    %p273 = por %p271, %p272
    %s275 = sadd.s32 %s274, 1
    %p278 = scmp.eq.s32.totalorder %s25, 1
    %p279 = scmp.ne.s32.totalorder %s274, %s276
    %p280 = scmp.eq.s32.totalorder %s25, 0
    %p281 = por %p279, %p280
    %p282 = scmp.ne.s32.totalorder %s274, %s276
    %p283 = scmp.eq.s32.totalorder %s30, 1
    %p284 = por %p282, %p283
    %p285 = scmp.ne.s32.totalorder %s276, %s277
    %p286 = scmp.eq.s32.totalorder %s30, 0
    %p287 = por %p285, %p286
    %p288 = scmp.ne.s32.totalorder %s276, %s277
    %p289 = scmp.eq.s32.totalorder %s31, 1
    %p290 = por %p288, %p289
    %p292 = scmp.ne.s32.totalorder %s277, %s291
    %p293 = scmp.eq.s32.totalorder %s31, 0
    %p294 = por %p292, %p293
    %s296 = sadd.s32 %s295, 1
    %p299 = scmp.eq.s32.totalorder %s25, 1
    %p300 = scmp.ne.s32.totalorder %s295, %s297
    %p301 = scmp.eq.s32.totalorder %s25, 0
    %p302 = por %p300, %p301
    %p303 = scmp.ne.s32.totalorder %s295, %s297
    %p304 = scmp.eq.s32.totalorder %s30, 1
    %p305 = por %p303, %p304
    %p306 = scmp.ne.s32.totalorder %s297, %s298
    %p307 = scmp.eq.s32.totalorder %s30, 0
    %p308 = por %p306, %p307
    %p309 = scmp.ne.s32.totalorder %s297, %s298
    %p310 = scmp.eq.s32.totalorder %s31, 1
    %p311 = por %p309, %p310
    %p313 = scmp.ne.s32.totalorder %s298, %s312
    %p314 = scmp.eq.s32.totalorder %s31, 0
    %p315 = por %p313, %p314
    %s317 = sadd.s32 %s316, 1
    %p320 = scmp.eq.s32.totalorder %s25, 1
    %p321 = scmp.ne.s32.totalorder %s316, %s318
    %p322 = scmp.eq.s32.totalorder %s25, 0
    %p323 = por %p321, %p322
    %p324 = scmp.ne.s32.totalorder %s316, %s318
    %p325 = scmp.eq.s32.totalorder %s30, 1
    %p326 = por %p324, %p325
    %p327 = scmp.ne.s32.totalorder %s318, %s319
    %p328 = scmp.eq.s32.totalorder %s30, 0
    %p329 = por %p327, %p328
    %p330 = scmp.ne.s32.totalorder %s318, %s319
    %p331 = scmp.eq.s32.totalorder %s31, 1
    %p332 = por %p330, %p331
    %p334 = scmp.ne.s32.totalorder %s319, %s333
    %p335 = scmp.eq.s32.totalorder %s31, 0
    %p336 = por %p334, %p335
    %s338 = sadd.s32 %s337, 1
    %p341 = scmp.eq.s32.totalorder %s25, 1
    %p342 = scmp.ne.s32.totalorder %s337, %s339
    %p343 = scmp.eq.s32.totalorder %s25, 0
    %p344 = por %p342, %p343
    %p345 = scmp.ne.s32.totalorder %s337, %s339
    %p346 = scmp.eq.s32.totalorder %s30, 1
    %p347 = por %p345, %p346
    %p348 = scmp.ne.s32.totalorder %s339, %s340
    %p349 = scmp.eq.s32.totalorder %s30, 0
    %p350 = por %p348, %p349
    %p351 = scmp.ne.s32.totalorder %s339, %s340
    %p352 = scmp.eq.s32.totalorder %s31, 1
    %p353 = por %p351, %p352
    %p355 = scmp.ne.s32.totalorder %s340, %s354
    %p356 = scmp.eq.s32.totalorder %s31, 0
    %p357 = por %p355, %p356
    %s359 = sadd.s32 %s358, 1
    %p362 = scmp.eq.s32.totalorder %s25, 1
    %p363 = scmp.ne.s32.totalorder %s358, %s360
    %p364 = scmp.eq.s32.totalorder %s25, 0
    %p365 = por %p363, %p364
    %p366 = scmp.ne.s32.totalorder %s358, %s360
    %p367 = scmp.eq.s32.totalorder %s30, 1
    %p368 = por %p366, %p367
    %p369 = scmp.ne.s32.totalorder %s360, %s361
    %p370 = scmp.eq.s32.totalorder %s30, 0
    %p371 = por %p369, %p370
    %p372 = scmp.ne.s32.totalorder %s360, %s361
    %p373 = scmp.eq.s32.totalorder %s31, 1
    %p374 = por %p372, %p373
    %p376 = scmp.ne.s32.totalorder %s361, %s375
    %p377 = scmp.eq.s32.totalorder %s31, 0
    %p378 = por %p376, %p377
    %s380 = sadd.s32 %s379, 1
    %p383 = scmp.eq.s32.totalorder %s25, 1
    %p384 = scmp.ne.s32.totalorder %s379, %s381
    %p385 = scmp.eq.s32.totalorder %s25, 0
    %p386 = por %p384, %p385
    %p387 = scmp.ne.s32.totalorder %s379, %s381
    %p388 = scmp.eq.s32.totalorder %s30, 1
    %p389 = por %p387, %p388
    %p390 = scmp.ne.s32.totalorder %s381, %s382
    %p391 = scmp.eq.s32.totalorder %s30, 0
    %p392 = por %p390, %p391
    %p393 = scmp.ne.s32.totalorder %s381, %s382
    %p394 = scmp.eq.s32.totalorder %s31, 1
    %p395 = por %p393, %p394
    %p397 = scmp.ne.s32.totalorder %s382, %s396
    %p398 = scmp.eq.s32.totalorder %s31, 0
    %p399 = por %p397, %p398
    %s401 = sadd.s32 %s400, 1
    %p404 = scmp.eq.s32.totalorder %s25, 1
    %p405 = scmp.ne.s32.totalorder %s400, %s402
    %p406 = scmp.eq.s32.totalorder %s25, 0
    %p407 = por %p405, %p406
    %p408 = scmp.ne.s32.totalorder %s400, %s402
    %p409 = scmp.eq.s32.totalorder %s30, 1
    %p410 = por %p408, %p409
    %p411 = scmp.ne.s32.totalorder %s402, %s403
    %p412 = scmp.eq.s32.totalorder %s30, 0
    %p413 = por %p411, %p412
    %p414 = scmp.ne.s32.totalorder %s402, %s403
    %p415 = scmp.eq.s32.totalorder %s31, 1
    %p416 = por %p414, %p415
    %p418 = scmp.ne.s32.totalorder %s403, %s417
    %p419 = scmp.eq.s32.totalorder %s31, 0
    %p420 = por %p418, %p419
    %s422 = sadd.s32 %s421, 1
    %p425 = scmp.eq.s32.totalorder %s25, 1
    %p426 = scmp.ne.s32.totalorder %s421, %s423
    %p427 = scmp.eq.s32.totalorder %s25, 0
    %p428 = por %p426, %p427
    %p429 = scmp.ne.s32.totalorder %s421, %s423
    %p430 = scmp.eq.s32.totalorder %s30, 1
    %p431 = por %p429, %p430
    %p432 = scmp.ne.s32.totalorder %s423, %s424
    %p433 = scmp.eq.s32.totalorder %s30, 0
    %p434 = por %p432, %p433
    %p435 = scmp.ne.s32.totalorder %s423, %s424
    %p436 = scmp.eq.s32.totalorder %s31, 1
    %p437 = por %p435, %p436
    %p439 = scmp.ne.s32.totalorder %s424, %s438
    %p440 = scmp.eq.s32.totalorder %s31, 0
    %p441 = por %p439, %p440
    %s442 = ssub.s32 %s25, %s32
    %p443 = scmp.eq.s32.totalorder %s442, 0
    %s445 = sadd.s32 %s444, 1
    %s446 = scalar_select %p443, %s444, %s445
    %p449 = pneg %p443
    %p450 = scmp.eq.s32.totalorder %s25, 1
    %p451 = por %p449, %p450
    %p452 = scmp.ne.s32.totalorder %s444, %s447
    %p453 = scmp.eq.s32.totalorder %s25, 0
    %p454 = por %p452, %p453
    %p455 = scmp.ne.s32.totalorder %s444, %s447
    %p456 = scmp.eq.s32.totalorder %s30, 1
    %p457 = por %p455, %p456
    %p458 = scmp.ne.s32.totalorder %s447, %s448
    %p459 = scmp.eq.s32.totalorder %s30, 0
    %p460 = por %p458, %p459
    %p461 = scmp.ne.s32.totalorder %s447, %s448
    %p462 = scmp.eq.s32.totalorder %s31, 1
    %p463 = por %p461, %p462
    %p465 = scmp.ne.s32.totalorder %s448, %s464
    %p466 = scmp.eq.s32.totalorder %s31, 0
    %p467 = por %p465, %p466
    %p468 = scmp.le.s32.totalorder 1, %s25
    %p469 = scmp.lt.s32.totalorder %s25, 3
    %p470 = pnand %p468, %p469
    %p471 = pneg %p470
    // Predicated region
    $region9: #{_convbert_forward.2} parent=5 // pred_check
      _
    $region10: #{_convbert_forward.2} parent=5 // pred_check_branch
      %473 = sbr.rel (%p470) target = $region12
    $region11: #{_convbert_forward.2} parent=5 // pred_region
      %s474 = ssub.s32 %s25, 1
      // Predicated region
      $region13: #{_convbert_forward.2} parent=11 // pred_check
        %p475 = pneg %p98
      $region14: #{_convbert_forward.2} parent=11 // pred_check_branch
        %477 = sbr.rel (%p475) target = $region16
      $region15: #{_convbert_forward.2} parent=11 // pred_region
        _
      $region16: #{_convbert_forward.2} parent=11 // pred_fallthru
        _
      // Predicated region
      $region17: #{_convbert_forward.2} parent=11 // pred_check
        %p478 = pneg %p119
      $region18: #{_convbert_forward.2} parent=11 // pred_check_branch
        %480 = sbr.rel (%p478) target = $region20
      $region19: #{_convbert_forward.2} parent=11 // pred_region
        _
      $region20: #{_convbert_forward.2} parent=11 // pred_fallthru
        _
      // Predicated region
      $region21: #{_convbert_forward.2} parent=11 // pred_check
        %p481 = pneg %p140
      $region22: #{_convbert_forward.2} parent=11 // pred_check_branch
        %483 = sbr.rel (%p481) target = $region24
      $region23: #{_convbert_forward.2} parent=11 // pred_region
        _
      $region24: #{_convbert_forward.2} parent=11 // pred_fallthru
        _
      // Predicated region
      $region25: #{_convbert_forward.2} parent=11 // pred_check
        %p484 = pneg %p161
      $region26: #{_convbert_forward.2} parent=11 // pred_check_branch
        %486 = sbr.rel (%p484) target = $region28
      $region27: #{_convbert_forward.2} parent=11 // pred_region
        _
      $region28: #{_convbert_forward.2} parent=11 // pred_fallthru
        _
      // Predicated region
      $region29: #{_convbert_forward.2} parent=11 // pred_check
        %p487 = pneg %p182
      $region30: #{_convbert_forward.2} parent=11 // pred_check_branch
        %489 = sbr.rel (%p487) target = $region32
      $region31: #{_convbert_forward.2} parent=11 // pred_region
        _
      $region32: #{_convbert_forward.2} parent=11 // pred_fallthru
        _
      // Predicated region
      $region33: #{_convbert_forward.2} parent=11 // pred_check
        %p490 = pneg %p203
      $region34: #{_convbert_forward.2} parent=11 // pred_check_branch
        %492 = sbr.rel (%p490) target = $region36
      $region35: #{_convbert_forward.2} parent=11 // pred_region
        _
      $region36: #{_convbert_forward.2} parent=11 // pred_fallthru
        _
      // Predicated region
      $region37: #{_convbert_forward.2} parent=11 // pred_check
        %p493 = pneg %p224
      $region38: #{_convbert_forward.2} parent=11 // pred_check_branch
        %495 = sbr.rel (%p493) target = $region40
      $region39: #{_convbert_forward.2} parent=11 // pred_region
        _
      $region40: #{_convbert_forward.2} parent=11 // pred_fallthru
        _
      // Predicated region
      $region41: #{_convbert_forward.2} parent=11 // pred_check
        %p496 = pneg %p245
      $region42: #{_convbert_forward.2} parent=11 // pred_check_branch
        %498 = sbr.rel (%p496) target = $region44
      $region43: #{_convbert_forward.2} parent=11 // pred_region
        _
      $region44: #{_convbert_forward.2} parent=11 // pred_fallthru
        _
      // Predicated region
      $region45: #{_convbert_forward.2} parent=11 // pred_check
        %p499 = pneg %p266
      $region46: #{_convbert_forward.2} parent=11 // pred_check_branch
        %501 = sbr.rel (%p499) target = $region48
      $region47: #{_convbert_forward.2} parent=11 // pred_region
        _
      $region48: #{_convbert_forward.2} parent=11 // pred_fallthru
        _
      // Predicated region
      $region49: #{_convbert_forward.2} parent=11 // pred_check
        %p502 = pneg %p287
      $region50: #{_convbert_forward.2} parent=11 // pred_check_branch
        %504 = sbr.rel (%p502) target = $region52
      $region51: #{_convbert_forward.2} parent=11 // pred_region
        _
      $region52: #{_convbert_forward.2} parent=11 // pred_fallthru
        _
      // Predicated region
      $region53: #{_convbert_forward.2} parent=11 // pred_check
        %p505 = pneg %p308
      $region54: #{_convbert_forward.2} parent=11 // pred_check_branch
        %507 = sbr.rel (%p505) target = $region56
      $region55: #{_convbert_forward.2} parent=11 // pred_region
        _
      $region56: #{_convbert_forward.2} parent=11 // pred_fallthru
        _
      // Predicated region
      $region57: #{_convbert_forward.2} parent=11 // pred_check
        %p508 = pneg %p329
      $region58: #{_convbert_forward.2} parent=11 // pred_check_branch
        %510 = sbr.rel (%p508) target = $region60
      $region59: #{_convbert_forward.2} parent=11 // pred_region
        _
      $region60: #{_convbert_forward.2} parent=11 // pred_fallthru
        _
      // Predicated region
      $region61: #{_convbert_forward.2} parent=11 // pred_check
        %p511 = pneg %p350
      $region62: #{_convbert_forward.2} parent=11 // pred_check_branch
        %513 = sbr.rel (%p511) target = $region64
      $region63: #{_convbert_forward.2} parent=11 // pred_region
        _
      $region64: #{_convbert_forward.2} parent=11 // pred_fallthru
        _
      // Predicated region
      $region65: #{_convbert_forward.2} parent=11 // pred_check
        %p514 = pneg %p371
      $region66: #{_convbert_forward.2} parent=11 // pred_check_branch
        %516 = sbr.rel (%p514) target = $region68
      $region67: #{_convbert_forward.2} parent=11 // pred_region
        _
      $region68: #{_convbert_forward.2} parent=11 // pred_fallthru
        _
      // Predicated region
      $region69: #{_convbert_forward.2} parent=11 // pred_check
        %p517 = pneg %p392
      $region70: #{_convbert_forward.2} parent=11 // pred_check_branch
        %519 = sbr.rel (%p517) target = $region72
      $region71: #{_convbert_forward.2} parent=11 // pred_region
        _
      $region72: #{_convbert_forward.2} parent=11 // pred_fallthru
        _
      // Predicated region
      $region73: #{_convbert_forward.2} parent=11 // pred_check
        %p520 = pneg %p413
      $region74: #{_convbert_forward.2} parent=11 // pred_check_branch
        %522 = sbr.rel (%p520) target = $region76
      $region75: #{_convbert_forward.2} parent=11 // pred_region
        _
      $region76: #{_convbert_forward.2} parent=11 // pred_fallthru
        _
      // Predicated region
      $region77: #{_convbert_forward.2} parent=11 // pred_check
        %p523 = pneg %p434
      $region78: #{_convbert_forward.2} parent=11 // pred_check_branch
        %525 = sbr.rel (%p523) target = $region80
      $region79: #{_convbert_forward.2} parent=11 // pred_region
        _
      $region80: #{_convbert_forward.2} parent=11 // pred_fallthru
        _
    $region12: #{_convbert_forward.2} parent=5 // pred_fallthru
      _
    %p526 = scmp.lt.s32.totalorder %s25, 2
    // Predicated region
    $region81: #{_convbert_forward.2} parent=5 // pred_check
      %p527 = pneg %p526
    $region82: #{_convbert_forward.2} parent=5 // pred_check_branch
      %529 = sbr.rel (%p527) target = $region84
    $region83: #{_convbert_forward.2} parent=5 // pred_region
      // Predicated region
      $region85: #{_convbert_forward.2} parent=83 // pred_check
        %p530 = pneg %p45
      $region86: #{_convbert_forward.2} parent=83 // pred_check_branch
        %532 = sbr.rel (%p530) target = $region88
      $region87: #{_convbert_forward.2} parent=83 // pred_region
        %p533 = scmp.lt.s32.totalorder %s25, 1
        %s534 = scalar_select %p533, %s25, 1
        %s535 = smul.addr %s534, 8
        %s536 = scalar_lea.vmem %s0, %s535
      $region88: #{_convbert_forward.2} parent=83 // pred_fallthru
        _
      // Predicated region
      $region89: #{_convbert_forward.2} parent=83 // pred_check
        %p537 = pneg %p71
      $region90: #{_convbert_forward.2} parent=83 // pred_check_branch
        %539 = sbr.rel (%p537) target = $region92
      $region91: #{_convbert_forward.2} parent=83 // pred_region
        %p540 = scmp.lt.s32.totalorder %s25, 1
        %s541 = scalar_select %p540, %s25, 1
        %s542 = scalar_lea.vmem %s1, %s541
      $region92: #{_convbert_forward.2} parent=83 // pred_fallthru
        _
    $region84: #{_convbert_forward.2} parent=5 // pred_fallthru
      _
    %p543 = scmp.le.s32.totalorder 1, %s25
    %p544 = scmp.lt.s32.totalorder %s25, 3
    %p545 = pnand %p543, %p544
    %p546 = pneg %p545
    // Predicated region
    $region93: #{_convbert_forward.2} parent=5 // pred_check
      _
    $region94: #{_convbert_forward.2} parent=5 // pred_check_branch
      %548 = sbr.rel (%p545) target = $region96
    $region95: #{_convbert_forward.2} parent=5 // pred_region
      %s549 = ssub.s32 %s25, 1
      %p550 = scmp.lt.s32.totalorder %s30, 1
      %s551 = scalar_select %p550, %s30, 1
      %s552 = smul.addr %s551, 8
      %s553 = scalar_lea.vmem %s0, %s552
      %p554 = pneg %p51
      %p555 = pneg %p48
      %p556 = scmp.lt.s32.totalorder %s30, 1
      %s557 = scalar_select %p556, %s30, 1
      %s558 = scalar_lea.vmem %s1, %s557
      %p559 = pneg %p77
      %p560 = pneg %p74
      %p561 = pneg %p98
      %p562 = pneg %p95
      %p563 = pneg %p119
      %p564 = pneg %p116
      %p565 = pneg %p140
      %p566 = pneg %p137
      %p567 = pneg %p161
      %p568 = pneg %p158
      %p569 = pneg %p182
      %p570 = pneg %p179
      %p571 = pneg %p203
      %p572 = pneg %p200
      %p573 = pneg %p224
      %p574 = pneg %p221
      %p575 = pneg %p245
      %p576 = pneg %p242
      %p577 = pneg %p266
      %p578 = pneg %p263
      %p579 = pneg %p287
      %p580 = pneg %p284
      %p581 = pneg %p308
      %p582 = pneg %p305
      %p583 = pneg %p329
      %p584 = pneg %p326
      %p585 = pneg %p350
      %p586 = pneg %p347
      %p587 = pneg %p371
      %p588 = pneg %p368
      %p589 = pneg %p392
      %p590 = pneg %p389
      %p591 = pneg %p413
      %p592 = pneg %p410
      %p593 = pneg %p434
      %p594 = pneg %p431
      %p595 = pneg %p460
      %p596 = pneg %p457
      %p597 = scmp.lt.s32.totalorder %s30, 1
      %s598 = scalar_select %p597, %s30, 1
      %s599 = smul.addr %s598, 8
      %s600 = scalar_lea.vmem %s19, %s599
      %p601 = scmp.lt.s32.totalorder %s30, 1
      %s602 = scalar_select %p601, %s30, 1
      %s603 = smul.addr %s602, 8
      %s604 = scalar_lea.vmem %s0, %s603
      %p605 = scmp.lt.s32.totalorder %s30, 1
      %s606 = scalar_select %p605, %s30, 1
      %s607 = scalar_lea.vmem %s1, %s606
      %p608 = scmp.lt.s32.totalorder %s30, 1
      %s609 = scalar_select %p608, %s30, 1
      %s610 = smul.addr %s609, 8
      %s611 = scalar_lea.vmem %s19, %s610
      %v613 = vld [vmem:[%s2] sm:$0xf]
      %v614 = vld [vmem:[%s2 + $0x4] sm:$0xf]
      %v615 = vld [vmem:[%s2 + $0x8] sm:$0xf]
      %v616 = vld [vmem:[%s2 + $0xc] sm:$0xf]
      %v617 = vld [vmem:[%s3] sm:$0x1]
      %v618 = vld [vmem:[%s4] sm:$0x7]
      %v619 = vld [vmem:[%s5] sm:$0xf]
      %v620 = vld [vmem:[%s5 + $0x4] sm:$0xf]
      %v621 = vld [vmem:[%s5 + $0x8] sm:$0xf]
      %v622 = vld [vmem:[%s5 + $0xc] sm:$0xf]
      %v623 = vld [vmem:[%s6] sm:$0x1]
      %v624 = vld [vmem:[%s7] sm:$0xf]
      %v625 = vld [vmem:[%s7 + $0x4] sm:$0xf]
      %v626 = vld [vmem:[%s8] sm:$0x1]
      %v627 = vld [vmem:[%s9] sm:$0xf]
      %v628 = vld [vmem:[%s9 + $0x4] sm:$0xf]
      %v629 = vld [vmem:[%s9 + $0x8] sm:$0xf]
      %v630 = vld [vmem:[%s9 + $0xc] sm:$0xf]
      %v631 = vld [vmem:[%s10] sm:$0x1]
      %v632 = vld [vmem:[%s11] sm:$0x1]
      %v633 = vld [vmem:[%s12] sm:$0x1]
      %v634 = vld [vmem:[%s13] sm:$0xf]
      %v635 = vld [vmem:[%s13 + $0x4] sm:$0xf]
      %v636 = vld [vmem:[%s13 + $0x8] sm:$0xf]
      %v637 = vld [vmem:[%s13 + $0xc] sm:$0xf]
      %v638 = vld [vmem:[%s14] sm:$0x1]
      %v639 = vld [vmem:[%s15] sm:$0xf]
      %v640 = vld [vmem:[%s15 + $0x4] sm:$0xf]
      %v641 = vld [vmem:[%s15 + $0x8] sm:$0xf]
      %v642 = vld [vmem:[%s15 + $0xc] sm:$0xf]
      %v643 = vld [vmem:[%s15 + $0x10] sm:$0xf]
      %v644 = vld [vmem:[%s15 + $0x14] sm:$0xf]
      %v645 = vld [vmem:[%s15 + $0x18] sm:$0xf]
      %v646 = vld [vmem:[%s15 + $0x1c] sm:$0xf]
      %v647 = vld [vmem:[%s16] sm:$0x1]
      %v648 = vld [vmem:[%s17] sm:$0x1]
      %v649 = vld [vmem:[%s18] sm:$0x1]
      %v650 = vld [vmem:[%s604] sm:$0xff]
      %v651 = vld [vmem:[%s607] sm:$0x1]
      %v652 = vpack.c.bf16 %v650, %v650
      %v654 = vperm.slane %v617, 0
      %v660 = vunpack.c.l.b16 %v613
      %v661 = vunpack.c.l.b16 %v614
      %v662 = vunpack.c.l.b16 %v615
      %v663 = vunpack.c.l.b16 %v616
      %v664 = vpack.c.b16 %v661, %v660
      %v665 = vpack.c.b16 %v663, %v662
      %vm668 = vcmask 261120
      %v670 = vsel %vm668, %v652, 0
      %672 = vmatpush.bf16.msra.mxu0 0
      %673 = vmatpush.bf16.msra.mxu0 0
      %674 = vmatpush.bf16.msra.mxu0 0
      %675 = vmatpush.bf16.msra.mxu0 0
      %676 = vmatpush.bf16.msra.mxu0 0
      %677 = vmatpush.bf16.msra.mxu0 0
      %678 = vmatpush.bf16.msra.mxu0 %v665
      %679 = vmatpush.bf16.msra.mxu0 %v664
      %680 = vmatmul.bf16.gmra.mxu0 %v670
      %v681 = vpop.f32.mrf.mxu0
      %v682 = vadd.f32 %v654, %v681
      %v683 = vpop.f32.mrf.mxu0
      %684 = vdwg.mxu0
      %vm685 = vcmask 253952
      %686 = vst.msk [vmem:[#allocation2] sm:$0x1] %vm685, 0.0
      %687 = vst.msk [vmem:[#allocation2 + $0x9] sm:$0x1] %vm685, 0.0
      %688 = vst.msk [vmem:[#allocation2 + $0x1] sm:$0xff] %vm668, %v650
      %v689 = vld [vmem:[#allocation2] sm:$0xff]
      %v690 = vperm.slane %v618, 0
      %v691 = vmul.f32 %v689, %v690
      %v692 = vadd.f32 %v691, 0.0
      %v693 = vld [vmem:[#allocation2 + $0x1] sm:$0xff]
      %v694 = vperm.slane %v618, 1
      %v695 = vmul.f32 %v693, %v694
      %v696 = vadd.f32 %v692, %v695
      %v697 = vld [vmem:[#allocation2 + $0x2] sm:$0xff]
      %v698 = vperm.slane %v618, 2
      %v699 = vmul.f32 %v697, %v698
      %v700 = vadd.f32 %v696, %v699
      %v701 = vpack.c.bf16 %v700, %v700
      %v703 = vperm.slane %v623, 0
      %v709 = vunpack.c.l.b16 %v619
      %v710 = vunpack.c.l.b16 %v620
      %v711 = vunpack.c.l.b16 %v621
      %v712 = vunpack.c.l.b16 %v622
      %v713 = vpack.c.b16 %v710, %v709
      %v714 = vpack.c.b16 %v712, %v711
      %v718 = vsel %vm668, %v701, 0
      %720 = vmatpush.bf16.msra.mxu0 0
      %721 = vmatpush.bf16.msra.mxu0 0
      %722 = vmatpush.bf16.msra.mxu0 0
      %723 = vmatpush.bf16.msra.mxu0 0
      %724 = vmatpush.bf16.msra.mxu0 0
      %725 = vmatpush.bf16.msra.mxu0 0
      %726 = vmatpush.bf16.msra.mxu0 %v714
      %727 = vmatpush.bf16.msra.mxu0 %v713
      %728 = vmatmul.bf16.gmra.mxu0 %v718
      %v729 = vpop.f32.mrf.mxu0
      %v730 = vadd.f32 %v703, %v729
      %v731 = vpop.f32.mrf.mxu0
      %732 = vdwg.mxu0
      %v733 = vmul.f32 %v730, %v682
      %v734 = vpack.c.bf16 %v733, %v733
      %v736 = vperm.slane %v626, 0
      %v740 = vunpack.c.l.b16 %v624
      %v741 = vunpack.c.l.b16 %v625
      %v742 = vpack.c.b16 %v741, %v740
      %vm744 = vcmask 130048
      %v746 = vsel %vm744, %v734, 0
      %748 = vmatpush.bf16.msra.mxu0 0
      %749 = vmatpush.bf16.msra.mxu0 0
      %750 = vmatpush.bf16.msra.mxu0 0
      %751 = vmatpush.bf16.msra.mxu0 0
      %752 = vmatpush.bf16.msra.mxu0 0
      %753 = vmatpush.bf16.msra.mxu0 0
      %754 = vmatpush.bf16.msra.mxu0 0
      %755 = vmatpush.bf16.msra.mxu0 %v742
      %756 = vmatmul.bf16.gmra.mxu0 %v746
      %v757 = vpop.f32.mrf.mxu0
      %v758 = vadd.f32 %v736, %v757
      %v759 = vpop.f32.mrf.mxu0
      %760 = vdwg.mxu0
      %vm761 = vcmask 23552
      %v762 = vsel %vm761, %v758, -inf
      %763 = vmax.xlane.f32.xlu0 %v762
      %v764 = vpop.xlane.xlu0 %763
      %v765 = vsub.f32 %v758, %v764
      %v766 = vmul.f32 %v765, 1.442695
      %v767 = vpow.pop %v766
      %v768 = vsel %vm761, %v767, 0.0
      %769 = vadd.xlane.f32.xlu0 %v768
      %v770 = vpop.xlane.xlu0 %769
      %v771 = vrcp.pop %v770
      %v772 = vmul.f32 %v767, %v771
      %vm773 = vcmask 48152
      %v774 = vsel %vm773, %v758, -inf
      %775 = vmax.xlane.f32.xlu0 %v774
      %v776 = vpop.xlane.xlu0 %775
      %v777 = vsub.f32 %v758, %v776
      %v778 = vmul.f32 %v777, 1.442695
      %v779 = vpow.pop %v778
      %781 = vrot.lane.b32.xlu0 %v779, 125
      %v782 = vpop.permute.xlu0 %781
      %v784 = vsel %vm761, %v782, 0.0
      %785 = vadd.xlane.f32.xlu0 %v784
      %v786 = vpop.xlane.xlu0 %785
      %v787 = vrcp.pop %v786
      %v788 = vmul.f32 %v779, %v787
      %vm789 = vcmask 122880
      %790 = vst.msk [vmem:[#allocation3] sm:$0x1] %vm789, 0.0
      %791 = vst.msk [vmem:[#allocation3 + $0x9] sm:$0x1] %vm789, 0.0
      %793 = vrot.lane.b32.xlu0 %v682, 80
      %v794 = vpop.permute.xlu0 %793
      %796 = vst.msk [vmem:[#allocation3 + $0x1] sm:$0xff] %vm744, %v794
      %v797 = vld [vmem:[#allocation3] sm:$0xff]
      %799 = vset.pattern.permute.xlu0 0
      %800 = vperm.xlu0 %799, %v772
      %v801 = vpop.permute.xlu0 %800
      %v803 = vmul.f32 %v797, %v801
      %v804 = vadd.f32 %v803, 0.0
      %806 = vset.pattern.permute.xlu0 3
      %807 = vperm.xlu0 %806, %v788
      %v808 = vpop.permute.xlu0 %807
      %v810 = vmul.f32 %v797, %v808
      %v811 = vadd.f32 %v810, 0.0
      %v812 = vld [vmem:[#allocation3 + $0x1] sm:$0xff]
      %813 = vset.pattern.permute.xlu0 1
      %814 = vperm.xlu0 %813, %v772
      %v815 = vpop.permute.xlu0 %814
      %v817 = vmul.f32 %v812, %v815
      %v818 = vadd.f32 %v804, %v817
      %819 = vset.pattern.permute.xlu0 4
      %820 = vperm.xlu0 %819, %v788
      %v821 = vpop.permute.xlu0 %820
      %v823 = vmul.f32 %v812, %v821
      %v824 = vadd.f32 %v811, %v823
      %v825 = vld [vmem:[#allocation3 + $0x2] sm:$0xff]
      %826 = vset.pattern.permute.xlu0 2
      %827 = vperm.xlu0 %826, %v772
      %v828 = vpop.permute.xlu0 %827
      %v830 = vmul.f32 %v825, %v828
      %v831 = vadd.f32 %v818, %v830
      %832 = vset.pattern.permute.xlu0 5
      %833 = vperm.xlu0 %832, %v788
      %v834 = vpop.permute.xlu0 %833
      %v836 = vmul.f32 %v825, %v834
      %v837 = vadd.f32 %v824, %v836
      %v838 = vpack.c.bf16 %v682, %v682
      %840 = vrot.lane.b32.xlu0 %v838, 112
      %v841 = vpop.permute.xlu0 %840
      %vm842 = vcmask 64512
      %v844 = vsel %vm842, %v838, 0
      %v847 = vsel %vm842, %v841, 0
      %849 = vmatpush.bf16.xpose.msra.mxu0 0
      %850 = vmatpush.bf16.xpose.msra.mxu0 0
      %851 = vmatpush.bf16.xpose.msra.mxu0 0
      %852 = vmatpush.bf16.xpose.msra.mxu0 0
      %853 = vmatpush.bf16.xpose.msra.mxu0 0
      %854 = vmatpush.bf16.xpose.msra.mxu0 0
      %855 = vmatpush.bf16.xpose.msra.mxu0 0
      %856 = vmatpush.bf16.xpose.msra.mxu0 %v847
      %857 = vmatmul.bf16.gmra.mxu0 %v844
      %v858 = vpop.f32.mrf.mxu0
      %v859 = vadd.f32 0.0, %v858
      %v860 = vpop.f32.mrf.mxu0
      %861 = vdwg.mxu0
      %v862 = vmul.f32 %v859, 0.35355338
      %v864 = vperm.slane %v651, 0
      %v866 = vadd.f32 %v862, %v864
      %v867 = vsel %vm842, %v866, -inf
      %868 = vmax.xlane.f32.xlu0 %v867
      %v869 = vpop.xlane.xlu0 %868
      %v870 = vsub.f32 %v866, %v869
      %v871 = vmul.f32 %v870, 1.442695
      %v872 = vpow.pop %v871
      %v873 = vsel %vm842, %v872, 0.0
      %874 = vadd.xlane.f32.xlu0 %v873
      %v875 = vpop.xlane.xlu0 %874
      %v876 = vrcp.pop %v875
      %v877 = vmul.f32 %v872, %v876
      %v878 = vpack.c.bf16 %v877, %v877
      %879 = vrot.lane.b32.xlu0 %v838, 96
      %v880 = vpop.permute.xlu0 %879
      %v882 = vsel %vm842, %v878, 0
      %vm884 = vcmask 1043456
      %v886 = vsel %vm884, %v880, 0
      %888 = vmatpush.bf16.msra.mxu0 0
      %889 = vmatpush.bf16.msra.mxu0 0
      %890 = vmatpush.bf16.msra.mxu0 0
      %891 = vmatpush.bf16.msra.mxu0 0
      %892 = vmatpush.bf16.msra.mxu0 0
      %893 = vmatpush.bf16.msra.mxu0 0
      %894 = vmatpush.bf16.msra.mxu0 0
      %895 = vmatpush.bf16.msra.mxu0 %v886
      %896 = vmatmul.bf16.gmra.mxu0 %v882
      %v897 = vpop.f32.mrf.mxu0
      %v898 = vadd.f32 0.0, %v897
      %v899 = vpop.f32.mrf.mxu0
      %900 = vdwg.mxu0
      %901 = vrot.lane.b32.xlu0 %v838, 120
      %v902 = vpop.permute.xlu0 %901
      %903 = vrot.lane.b32.xlu0 %v838, 104
      %v904 = vpop.permute.xlu0 %903
      %v906 = vsel %vm842, %v902, 0
      %v909 = vsel %vm842, %v904, 0
      %911 = vmatpush.bf16.xpose.msra.mxu0 0
      %912 = vmatpush.bf16.xpose.msra.mxu0 0
      %913 = vmatpush.bf16.xpose.msra.mxu0 0
      %914 = vmatpush.bf16.xpose.msra.mxu0 0
      %915 = vmatpush.bf16.xpose.msra.mxu0 0
      %916 = vmatpush.bf16.xpose.msra.mxu0 0
      %917 = vmatpush.bf16.xpose.msra.mxu0 0
      %918 = vmatpush.bf16.xpose.msra.mxu0 %v909
      %919 = vmatmul.bf16.gmra.mxu0 %v906
      %v920 = vpop.f32.mrf.mxu0
      %v921 = vadd.f32 0.0, %v920
      %v922 = vpop.f32.mrf.mxu0
      %923 = vdwg.mxu0
      %v924 = vmul.f32 %v921, 0.35355338
      %v925 = vadd.f32 %v924, %v864
      %v926 = vsel %vm842, %v925, -inf
      %927 = vmax.xlane.f32.xlu0 %v926
      %v928 = vpop.xlane.xlu0 %927
      %v929 = vsub.f32 %v925, %v928
      %v930 = vmul.f32 %v929, 1.442695
      %v931 = vpow.pop %v930
      %v932 = vsel %vm842, %v931, 0.0
      %933 = vadd.xlane.f32.xlu0 %v932
      %v934 = vpop.xlane.xlu0 %933
      %v935 = vrcp.pop %v934
      %v936 = vmul.f32 %v931, %v935
      %v937 = vpack.c.bf16 %v936, %v936
      %938 = vrot.lane.b32.xlu0 %v838, 88
      %v939 = vpop.permute.xlu0 %938
      %v941 = vsel %vm842, %v937, 0
      %v944 = vsel %vm884, %v939, 0
      %946 = vmatpush.bf16.msra.mxu0 0
      %947 = vmatpush.bf16.msra.mxu0 0
      %948 = vmatpush.bf16.msra.mxu0 0
      %949 = vmatpush.bf16.msra.mxu0 0
      %950 = vmatpush.bf16.msra.mxu0 0
      %951 = vmatpush.bf16.msra.mxu0 0
      %952 = vmatpush.bf16.msra.mxu0 0
      %953 = vmatpush.bf16.msra.mxu0 %v944
      %954 = vmatmul.bf16.gmra.mxu0 %v941
      %v955 = vpop.f32.mrf.mxu0
      %v956 = vadd.f32 0.0, %v955
      %v957 = vpop.f32.mrf.mxu0
      %958 = vdwg.mxu0
      %960 = vrot.lane.b32.xlu0 %v956, 8
      %v961 = vpop.permute.xlu0 %960
      %964 = vrot.lane.b32.xlu0 %v831, 16
      %v965 = vpop.permute.xlu0 %964
      %968 = vrot.lane.b32.xlu0 %v837, 16
      %v969 = vpop.permute.xlu0 %968
      %v971 = vsel %vm842, %v898, %v961
      %v972 = vsel %vm744, %v971, %v965
      %vm973 = vcmask 195584
      %v974 = vsel %vm973, %v972, %v969
      %v975 = vpack.c.bf16 %v974, %v974
      %v977 = vperm.slane %v631, 0
      %v983 = vunpack.c.l.b16 %v627
      %v984 = vunpack.c.l.b16 %v628
      %v985 = vunpack.c.l.b16 %v629
      %v986 = vunpack.c.l.b16 %v630
      %v987 = vpack.c.b16 %v984, %v983
      %v988 = vpack.c.b16 %v986, %v985
      %v992 = vsel %vm668, %v975, 0
      %994 = vmatpush.bf16.msra.mxu0 0
      %995 = vmatpush.bf16.msra.mxu0 0
      %996 = vmatpush.bf16.msra.mxu0 0
      %997 = vmatpush.bf16.msra.mxu0 0
      %998 = vmatpush.bf16.msra.mxu0 0
      %999 = vmatpush.bf16.msra.mxu0 0
      %1000 = vmatpush.bf16.msra.mxu0 %v988
      %1001 = vmatpush.bf16.msra.mxu0 %v987
      %1002 = vmatmul.bf16.gmra.mxu0 %v992
      %v1003 = vpop.f32.mrf.mxu0
      %v1004 = vadd.f32 %v977, %v1003
      %v1005 = vpop.f32.mrf.mxu0
      %1006 = vdwg.mxu0
      %v1007 = vadd.f32 %v1004, %v650
      %v1008 = vsel %vm668, %v1007, 0.0
      %1009 = vadd.xlane.f32.xlu0 %v1008
      %v1010 = vpop.xlane.xlu0 %1009
      %v1011 = vrcp.pop 32.0
      %v1012 = vmul.f32 32.0, %v1011
      %v1013 = vsub.f32 1.0, %v1012
      %v1014 = vmul.f32 %v1011, %v1013
      %v1015 = vadd.f32 %v1011, %v1014
      %vm1016 = vweird.f32 %v1011
      %v1017 = vsel %vm1016, %v1011, %v1015
      %v1018 = vmul.f32 %v1010, %v1017
      %v1019 = vsub.f32 %v1007, %v1018
      %v1020 = vmul.f32 %v1019, %v1019
      %v1021 = vsel %vm668, %v1020, 0.0
      %1022 = vadd.xlane.f32.xlu0 %v1021
      %v1023 = vpop.xlane.xlu0 %1022
      %v1024 = vmul.f32 %v1023, %v1017
      %v1025 = vadd.f32 %v1024, 1e-12
      %v1026 = vrsqrt.pop %v1025
      %v1027 = vmul.f32 %v1026, %v1025
      %v1028 = vmul.f32 %v1027, %v1026
      %v1029 = vmul.f32 0.5, %v1028
      %v1030 = vsub.f32 1.5, %v1029
      %v1031 = vmul.f32 %v1026, %v1030
      %vm1032 = vweird.f32 %v1025
      %vm1033 = vweird.f32 %v1026
      %vm1034 = vmor %vm1032, %vm1033
      %v1035 = vsel %vm1034, %v1026, %v1031
      %v1036 = vmul.f32 %v1019, %v1035
      %v1038 = vperm.slane %v632, 0
      %v1040 = vmul.f32 %v1036, %v1038
      %v1042 = vperm.slane %v633, 0
      %v1044 = vadd.f32 %v1040, %v1042
      %v1045 = vpack.c.bf16 %v1044, %v1044
      %v1047 = vperm.slane %v638, 0
      %v1053 = vunpack.c.l.b16 %v634
      %v1054 = vunpack.c.l.b16 %v635
      %v1055 = vunpack.c.l.b16 %v636
      %v1056 = vunpack.c.l.b16 %v637
      %v1057 = vpack.c.b16 %v1054, %v1053
      %v1058 = vpack.c.b16 %v1056, %v1055
      %v1062 = vsel %vm668, %v1045, 0
      %1064 = vmatpush.bf16.msra.mxu0 0
      %1065 = vmatpush.bf16.msra.mxu0 0
      %1066 = vmatpush.bf16.msra.mxu0 0
      %1067 = vmatpush.bf16.msra.mxu0 0
      %1068 = vmatpush.bf16.msra.mxu0 0
      %1069 = vmatpush.bf16.msra.mxu0 0
      %1070 = vmatpush.bf16.msra.mxu0 %v1058
      %1071 = vmatpush.bf16.msra.mxu0 %v1057
      %1072 = vmatmul.bf16.gmra.mxu0 %v1062
      %v1073 = vpop.f32.mrf.mxu0
      %v1074 = vadd.f32 %v1047, %v1073
      %v1075 = vpop.f32.mrf.mxu0
      %1076 = vdwg.mxu0
      %v1077 = vmul.f32 %v1074, 0.5
      %v1078 = vmul.f32 %v1074, 0.70710677
      %v1079 = vmul.f32 %v1078, %v1078
      %v1080 = vmin.f32 16.0, %v1079
      %v1081 = vmul.f32 %v1080, 2.1237322e-06
      %v1082 = vadd.f32 %v1081, 0.00028619796
      %v1083 = vmul.f32 %v1080, %v1082
      %v1084 = vadd.f32 %v1083, 0.0036580483
      %v1085 = vmul.f32 %v1080, %v1084
      %v1086 = vadd.f32 %v1085, 0.05243302
      %v1087 = vmul.f32 %v1080, %v1086
      %v1088 = vadd.f32 %v1087, 0.18741608
      %v1089 = vmul.f32 %v1080, %v1088
      %v1090 = vadd.f32 %v1089, 1.1283791
      %v1091 = vmul.f32 %v1078, %v1090
      %v1092 = vmul.f32 %v1080, 3.8918573e-05
      %v1093 = vadd.f32 %v1092, 0.001143296
      %v1094 = vmul.f32 %v1080, %v1093
      %v1095 = vadd.f32 %v1094, 0.014752088
      %v1096 = vmul.f32 %v1080, %v1095
      %v1097 = vadd.f32 %v1096, 0.112945676
      %v1098 = vmul.f32 %v1080, %v1097
      %v1099 = vadd.f32 %v1098, 0.4994258
      %v1100 = vmul.f32 %v1080, %v1099
      %v1101 = vadd.f32 %v1100, 1.0
      %v1102 = vrcp.pop %v1101
      %v1103 = vmul.f32 %v1101, %v1102
      %v1104 = vsub.f32 1.0, %v1103
      %v1105 = vmul.f32 %v1102, %v1104
      %v1106 = vadd.f32 %v1102, %v1105
      %vm1107 = vweird.f32 %v1101
      %vm1108 = vweird.f32 %v1102
      %vm1109 = vmor %vm1107, %vm1108
      %v1110 = vsel %vm1109, %v1102, %v1106
      %v1111 = vand.u32 2147483647, %v1101
      %vm1112 = vcmp.eq.f32.partialorder %v1111, 8.507059e+37
      %v1113 = vand.u32 %v1101, 2147483648
      %v1114 = vor.u32 1.1754944e-38, %v1113
      %v1115 = vsel %vm1112, %v1114, %v1110
      %v1116 = vmul.f32 %v1091, %v1115
      %v1117 = vmin.f32 %v1116, 1.0
      %v1118 = vmax.f32 %v1117, -1.0
      %v1119 = vadd.f32 %v1118, 1.0
      %v1120 = vmul.f32 %v1077, %v1119
      %v1121 = vpack.c.bf16 %v1120, %v1120
      %v1123 = vperm.slane %v647, 0
      %v1133 = vunpack.c.l.b16 %v639
      %v1134 = vunpack.c.l.b16 %v640
      %v1135 = vunpack.c.l.b16 %v641
      %v1136 = vunpack.c.l.b16 %v642
      %v1137 = vunpack.c.l.b16 %v643
      %v1138 = vunpack.c.l.b16 %v644
      %v1139 = vunpack.c.l.b16 %v645
      %v1140 = vunpack.c.l.b16 %v646
      %v1141 = vpack.c.b16 %v1134, %v1133
      %v1142 = vpack.c.b16 %v1136, %v1135
      %v1143 = vpack.c.b16 %v1138, %v1137
      %v1144 = vpack.c.b16 %v1140, %v1139
      %vm1149 = vcmask 523264
      %v1151 = vsel %vm1149, %v1121, 0
      %1153 = vmatpush.bf16.msra.mxu0 0
      %1154 = vmatpush.bf16.msra.mxu0 0
      %1155 = vmatpush.bf16.msra.mxu0 0
      %1156 = vmatpush.bf16.msra.mxu0 0
      %1157 = vmatpush.bf16.msra.mxu0 %v1144
      %1158 = vmatpush.bf16.msra.mxu0 %v1143
      %1159 = vmatpush.bf16.msra.mxu0 %v1142
      %1160 = vmatpush.bf16.msra.mxu0 %v1141
      %1161 = vmatmul.bf16.gmra.mxu0 %v1151
      %v1162 = vpop.f32.mrf.mxu0
      %v1163 = vadd.f32 %v1123, %v1162
      %v1164 = vpop.f32.mrf.mxu0
      %1165 = vdwg.mxu0
      %v1166 = vadd.f32 %v1163, %v1044
      %v1167 = vsel %vm668, %v1166, 0.0
      %1168 = vadd.xlane.f32.xlu0 %v1167
      %v1169 = vpop.xlane.xlu0 %1168
      %v1170 = vmul.f32 %v1169, %v1017
      %v1171 = vsub.f32 %v1166, %v1170
      %v1172 = vmul.f32 %v1171, %v1171
      %v1173 = vsel %vm668, %v1172, 0.0
      %1174 = vadd.xlane.f32.xlu0 %v1173
      %v1175 = vpop.xlane.xlu0 %1174
      %v1176 = vmul.f32 %v1175, %v1017
      %v1177 = vadd.f32 %v1176, 1e-12
      %v1178 = vrsqrt.pop %v1177
      %v1179 = vmul.f32 %v1178, %v1177
      %v1180 = vmul.f32 %v1179, %v1178
      %v1181 = vmul.f32 0.5, %v1180
      %v1182 = vsub.f32 1.5, %v1181
      %v1183 = vmul.f32 %v1178, %v1182
      %vm1184 = vweird.f32 %v1177
      %vm1185 = vweird.f32 %v1178
      %vm1186 = vmor %vm1184, %vm1185
      %v1187 = vsel %vm1186, %v1178, %v1183
      %v1188 = vmul.f32 %v1171, %v1187
      %v1190 = vperm.slane %v648, 0
      %v1192 = vmul.f32 %v1188, %v1190
      %v1194 = vperm.slane %v649, 0
      %v1196 = vadd.f32 %v1192, %v1194
      %1197 = vst.msk [vmem:[%s611] sm:$0xff] %vm668, %v1196
      %p1198 = scmp.lt.s32.totalorder %s30, 1
      %s1199 = scalar_select %p1198, %s30, 1
      %s1200 = smul.addr %s1199, 8
      %s1201 = scalar_lea.vmem %s19, %s1200
      // Predicated region
      $region97: #{_convbert_forward.2} parent=95 // pred_check
        %p1202 = pneg %p457
      $region98: #{_convbert_forward.2} parent=95 // pred_check_branch
        %1204 = sbr.rel (%p1202) target = $region100
      $region99: #{_convbert_forward.2} parent=95 // pred_region
        _
      $region100: #{_convbert_forward.2} parent=95 // pred_fallthru
        _
    $region96: #{_convbert_forward.2} parent=5 // pred_fallthru
      _
    %p1205 = scmp.le.s32.totalorder 2, %s25
    // Predicated region
    $region101: #{_convbert_forward.2} parent=5 // pred_check
      %p1206 = pneg %p1205
    $region102: #{_convbert_forward.2} parent=5 // pred_check_branch
      %1208 = sbr.rel (%p1206) target = $region104
    $region103: #{_convbert_forward.2} parent=5 // pred_region
      %s1209 = ssub.s32 %s25, 2
      // Predicated region
      $region105: #{_convbert_forward.2} parent=103 // pred_check
        %p1210 = pneg %p463
      $region106: #{_convbert_forward.2} parent=103 // pred_check_branch
        %1212 = sbr.rel (%p1210) target = $region108
      $region107: #{_convbert_forward.2} parent=103 // pred_region
        %p1213 = scmp.lt.s32.totalorder %s31, 1
        %s1214 = scalar_select %p1213, %s31, 1
        %s1215 = smul.addr %s1214, 8
        %s1216 = scalar_lea.vmem %s19, %s1215
      $region108: #{_convbert_forward.2} parent=103 // pred_fallthru
        _
    $region104: #{_convbert_forward.2} parent=5 // pred_fallthru
      _
  $region6: #{_convbert_forward.2} parent=0 // loop_footer
    %s29 = sadd.s32 1, %s25
  $region7: #{_convbert_forward.2} parent=0 // loop_footer_branch
    %24 = sbr.rel target = $region3
  $region8: #{_convbert_forward.2} parent=0 // loop_exit
    _

</llo_original>
